<compile_context>
chip_gen: v5e
topology: v5e:2x2
jax: 0.10.0
libtpu: 0.0.40
codegen_flags: <defaults>
</compile_context>

<pallas_src>
import functools

import numpy as np
import jax
import jax.numpy as jnp
from jax.experimental import pallas as pl
from jax.experimental.pallas import tpu as pltpu


def _round_up(x, m):
    return (x + m - 1) // m * m


def _vmem_limit_bytes():
    """~80% of physical VMEM (leaves headroom for compiler scratch)."""
    try:
        cap = pltpu.get_tpu_info().vmem_capacity_bytes
    except Exception:
        cap = 128 * 1024 * 1024
    return int(cap * 0.8)


def _auto_t_chunk(T, Bp, Hp, vmem_limit):
    """Largest time chunk whose double-buffered gates/out blocks fit ~half of VMEM."""
    per_step = 2 * 2 * (Bp * 4 * Hp * 2) + 2 * 2 * (Bp * Hp * 4)  # bf16 gates + f32 out
    tc = max(8, (vmem_limit // 2) // max(per_step, 1))
    return int(min(T, tc))


# ---------------------------------------------------------------------------
# Pallas kernel: one grid step = one time chunk, BOTH directions interleaved.
# ---------------------------------------------------------------------------
def _bilstm_chunk_kernel(gxf_ref, gxb_ref, whh_ref, bias_ref, len_ref,
                         outf_ref, outb_ref, hn_ref, cn_ref,
                         h_sc, c_sc, *, unroll):
    """
    gxf_ref : (Tc, Bp, 4Hp) bf16  x @ W_ih^T, forward  direction, chunk c
    gxb_ref : (Tc, Bp, 4Hp) bf16  x @ W_ih^T, backward direction, chunk nc-1-c
    whh_ref : (2, Hp, 4Hp)  bf16  recurrent weights (transposed), both directions
    bias_ref: (2, 1, 4Hp)   f32   b_ih + b_hh, both directions
    len_ref : (Bp, 1)       i32   valid sequence lengths (0 for padded batch rows)
    outf_ref: (Tc, Bp, Hp)  f32   forward  per-step hidden outputs (natural order)
    outb_ref: (Tc, Bp, Hp)  f32   backward per-step hidden outputs (natural order)
    hn_ref  : (2, Bp, Hp)   f32   final hidden state (written on last chunk only)
    cn_ref  : (2, Bp, Hp)   f32   final cell state   (written on last chunk only)
    h_sc/c_sc: (2, Bp, Hp)  f32   recurrent state carried across the chunk axis
    """
    c = pl.program_id(0)
    nc = pl.num_programs(0)
    Tc, Bp, G = gxf_ref.shape
    H = G // 4

    @pl.when(c == 0)                               # first chunk -> reset carried state
    def _():
        h_sc[...] = jnp.zeros_like(h_sc)
        c_sc[...] = jnp.zeros_like(c_sc)

    whh_f = whh_ref[0]                             # (Hp, 4Hp) bf16, loaded once/chunk
    whh_b = whh_ref[1]
    # Hoisted per-chunk broadcasts (JAX does not CSE broadcast_in_dim in the loop).
    bias_f = jnp.broadcast_to(bias_ref[0].astype(jnp.float32), (Bp, G))
    bias_b = jnp.broadcast_to(bias_ref[1].astype(jnp.float32), (Bp, G))
    lens_bh = jnp.broadcast_to(len_ref[...], (Bp, H))   # (Bp, Hp) int32

    t0_f = c * Tc                                  # forward chunk start time
    t0_b = (nc - 1 - c) * Tc                       # backward chunk start time

    def cell(gx_row, bias, whh, h, cc, t):
        # All gate / element-wise math in f32 (v5e has no bf16 VPU); MXU acc in f32.
        gates = (jnp.dot(h.astype(jnp.bfloat16), whh,
                         preferred_element_type=jnp.float32)
                 + gx_row.astype(jnp.float32) + bias)
        # PyTorch gate order: i, f, g, o -- lane-aligned slices since H % 128 == 0.
        i_g = jax.nn.sigmoid(gates[:, 0 * H:1 * H])
        f_g = jax.nn.sigmoid(gates[:, 1 * H:2 * H])
        g_g = jnp.tanh(gates[:, 2 * H:3 * H])
        o_g = jax.nn.sigmoid(gates[:, 3 * H:4 * H])
        c_new = f_g * cc + i_g * g_g
        h_new = o_g * jnp.tanh(c_new)
        valid = t < lens_bh                        # packed-sequence masking, (Bp, Hp)
        out = jnp.where(valid, h_new, 0.0)         # padded steps -> 0
        return out, jnp.where(valid, h_new, h), jnp.where(valid, c_new, cc)

    def body(r, carry):
        h_f, c_f, h_b, c_b = carry
        rb = Tc - 1 - r                            # backward walks the chunk reversed
        o_f, h_f, c_f = cell(gxf_ref[r], bias_f, whh_f, h_f, c_f, t0_f + r)
        o_b, h_b, c_b = cell(gxb_ref[rb], bias_b, whh_b, h_b, c_b, t0_b + rb)
        outf_ref[r] = o_f
        outb_ref[rb] = o_b
        return h_f, c_f, h_b, c_b

    carry0 = (h_sc[0], c_sc[0], h_sc[1], c_sc[1])
    h_f, c_f, h_b, c_b = jax.lax.fori_loop(0, Tc, body, carry0, unroll=unroll)

    h_sc[0] = h_f
    c_sc[0] = c_f
    h_sc[1] = h_b
    c_sc[1] = c_b

    @pl.when(c == nc - 1)                          # write h_n / c_n once
    def _():
        hn_ref[0] = h_f
        hn_ref[1] = h_b
        cn_ref[0] = c_f
        cn_ref[1] = c_b


# ---------------------------------------------------------------------------
# Shared preparation: alignment padding + hoisted bf16 input projection.
# ---------------------------------------------------------------------------
def _prepare(x2, len_arr, w_ih, w_hh, b_ih, b_hh):
    """Pads batch to a multiple of 8 sublanes and hidden to a multiple of 128 lanes
    (per gate; padded lanes provably stay exactly zero through the recurrence),
    casts weights to bf16, and computes the hoisted input projection streamed bf16."""
    B, T, D = x2.shape
    H = w_hh.shape[2]
    Bp = _round_up(B, 8)
    Hp = _round_up(H, 128)

    if Bp != B:
        x2 = jnp.pad(x2, ((0, Bp - B), (0, 0), (0, 0)))
        len_arr = jnp.pad(len_arr, ((0, Bp - B), (0, 0)))     # padded rows: length 0

    wih = jnp.pad(w_ih.reshape(2, 4, H, D),
                  ((0, 0), (0, 0), (0, Hp - H), (0, 0))).reshape(2, 4 * Hp, D)
    whh = jnp.pad(w_hh.reshape(2, 4, H, H),
                  ((0, 0), (0, 0), (0, Hp - H), (0, Hp - H))).reshape(2, 4 * Hp, Hp)
    bias = jnp.pad((b_ih + b_hh).reshape(2, 4, H),
                   ((0, 0), (0, 0), (0, Hp - H))
                   ).reshape(2, 1, 4 * Hp).astype(jnp.float32)

    wih_t = jnp.transpose(wih, (0, 2, 1)).astype(jnp.bfloat16)   # (2, D, 4Hp)
    whh_t = jnp.transpose(whh, (0, 2, 1)).astype(jnp.bfloat16)   # (2, Hp, 4Hp)

    # Hoisted input projection: one big MXU matmul for both directions & all steps,
    # consuming batch-major x directly; streamed to the kernel in bf16.
    gates_x = jnp.einsum("btd,zdg->ztbg", x2.astype(jnp.bfloat16), wih_t,
                         preferred_element_type=jnp.float32).astype(jnp.bfloat16)
    return gates_x, whh_t, bias, len_arr, (B, T, H, Bp, Hp)


def _resident_spec(block_shape, index_map):
    """BlockSpec for blocks whose index is constant over the grid: single-buffered."""
    try:
        return pl.BlockSpec(block_shape, index_map, pipeline_mode=pl.Buffered(1))
    except TypeError:  # older BlockSpec signature without pipeline_mode
        return pl.BlockSpec(block_shape, index_map)


# ---------------------------------------------------------------------------
# Device-side bidirectional LSTM (jitted, no host syncs).
# ---------------------------------------------------------------------------
@functools.partial(jax.jit, static_argnames=("t_chunk",))
def _bilstm_device(x2, len_arr, w_ih, w_hh, b_ih, b_hh, *, t_chunk):
    """x2: (B, T, D) f32.  w_ih: (2, 4H, D)  w_hh: (2, 4H, H)  b_*: (2, 4H).
    Returns out (B, T, 2H) f32, h_n (2, B, H), c_n (2, B, H)."""
    gates_x, whh_t, bias, len_p, (B, T, H, Bp, Hp) = _prepare(
        x2, len_arr, w_ih, w_hh, b_ih, b_hh)
    G = 4 * Hp

    Tc = max(1, min(int(t_chunk), T))
    nc = -(-T // Tc)
    Tp = nc * Tc
    if Tp != T:                                    # pad time to a chunk multiple
        gates_x = jnp.pad(gates_x, ((0, 0), (0, Tp - T), (0, 0), (0, 0)))

    # Bound live ranges at production B*H; full unroll only when per-step tensors
    # comfortably fit the vreg file.
    unroll = True if Bp * Hp <= 128 * 128 else 2

    out_f, out_b, h_n, c_n = pl.pallas_call(
        functools.partial(_bilstm_chunk_kernel, unroll=unroll),
        out_shape=(jax.ShapeDtypeStruct((Tp, Bp, Hp), jnp.float32),
                   jax.ShapeDtypeStruct((Tp, Bp, Hp), jnp.float32),
                   jax.ShapeDtypeStruct((2, Bp, Hp), jnp.float32),
                   jax.ShapeDtypeStruct((2, Bp, Hp), jnp.float32)),
        grid=(nc,),
        in_specs=[
            pl.BlockSpec((None, Tc, Bp, G), lambda c: (0, c, 0, 0)),          # gx fwd
            pl.BlockSpec((None, Tc, Bp, G), lambda c: (1, nc - 1 - c, 0, 0)),  # gx bwd
            _resident_spec((2, Hp, G), lambda c: (0, 0, 0)),                  # W_hh^T
            _resident_spec((2, 1, G), lambda c: (0, 0, 0)),                   # bias
            _resident_spec((Bp, 1), lambda c: (0, 0)),                        # lengths
        ],
        out_specs=(
            pl.BlockSpec((Tc, Bp, Hp), lambda c: (c, 0, 0)),                  # out fwd
            pl.BlockSpec((Tc, Bp, Hp), lambda c: (nc - 1 - c, 0, 0)),         # out bwd
            pl.BlockSpec((2, Bp, Hp), lambda c: (0, 0, 0)),                   # h_n
            pl.BlockSpec((2, Bp, Hp), lambda c: (0, 0, 0)),                   # c_n
        ),
        scratch_shapes=[pltpu.VMEM((2, Bp, Hp), jnp.float32),
                        pltpu.VMEM((2, Bp, Hp), jnp.float32)],
        compiler_params=pltpu.CompilerParams(
            dimension_semantics=("arbitrary",),     # time chunks carry state
            vmem_limit_bytes=_vmem_limit_bytes()),
    )(gates_x, gates_x, whh_t, bias, len_p)

    # Strip alignment padding, assemble PyTorch layout: (B, T, [fwd|bwd] 2H).
    out = jnp.concatenate([out_f[:T, :B, :H], out_b[:T, :B, :H]], axis=-1)
    out = jnp.transpose(out, (1, 0, 2))
    return out, h_n[:, :B, :H], c_n[:, :B, :H]


# ---------------------------------------------------------------------------
# pBLSTM.forward equivalent
# ---------------------------------------------------------------------------
def pblstm_forward(x, lengths, params, *, t_chunk=None):
    """x: (B, T, F) f32; lengths: python list of ints (descending, per
    pack_padded_sequence contract).  Returns (output_padded, (h_n, c_n), lengths//2)."""
    B, T, F = x.shape
    if T % 2 != 0:                          # drop trailing odd frame
        x = x[:, :T - 1, :]
        T -= 1
    x2 = x.reshape(B, T // 2, 2 * F)        # fold adjacent frames
    T2 = T // 2
    lengths2 = [int(l) // 2 for l in lengths]
    len_arr = jnp.asarray(lengths2, dtype=jnp.int32).reshape(B, 1)

    if t_chunk is None:                     # VMEM-aware chunk size
        H = params["w_hh"].shape[2]
        t_chunk = _auto_t_chunk(T2, _round_up(B, 8), _round_up(H, 128),
                                _vmem_limit_bytes())

    out, h_n, c_n = _bilstm_device(x2, len_arr, params["w_ih"], params["w_hh"],
                                   params["b_ih"], params["b_hh"],
                                   t_chunk=int(min(int(t_chunk), T2)))
    max_len = max(lengths2)                 # pad_packed truncation (host ints)
    return out[:, :max_len, :], (h_n, c_n), lengths2


def init_pblstm_params(key, input_dim, hidden_dim):
    """Matches nn.LSTM(input_dim*2, hidden_dim, bidirectional=True) init:
    uniform(-1/sqrt(H), 1/sqrt(H)).  Index 0 = forward, 1 = reverse direction."""
    D = 2 * input_dim
    k = 1.0 / np.sqrt(hidden_dim)
    ks = jax.random.split(key, 4)
    u = lambda kk, shape: jax.random.uniform(kk, shape, jnp.float32, -k, k)
    return {"w_ih": u(ks[0], (2, 4 * hidden_dim, D)),
            "w_hh": u(ks[1], (2, 4 * hidden_dim, hidden_dim)),
            "b_ih": u(ks[2], (2, 4 * hidden_dim)),
            "b_hh": u(ks[3], (2, 4 * hidden_dim))}


# ---------------------------------------------------------------------------
# Pure-JAX lax.scan reference consuming the SAME prepared (bf16) inputs.
# ---------------------------------------------------------------------------
def _bilstm_ref(gates_x, whh_t, bias, len_p):
    """gates_x: (2,T,Bp,4Hp) bf16; whh_t: (2,Hp,4Hp) bf16; bias: (2,1,4Hp) f32."""
    _, T, Bp, G = gates_x.shape
    Hp = G // 4
    ts = jnp.arange(T, dtype=jnp.int32)

    def run(d, reverse):
        whh = whh_t[d]
        b = bias[d]

        def step(carry, inp):
            h, c = carry
            gx, t = inp
            gates = (gx.astype(jnp.float32) + b
                     + jnp.dot(h.astype(jnp.bfloat16), whh,
                               preferred_element_type=jnp.float32))
            i = jax.nn.sigmoid(gates[:, :Hp])
            f = jax.nn.sigmoid(gates[:, Hp:2 * Hp])
            g = jnp.tanh(gates[:, 2 * Hp:3 * Hp])
            o = jax.nn.sigmoid(gates[:, 3 * Hp:])
            c_new = f * c + i * g
            h_new = o * jnp.tanh(c_new)
            valid = t < len_p
            return ((jnp.where(valid, h_new, h), jnp.where(valid, c_new, c)),
                    jnp.where(valid, h_new, 0.0))

        init = (jnp.zeros((Bp, Hp), jnp.float32), jnp.zeros((Bp, Hp), jnp.float32))
        (hn, cn), ys = jax.lax.scan(step, init, (gates_x[d], ts), reverse=reverse)
        return ys, hn, cn

    yf, hf, cf = run(0, False)
    yb, hb, cb = run(1, True)
    return yf, yb, jnp.stack([hf, hb]), jnp.stack([cf, cb])


if __name__ == "__main__":
    input_dim, hidden_dim = 16, 32
    B, T = 2, 64
    lengths = [64, 42]                      # descending (pack_padded_sequence contract)

    key = jax.random.PRNGKey(0)
    kx, kp = jax.random.split(key)
    x = jax.random.normal(kx, (B, T, input_dim), dtype=jnp.float32)
    params = init_pblstm_params(kp, input_dim, hidden_dim)

    # t_chunk=8 -> 4 chunks: exercises the chunk-carried state and reverse walk.
    out, (h_n, c_n), out_lengths = pblstm_forward(x, lengths, params, t_chunk=8)
    out = jax.block_until_ready(out)
    h_n = jax.block_until_ready(h_n)
    c_n = jax.block_until_ready(c_n)

    # shape / length semantics
    assert out.shape == (B, max(lengths) // 2, 2 * hidden_dim)
    assert h_n.shape == (2, B, hidden_dim) and c_n.shape == (2, B, hidden_dim)
    assert out_lengths == [l // 2 for l in lengths]
    # pad_packed semantics: padded region of the shorter sample is exactly zero
    assert bool(jnp.all(out[1, out_lengths[1]:, :] == 0.0))

    # numerical check vs. pure-JAX reference on the identical prepared inputs
    # (same bf16 input projection / weights, so it validates the recurrence,
    #  masking, direction reversal and chunk-carry logic).
    x2 = x.reshape(B, T // 2, 2 * input_dim)
    len2 = jnp.asarray(out_lengths, jnp.int32).reshape(B, 1)
    gx, whh_t, bias, len_p, (_, T2, H, Bp, Hp) = _prepare(
        x2, len2, params["w_ih"], params["w_hh"], params["b_ih"], params["b_hh"])
    yf, yb, ref_hn, ref_cn = _bilstm_ref(gx, whh_t, bias, len_p)
    ref_out = jnp.concatenate([yf[:, :B, :H], yb[:, :B, :H]], axis=-1)
    ref_out = jnp.transpose(ref_out, (1, 0, 2))[:, :max(out_lengths)]

    np.testing.assert_allclose(np.asarray(out), np.asarray(ref_out),
                               rtol=2e-3, atol=2e-3)
    np.testing.assert_allclose(np.asarray(h_n), np.asarray(ref_hn[:, :B, :H]),
                               rtol=2e-3, atol=2e-3)
    np.testing.assert_allclose(np.asarray(c_n), np.asarray(ref_cn[:, :B, :H]),
                               rtol=2e-3, atol=2e-3)

    print("KERNEL_OK")
</pallas_src>

<mosaic_0001>
module attributes {stable_mosaic.version = 11 : i64} {
  func.func @_bilstm_chunk_kernel(%arg0: i32, %arg1: memref<1x8x8x512xbf16, #tpu.memory_space<vmem>>, %arg2: memref<1x8x8x512xbf16, #tpu.memory_space<vmem>>, %arg3: memref<2x128x512xbf16, #tpu.memory_space<vmem>>, %arg4: memref<2x1x512xf32, #tpu.memory_space<vmem>>, %arg5: memref<8x1xi32, #tpu.memory_space<vmem>>, %arg6: memref<8x8x128xf32, #tpu.memory_space<vmem>>, %arg7: memref<8x8x128xf32, #tpu.memory_space<vmem>>, %arg8: memref<2x8x128xf32, #tpu.memory_space<vmem>>, %arg9: memref<2x8x128xf32, #tpu.memory_space<vmem>>, %arg10: memref<2x8x128xf32, #tpu.memory_space<vmem>>, %arg11: memref<2x8x128xf32, #tpu.memory_space<vmem>>) attributes {dimension_semantics = [#tpu.dimension_semantics<arbitrary>], iteration_bounds = array<i64: 4>, scalar_prefetch = 0 : i64, scratch_operands = 2 : i64, tpu.core_type = #tpu.core_type<tc>, window_params = [{transform_indices = @transform_0, window_bounds = array<i64: 1, 8, 8, 512>}, {transform_indices = @transform_1, window_bounds = array<i64: 1, 8, 8, 512>}, {pipeline_mode = #tpu.pipeline_mode<synchronous>, transform_indices = @transform_2, window_bounds = array<i64: 2, 128, 512>}, {pipeline_mode = #tpu.pipeline_mode<synchronous>, transform_indices = @transform_3, window_bounds = array<i64: 2, 1, 512>}, {pipeline_mode = #tpu.pipeline_mode<synchronous>, transform_indices = @transform_4, window_bounds = array<i64: 8, 1>}, {transform_indices = @transform_5, window_bounds = array<i64: 8, 8, 128>}, {transform_indices = @transform_6, window_bounds = array<i64: 8, 8, 128>}, {pipeline_mode = #tpu.pipeline_mode<synchronous>, transform_indices = @transform_7, window_bounds = array<i64: 2, 8, 128>}, {pipeline_mode = #tpu.pipeline_mode<synchronous>, transform_indices = @transform_8, window_bounds = array<i64: 2, 8, 128>}]} {
    %c0_i32 = arith.constant 0 : i32
    %0 = arith.cmpi eq, %arg0, %c0_i32 : i32
    %1 = arith.extui %0 : i1 to i32
    %c0_i32_0 = arith.constant 0 : i32
    %2 = arith.cmpi ne, %1, %c0_i32_0 : i32
    scf.if %2 {
      %cst_210 = arith.constant 0.000000e+00 : f32
      %756 = vector.broadcast %cst_210 : f32 to vector<2x8x128xf32>
      %c0_211 = arith.constant 0 : index
      %c0_212 = arith.constant 0 : index
      %c0_213 = arith.constant 0 : index
      %757 = vector.load %arg10[%c0_211, %c0_212, %c0_213] : memref<2x8x128xf32, #tpu.memory_space<vmem>>, vector<2x8x128xf32>
      tpu.vector_store %arg10[%c0_211, %c0_212, %c0_213], %756 {strides = array<i32>} : memref<2x8x128xf32, #tpu.memory_space<vmem>>, vector<2x8x128xf32>,
      %cst_214 = arith.constant 0.000000e+00 : f32
      %758 = vector.broadcast %cst_214 : f32 to vector<2x8x128xf32>
      %c0_215 = arith.constant 0 : index
      %c0_216 = arith.constant 0 : index
      %c0_217 = arith.constant 0 : index
      %759 = vector.load %arg11[%c0_215, %c0_216, %c0_217] : memref<2x8x128xf32, #tpu.memory_space<vmem>>, vector<2x8x128xf32>
      tpu.vector_store %arg11[%c0_215, %c0_216, %c0_217], %758 {strides = array<i32>} : memref<2x8x128xf32, #tpu.memory_space<vmem>>, vector<2x8x128xf32>,
    } else {
    }
    %c0 = arith.constant 0 : index
    %c0_1 = arith.constant 0 : index
    %c0_2 = arith.constant 0 : index
    %3 = vector.load %arg3[%c0, %c0_1, %c0_2] : memref<2x128x512xbf16, #tpu.memory_space<vmem>>, vector<1x128x512xbf16>
    %4 = vector.shape_cast %3 : vector<1x128x512xbf16> to vector<128x512xbf16>
    %c1 = arith.constant 1 : index
    %c0_3 = arith.constant 0 : index
    %c0_4 = arith.constant 0 : index
    %5 = vector.load %arg3[%c1, %c0_3, %c0_4] : memref<2x128x512xbf16, #tpu.memory_space<vmem>>, vector<1x128x512xbf16>
    %6 = vector.shape_cast %5 : vector<1x128x512xbf16> to vector<128x512xbf16>
    %c0_5 = arith.constant 0 : index
    %c0_6 = arith.constant 0 : index
    %c0_7 = arith.constant 0 : index
    %7 = vector.load %arg4[%c0_5, %c0_6, %c0_7] : memref<2x1x512xf32, #tpu.memory_space<vmem>>, vector<1x1x512xf32>
    %8 = vector.shape_cast %7 : vector<1x1x512xf32> to vector<1x512xf32>
    %9 = vector.shape_cast %8 : vector<1x512xf32> to vector<1x512xf32>
    %10 = vector.broadcast %9 : vector<1x512xf32> to vector<8x512xf32>
    %c1_8 = arith.constant 1 : index
    %c0_9 = arith.constant 0 : index
    %c0_10 = arith.constant 0 : index
    %11 = vector.load %arg4[%c1_8, %c0_9, %c0_10] : memref<2x1x512xf32, #tpu.memory_space<vmem>>, vector<1x1x512xf32>
    %12 = vector.shape_cast %11 : vector<1x1x512xf32> to vector<1x512xf32>
    %13 = vector.shape_cast %12 : vector<1x512xf32> to vector<1x512xf32>
    %14 = vector.broadcast %13 : vector<1x512xf32> to vector<8x512xf32>
    %c0_11 = arith.constant 0 : index
    %c0_12 = arith.constant 0 : index
    %15 = vector.load %arg5[%c0_11, %c0_12] : memref<8x1xi32, #tpu.memory_space<vmem>>, vector<8x1xi32>
    %16 = vector.shape_cast %15 : vector<8x1xi32> to vector<8x1xi32>
    %17 = vector.broadcast %16 : vector<8x1xi32> to vector<8x128xi32>
    %c8_i32 = arith.constant 8 : i32
    %18 = arith.muli %arg0, %c8_i32 : i32
    %c3_i32 = arith.constant 3 : i32
    %19 = arith.subi %c3_i32, %arg0 : i32
    %c8_i32_13 = arith.constant 8 : i32
    %20 = arith.muli %19, %c8_i32_13 : i32
    %c0_14 = arith.constant 0 : index
    %c0_15 = arith.constant 0 : index
    %c0_16 = arith.constant 0 : index
    %21 = vector.load %arg10[%c0_14, %c0_15, %c0_16] : memref<2x8x128xf32, #tpu.memory_space<vmem>>, vector<1x8x128xf32>
    %22 = vector.shape_cast %21 : vector<1x8x128xf32> to vector<8x128xf32>
    %c0_17 = arith.constant 0 : index
    %c0_18 = arith.constant 0 : index
    %c0_19 = arith.constant 0 : index
    %23 = vector.load %arg11[%c0_17, %c0_18, %c0_19] : memref<2x8x128xf32, #tpu.memory_space<vmem>>, vector<1x8x128xf32>
    %24 = vector.shape_cast %23 : vector<1x8x128xf32> to vector<8x128xf32>
    %c1_20 = arith.constant 1 : index
    %c0_21 = arith.constant 0 : index
    %c0_22 = arith.constant 0 : index
    %25 = vector.load %arg10[%c1_20, %c0_21, %c0_22] : memref<2x8x128xf32, #tpu.memory_space<vmem>>, vector<1x8x128xf32>
    %26 = vector.shape_cast %25 : vector<1x8x128xf32> to vector<8x128xf32>
    %c1_23 = arith.constant 1 : index
    %c0_24 = arith.constant 0 : index
    %c0_25 = arith.constant 0 : index
    %27 = vector.load %arg11[%c1_23, %c0_24, %c0_25] : memref<2x8x128xf32, #tpu.memory_space<vmem>>, vector<1x8x128xf32>
    %28 = vector.shape_cast %27 : vector<1x8x128xf32> to vector<8x128xf32>
    %c0_i32_26 = arith.constant 0 : i32
    %c7_i32 = arith.constant 7 : i32
    %29 = arith.subi %c7_i32, %c0_i32_26 : i32
    %c0_27 = arith.constant 0 : index
    %30 = arith.index_cast %c0_i32_26 : i32 to index
    %c0_28 = arith.constant 0 : index
    %c0_29 = arith.constant 0 : index
    %31 = vector.load %arg1[%c0_27, %30, %c0_28, %c0_29] : memref<1x8x8x512xbf16, #tpu.memory_space<vmem>>, vector<1x1x8x512xbf16>
    %32 = vector.shape_cast %31 : vector<1x1x8x512xbf16> to vector<8x512xbf16>
    %33 = arith.addi %18, %c0_i32_26 : i32
    %34 = arith.truncf %22 : vector<8x128xf32> to vector<8x128xbf16>
    %cst = arith.constant dense<0.000000e+00> : vector<8x512xf32>
    %35 = tpu.matmul %34, %4, %cst {dimension_numbers = #tpu.dot_dimension_numbers<[1], [0], [0], [1], [0, 0, 1, 1], [], []>} : vector<8x128xbf16>, vector<128x512xbf16>, vector<8x512xf32> -> vector<8x512xf32>
    %36 = arith.extf %32 : vector<8x512xbf16> to vector<8x512xf32>
    %37 = arith.addf %35, %36 : vector<8x512xf32>
    %38 = arith.addf %37, %10 : vector<8x512xf32>
    %39 = vector.extract_strided_slice %38 {offsets = [0, 0], sizes = [8, 128], strides = [1, 1]} : vector<8x512xf32> to vector<8x128xf32>
    %40 = arith.negf %39 : vector<8x128xf32>
    %41 = math.exp %40 : vector<8x128xf32>
    %cst_30 = arith.constant 1.000000e+00 : f32
    %42 = vector.broadcast %cst_30 : f32 to vector<8x128xf32>
    %43 = arith.addf %42, %41 : vector<8x128xf32>
    %44 = arith.divf %42, %43 : vector<8x128xf32>
    %45 = vector.extract_strided_slice %38 {offsets = [0, 128], sizes = [8, 128], strides = [1, 1]} : vector<8x512xf32> to vector<8x128xf32>
    %46 = arith.negf %45 : vector<8x128xf32>
    %47 = math.exp %46 : vector<8x128xf32>
    %cst_31 = arith.constant 1.000000e+00 : f32
    %48 = vector.broadcast %cst_31 : f32 to vector<8x128xf32>
    %49 = arith.addf %48, %47 : vector<8x128xf32>
    %50 = arith.divf %48, %49 : vector<8x128xf32>
    %51 = vector.extract_strided_slice %38 {offsets = [0, 256], sizes = [8, 128], strides = [1, 1]} : vector<8x512xf32> to vector<8x128xf32>
    %52 = math.tanh %51 : vector<8x128xf32>
    %53 = vector.extract_strided_slice %38 {offsets = [0, 384], sizes = [8, 128], strides = [1, 1]} : vector<8x512xf32> to vector<8x128xf32>
    %54 = arith.negf %53 : vector<8x128xf32>
    %55 = math.exp %54 : vector<8x128xf32>
    %cst_32 = arith.constant 1.000000e+00 : f32
    %56 = vector.broadcast %cst_32 : f32 to vector<8x128xf32>
    %57 = arith.addf %56, %55 : vector<8x128xf32>
    %58 = arith.divf %56, %57 : vector<8x128xf32>
    %59 = arith.mulf %50, %24 : vector<8x128xf32>
    %60 = arith.mulf %44, %52 : vector<8x128xf32>
    %61 = arith.addf %59, %60 : vector<8x128xf32>
    %62 = math.tanh %61 : vector<8x128xf32>
    %63 = arith.mulf %58, %62 : vector<8x128xf32>
    %64 = vector.broadcast %33 : i32 to vector<8x128xi32>
    %65 = arith.cmpi slt, %64, %17 : vector<8x128xi32>
    %cst_33 = arith.constant 0.000000e+00 : f32
    %66 = vector.broadcast %cst_33 : f32 to vector<8x128xf32>
    %67 = arith.select %65, %63, %66 : vector<8x128xi1>, vector<8x128xf32>
    %68 = arith.select %65, %63, %22 : vector<8x128xi1>, vector<8x128xf32>
    %69 = arith.select %65, %61, %24 : vector<8x128xi1>, vector<8x128xf32>
    %c0_34 = arith.constant 0 : index
    %70 = arith.index_cast %29 : i32 to index
    %c0_35 = arith.constant 0 : index
    %c0_36 = arith.constant 0 : index
    %71 = vector.load %arg2[%c0_34, %70, %c0_35, %c0_36] : memref<1x8x8x512xbf16, #tpu.memory_space<vmem>>, vector<1x1x8x512xbf16>
    %72 = vector.shape_cast %71 : vector<1x1x8x512xbf16> to vector<8x512xbf16>
    %73 = arith.addi %20, %29 : i32
    %74 = arith.truncf %26 : vector<8x128xf32> to vector<8x128xbf16>
    %cst_37 = arith.constant dense<0.000000e+00> : vector<8x512xf32>
    %75 = tpu.matmul %74, %6, %cst_37 {dimension_numbers = #tpu.dot_dimension_numbers<[1], [0], [0], [1], [0, 0, 1, 1], [], []>} : vector<8x128xbf16>, vector<128x512xbf16>, vector<8x512xf32> -> vector<8x512xf32>
    %76 = arith.extf %72 : vector<8x512xbf16> to vector<8x512xf32>
    %77 = arith.addf %75, %76 : vector<8x512xf32>
    %78 = arith.addf %77, %14 : vector<8x512xf32>
    %79 = vector.extract_strided_slice %78 {offsets = [0, 0], sizes = [8, 128], strides = [1, 1]} : vector<8x512xf32> to vector<8x128xf32>
    %80 = arith.negf %79 : vector<8x128xf32>
    %81 = math.exp %80 : vector<8x128xf32>
    %cst_38 = arith.constant 1.000000e+00 : f32
    %82 = vector.broadcast %cst_38 : f32 to vector<8x128xf32>
    %83 = arith.addf %82, %81 : vector<8x128xf32>
    %84 = arith.divf %82, %83 : vector<8x128xf32>
    %85 = vector.extract_strided_slice %78 {offsets = [0, 128], sizes = [8, 128], strides = [1, 1]} : vector<8x512xf32> to vector<8x128xf32>
    %86 = arith.negf %85 : vector<8x128xf32>
    %87 = math.exp %86 : vector<8x128xf32>
    %cst_39 = arith.constant 1.000000e+00 : f32
    %88 = vector.broadcast %cst_39 : f32 to vector<8x128xf32>
    %89 = arith.addf %88, %87 : vector<8x128xf32>
    %90 = arith.divf %88, %89 : vector<8x128xf32>
    %91 = vector.extract_strided_slice %78 {offsets = [0, 256], sizes = [8, 128], strides = [1, 1]} : vector<8x512xf32> to vector<8x128xf32>
    %92 = math.tanh %91 : vector<8x128xf32>
    %93 = vector.extract_strided_slice %78 {offsets = [0, 384], sizes = [8, 128], strides = [1, 1]} : vector<8x512xf32> to vector<8x128xf32>
    %94 = arith.negf %93 : vector<8x128xf32>
    %95 = math.exp %94 : vector<8x128xf32>
    %cst_40 = arith.constant 1.000000e+00 : f32
    %96 = vector.broadcast %cst_40 : f32 to vector<8x128xf32>
    %97 = arith.addf %96, %95 : vector<8x128xf32>
    %98 = arith.divf %96, %97 : vector<8x128xf32>
    %99 = arith.mulf %90, %28 : vector<8x128xf32>
    %100 = arith.mulf %84, %92 : vector<8x128xf32>
    %101 = arith.addf %99, %100 : vector<8x128xf32>
    %102 = math.tanh %101 : vector<8x128xf32>
    %103 = arith.mulf %98, %102 : vector<8x128xf32>
    %104 = vector.broadcast %73 : i32 to vector<8x128xi32>
    %105 = arith.cmpi slt, %104, %17 : vector<8x128xi32>
    %cst_41 = arith.constant 0.000000e+00 : f32
    %106 = vector.broadcast %cst_41 : f32 to vector<8x128xf32>
    %107 = arith.select %105, %103, %106 : vector<8x128xi1>, vector<8x128xf32>
    %108 = arith.select %105, %103, %26 : vector<8x128xi1>, vector<8x128xf32>
    %109 = arith.select %105, %101, %28 : vector<8x128xi1>, vector<8x128xf32>
    %110 = arith.index_cast %c0_i32_26 : i32 to index
    %c0_42 = arith.constant 0 : index
    %c0_43 = arith.constant 0 : index
    %111 = vector.load %arg6[%110, %c0_42, %c0_43] : memref<8x8x128xf32, #tpu.memory_space<vmem>>, vector<1x8x128xf32>
    %112 = vector.shape_cast %111 : vector<1x8x128xf32> to vector<8x128xf32>
    %113 = vector.shape_cast %67 : vector<8x128xf32> to vector<1x8x128xf32>
    tpu.vector_store %arg6[%110, %c0_42, %c0_43], %113 {strides = array<i32>} : memref<8x8x128xf32, #tpu.memory_space<vmem>>, vector<1x8x128xf32>,
    %114 = arith.index_cast %29 : i32 to index
    %c0_44 = arith.constant 0 : index
    %c0_45 = arith.constant 0 : index
    %115 = vector.load %arg7[%114, %c0_44, %c0_45] : memref<8x8x128xf32, #tpu.memory_space<vmem>>, vector<1x8x128xf32>
    %116 = vector.shape_cast %115 : vector<1x8x128xf32> to vector<8x128xf32>
    %117 = vector.shape_cast %107 : vector<8x128xf32> to vector<1x8x128xf32>
    tpu.vector_store %arg7[%114, %c0_44, %c0_45], %117 {strides = array<i32>} : memref<8x8x128xf32, #tpu.memory_space<vmem>>, vector<1x8x128xf32>,
    %c1_i32 = arith.constant 1 : i32
    %c7_i32_46 = arith.constant 7 : i32
    %118 = arith.subi %c7_i32_46, %c1_i32 : i32
    %c0_47 = arith.constant 0 : index
    %119 = arith.index_cast %c1_i32 : i32 to index
    %c0_48 = arith.constant 0 : index
    %c0_49 = arith.constant 0 : index
    %120 = vector.load %arg1[%c0_47, %119, %c0_48, %c0_49] : memref<1x8x8x512xbf16, #tpu.memory_space<vmem>>, vector<1x1x8x512xbf16>
    %121 = vector.shape_cast %120 : vector<1x1x8x512xbf16> to vector<8x512xbf16>
    %122 = arith.addi %18, %c1_i32 : i32
    %123 = arith.truncf %68 : vector<8x128xf32> to vector<8x128xbf16>
    %cst_50 = arith.constant dense<0.000000e+00> : vector<8x512xf32>
    %124 = tpu.matmul %123, %4, %cst_50 {dimension_numbers = #tpu.dot_dimension_numbers<[1], [0], [0], [1], [0, 0, 1, 1], [], []>} : vector<8x128xbf16>, vector<128x512xbf16>, vector<8x512xf32> -> vector<8x512xf32>
    %125 = arith.extf %121 : vector<8x512xbf16> to vector<8x512xf32>
    %126 = arith.addf %124, %125 : vector<8x512xf32>
    %127 = arith.addf %126, %10 : vector<8x512xf32>
    %128 = vector.extract_strided_slice %127 {offsets = [0, 0], sizes = [8, 128], strides = [1, 1]} : vector<8x512xf32> to vector<8x128xf32>
    %129 = arith.negf %128 : vector<8x128xf32>
    %130 = math.exp %129 : vector<8x128xf32>
    %cst_51 = arith.constant 1.000000e+00 : f32
    %131 = vector.broadcast %cst_51 : f32 to vector<8x128xf32>
    %132 = arith.addf %131, %130 : vector<8x128xf32>
    %133 = arith.divf %131, %132 : vector<8x128xf32>
    %134 = vector.extract_strided_slice %127 {offsets = [0, 128], sizes = [8, 128], strides = [1, 1]} : vector<8x512xf32> to vector<8x128xf32>
    %135 = arith.negf %134 : vector<8x128xf32>
    %136 = math.exp %135 : vector<8x128xf32>
    %cst_52 = arith.constant 1.000000e+00 : f32
    %137 = vector.broadcast %cst_52 : f32 to vector<8x128xf32>
    %138 = arith.addf %137, %136 : vector<8x128xf32>
    %139 = arith.divf %137, %138 : vector<8x128xf32>
    %140 = vector.extract_strided_slice %127 {offsets = [0, 256], sizes = [8, 128], strides = [1, 1]} : vector<8x512xf32> to vector<8x128xf32>
    %141 = math.tanh %140 : vector<8x128xf32>
    %142 = vector.extract_strided_slice %127 {offsets = [0, 384], sizes = [8, 128], strides = [1, 1]} : vector<8x512xf32> to vector<8x128xf32>
    %143 = arith.negf %142 : vector<8x128xf32>
    %144 = math.exp %143 : vector<8x128xf32>
    %cst_53 = arith.constant 1.000000e+00 : f32
    %145 = vector.broadcast %cst_53 : f32 to vector<8x128xf32>
    %146 = arith.addf %145, %144 : vector<8x128xf32>
    %147 = arith.divf %145, %146 : vector<8x128xf32>
    %148 = arith.mulf %139, %69 : vector<8x128xf32>
    %149 = arith.mulf %133, %141 : vector<8x128xf32>
    %150 = arith.addf %148, %149 : vector<8x128xf32>
    %151 = math.tanh %150 : vector<8x128xf32>
    %152 = arith.mulf %147, %151 : vector<8x128xf32>
    %153 = vector.broadcast %122 : i32 to vector<8x128xi32>
    %154 = arith.cmpi slt, %153, %17 : vector<8x128xi32>
    %cst_54 = arith.constant 0.000000e+00 : f32
    %155 = vector.broadcast %cst_54 : f32 to vector<8x128xf32>
    %156 = arith.select %154, %152, %155 : vector<8x128xi1>, vector<8x128xf32>
    %157 = arith.select %154, %152, %68 : vector<8x128xi1>, vector<8x128xf32>
    %158 = arith.select %154, %150, %69 : vector<8x128xi1>, vector<8x128xf32>
    %c0_55 = arith.constant 0 : index
    %159 = arith.index_cast %118 : i32 to index
    %c0_56 = arith.constant 0 : index
    %c0_57 = arith.constant 0 : index
    %160 = vector.load %arg2[%c0_55, %159, %c0_56, %c0_57] : memref<1x8x8x512xbf16, #tpu.memory_space<vmem>>, vector<1x1x8x512xbf16>
    %161 = vector.shape_cast %160 : vector<1x1x8x512xbf16> to vector<8x512xbf16>
    %162 = arith.addi %20, %118 : i32
    %163 = arith.truncf %108 : vector<8x128xf32> to vector<8x128xbf16>
    %cst_58 = arith.constant dense<0.000000e+00> : vector<8x512xf32>
    %164 = tpu.matmul %163, %6, %cst_58 {dimension_numbers = #tpu.dot_dimension_numbers<[1], [0], [0], [1], [0, 0, 1, 1], [], []>} : vector<8x128xbf16>, vector<128x512xbf16>, vector<8x512xf32> -> vector<8x512xf32>
    %165 = arith.extf %161 : vector<8x512xbf16> to vector<8x512xf32>
    %166 = arith.addf %164, %165 : vector<8x512xf32>
    %167 = arith.addf %166, %14 : vector<8x512xf32>
    %168 = vector.extract_strided_slice %167 {offsets = [0, 0], sizes = [8, 128], strides = [1, 1]} : vector<8x512xf32> to vector<8x128xf32>
    %169 = arith.negf %168 : vector<8x128xf32>
    %170 = math.exp %169 : vector<8x128xf32>
    %cst_59 = arith.constant 1.000000e+00 : f32
    %171 = vector.broadcast %cst_59 : f32 to vector<8x128xf32>
    %172 = arith.addf %171, %170 : vector<8x128xf32>
    %173 = arith.divf %171, %172 : vector<8x128xf32>
    %174 = vector.extract_strided_slice %167 {offsets = [0, 128], sizes = [8, 128], strides = [1, 1]} : vector<8x512xf32> to vector<8x128xf32>
    %175 = arith.negf %174 : vector<8x128xf32>
    %176 = math.exp %175 : vector<8x128xf32>
    %cst_60 = arith.constant 1.000000e+00 : f32
    %177 = vector.broadcast %cst_60 : f32 to vector<8x128xf32>
    %178 = arith.addf %177, %176 : vector<8x128xf32>
    %179 = arith.divf %177, %178 : vector<8x128xf32>
    %180 = vector.extract_strided_slice %167 {offsets = [0, 256], sizes = [8, 128], strides = [1, 1]} : vector<8x512xf32> to vector<8x128xf32>
    %181 = math.tanh %180 : vector<8x128xf32>
    %182 = vector.extract_strided_slice %167 {offsets = [0, 384], sizes = [8, 128], strides = [1, 1]} : vector<8x512xf32> to vector<8x128xf32>
    %183 = arith.negf %182 : vector<8x128xf32>
    %184 = math.exp %183 : vector<8x128xf32>
    %cst_61 = arith.constant 1.000000e+00 : f32
    %185 = vector.broadcast %cst_61 : f32 to vector<8x128xf32>
    %186 = arith.addf %185, %184 : vector<8x128xf32>
    %187 = arith.divf %185, %186 : vector<8x128xf32>
    %188 = arith.mulf %179, %109 : vector<8x128xf32>
    %189 = arith.mulf %173, %181 : vector<8x128xf32>
    %190 = arith.addf %188, %189 : vector<8x128xf32>
    %191 = math.tanh %190 : vector<8x128xf32>
    %192 = arith.mulf %187, %191 : vector<8x128xf32>
    %193 = vector.broadcast %162 : i32 to vector<8x128xi32>
    %194 = arith.cmpi slt, %193, %17 : vector<8x128xi32>
    %cst_62 = arith.constant 0.000000e+00 : f32
    %195 = vector.broadcast %cst_62 : f32 to vector<8x128xf32>
    %196 = arith.select %194, %192, %195 : vector<8x128xi1>, vector<8x128xf32>
    %197 = arith.select %194, %192, %108 : vector<8x128xi1>, vector<8x128xf32>
    %198 = arith.select %194, %190, %109 : vector<8x128xi1>, vector<8x128xf32>
    %199 = arith.index_cast %c1_i32 : i32 to index
    %c0_63 = arith.constant 0 : index
    %c0_64 = arith.constant 0 : index
    %200 = vector.load %arg6[%199, %c0_63, %c0_64] : memref<8x8x128xf32, #tpu.memory_space<vmem>>, vector<1x8x128xf32>
    %201 = vector.shape_cast %200 : vector<1x8x128xf32> to vector<8x128xf32>
    %202 = vector.shape_cast %156 : vector<8x128xf32> to vector<1x8x128xf32>
    tpu.vector_store %arg6[%199, %c0_63, %c0_64], %202 {strides = array<i32>} : memref<8x8x128xf32, #tpu.memory_space<vmem>>, vector<1x8x128xf32>,
    %203 = arith.index_cast %118 : i32 to index
    %c0_65 = arith.constant 0 : index
    %c0_66 = arith.constant 0 : index
    %204 = vector.load %arg7[%203, %c0_65, %c0_66] : memref<8x8x128xf32, #tpu.memory_space<vmem>>, vector<1x8x128xf32>
    %205 = vector.shape_cast %204 : vector<1x8x128xf32> to vector<8x128xf32>
    %206 = vector.shape_cast %196 : vector<8x128xf32> to vector<1x8x128xf32>
    tpu.vector_store %arg7[%203, %c0_65, %c0_66], %206 {strides = array<i32>} : memref<8x8x128xf32, #tpu.memory_space<vmem>>, vector<1x8x128xf32>,
    %c2_i32 = arith.constant 2 : i32
    %c7_i32_67 = arith.constant 7 : i32
    %207 = arith.subi %c7_i32_67, %c2_i32 : i32
    %c0_68 = arith.constant 0 : index
    %208 = arith.index_cast %c2_i32 : i32 to index
    %c0_69 = arith.constant 0 : index
    %c0_70 = arith.constant 0 : index
    %209 = vector.load %arg1[%c0_68, %208, %c0_69, %c0_70] : memref<1x8x8x512xbf16, #tpu.memory_space<vmem>>, vector<1x1x8x512xbf16>
    %210 = vector.shape_cast %209 : vector<1x1x8x512xbf16> to vector<8x512xbf16>
    %211 = arith.addi %18, %c2_i32 : i32
    %212 = arith.truncf %157 : vector<8x128xf32> to vector<8x128xbf16>
    %cst_71 = arith.constant dense<0.000000e+00> : vector<8x512xf32>
    %213 = tpu.matmul %212, %4, %cst_71 {dimension_numbers = #tpu.dot_dimension_numbers<[1], [0], [0], [1], [0, 0, 1, 1], [], []>} : vector<8x128xbf16>, vector<128x512xbf16>, vector<8x512xf32> -> vector<8x512xf32>
    %214 = arith.extf %210 : vector<8x512xbf16> to vector<8x512xf32>
    %215 = arith.addf %213, %214 : vector<8x512xf32>
    %216 = arith.addf %215, %10 : vector<8x512xf32>
    %217 = vector.extract_strided_slice %216 {offsets = [0, 0], sizes = [8, 128], strides = [1, 1]} : vector<8x512xf32> to vector<8x128xf32>
    %218 = arith.negf %217 : vector<8x128xf32>
    %219 = math.exp %218 : vector<8x128xf32>
    %cst_72 = arith.constant 1.000000e+00 : f32
    %220 = vector.broadcast %cst_72 : f32 to vector<8x128xf32>
    %221 = arith.addf %220, %219 : vector<8x128xf32>
    %222 = arith.divf %220, %221 : vector<8x128xf32>
    %223 = vector.extract_strided_slice %216 {offsets = [0, 128], sizes = [8, 128], strides = [1, 1]} : vector<8x512xf32> to vector<8x128xf32>
    %224 = arith.negf %223 : vector<8x128xf32>
    %225 = math.exp %224 : vector<8x128xf32>
    %cst_73 = arith.constant 1.000000e+00 : f32
    %226 = vector.broadcast %cst_73 : f32 to vector<8x128xf32>
    %227 = arith.addf %226, %225 : vector<8x128xf32>
    %228 = arith.divf %226, %227 : vector<8x128xf32>
    %229 = vector.extract_strided_slice %216 {offsets = [0, 256], sizes = [8, 128], strides = [1, 1]} : vector<8x512xf32> to vector<8x128xf32>
    %230 = math.tanh %229 : vector<8x128xf32>
    %231 = vector.extract_strided_slice %216 {offsets = [0, 384], sizes = [8, 128], strides = [1, 1]} : vector<8x512xf32> to vector<8x128xf32>
    %232 = arith.negf %231 : vector<8x128xf32>
    %233 = math.exp %232 : vector<8x128xf32>
    %cst_74 = arith.constant 1.000000e+00 : f32
    %234 = vector.broadcast %cst_74 : f32 to vector<8x128xf32>
    %235 = arith.addf %234, %233 : vector<8x128xf32>
    %236 = arith.divf %234, %235 : vector<8x128xf32>
    %237 = arith.mulf %228, %158 : vector<8x128xf32>
    %238 = arith.mulf %222, %230 : vector<8x128xf32>
    %239 = arith.addf %237, %238 : vector<8x128xf32>
    %240 = math.tanh %239 : vector<8x128xf32>
    %241 = arith.mulf %236, %240 : vector<8x128xf32>
    %242 = vector.broadcast %211 : i32 to vector<8x128xi32>
    %243 = arith.cmpi slt, %242, %17 : vector<8x128xi32>
    %cst_75 = arith.constant 0.000000e+00 : f32
    %244 = vector.broadcast %cst_75 : f32 to vector<8x128xf32>
    %245 = arith.select %243, %241, %244 : vector<8x128xi1>, vector<8x128xf32>
    %246 = arith.select %243, %241, %157 : vector<8x128xi1>, vector<8x128xf32>
    %247 = arith.select %243, %239, %158 : vector<8x128xi1>, vector<8x128xf32>
    %c0_76 = arith.constant 0 : index
    %248 = arith.index_cast %207 : i32 to index
    %c0_77 = arith.constant 0 : index
    %c0_78 = arith.constant 0 : index
    %249 = vector.load %arg2[%c0_76, %248, %c0_77, %c0_78] : memref<1x8x8x512xbf16, #tpu.memory_space<vmem>>, vector<1x1x8x512xbf16>
    %250 = vector.shape_cast %249 : vector<1x1x8x512xbf16> to vector<8x512xbf16>
    %251 = arith.addi %20, %207 : i32
    %252 = arith.truncf %197 : vector<8x128xf32> to vector<8x128xbf16>
    %cst_79 = arith.constant dense<0.000000e+00> : vector<8x512xf32>
    %253 = tpu.matmul %252, %6, %cst_79 {dimension_numbers = #tpu.dot_dimension_numbers<[1], [0], [0], [1], [0, 0, 1, 1], [], []>} : vector<8x128xbf16>, vector<128x512xbf16>, vector<8x512xf32> -> vector<8x512xf32>
    %254 = arith.extf %250 : vector<8x512xbf16> to vector<8x512xf32>
    %255 = arith.addf %253, %254 : vector<8x512xf32>
    %256 = arith.addf %255, %14 : vector<8x512xf32>
    %257 = vector.extract_strided_slice %256 {offsets = [0, 0], sizes = [8, 128], strides = [1, 1]} : vector<8x512xf32> to vector<8x128xf32>
    %258 = arith.negf %257 : vector<8x128xf32>
    %259 = math.exp %258 : vector<8x128xf32>
    %cst_80 = arith.constant 1.000000e+00 : f32
    %260 = vector.broadcast %cst_80 : f32 to vector<8x128xf32>
    %261 = arith.addf %260, %259 : vector<8x128xf32>
    %262 = arith.divf %260, %261 : vector<8x128xf32>
    %263 = vector.extract_strided_slice %256 {offsets = [0, 128], sizes = [8, 128], strides = [1, 1]} : vector<8x512xf32> to vector<8x128xf32>
    %264 = arith.negf %263 : vector<8x128xf32>
    %265 = math.exp %264 : vector<8x128xf32>
    %cst_81 = arith.constant 1.000000e+00 : f32
    %266 = vector.broadcast %cst_81 : f32 to vector<8x128xf32>
    %267 = arith.addf %266, %265 : vector<8x128xf32>
    %268 = arith.divf %266, %267 : vector<8x128xf32>
    %269 = vector.extract_strided_slice %256 {offsets = [0, 256], sizes = [8, 128], strides = [1, 1]} : vector<8x512xf32> to vector<8x128xf32>
    %270 = math.tanh %269 : vector<8x128xf32>
    %271 = vector.extract_strided_slice %256 {offsets = [0, 384], sizes = [8, 128], strides = [1, 1]} : vector<8x512xf32> to vector<8x128xf32>
    %272 = arith.negf %271 : vector<8x128xf32>
    %273 = math.exp %272 : vector<8x128xf32>
    %cst_82 = arith.constant 1.000000e+00 : f32
    %274 = vector.broadcast %cst_82 : f32 to vector<8x128xf32>
    %275 = arith.addf %274, %273 : vector<8x128xf32>
    %276 = arith.divf %274, %275 : vector<8x128xf32>
    %277 = arith.mulf %268, %198 : vector<8x128xf32>
    %278 = arith.mulf %262, %270 : vector<8x128xf32>
    %279 = arith.addf %277, %278 : vector<8x128xf32>
    %280 = math.tanh %279 : vector<8x128xf32>
    %281 = arith.mulf %276, %280 : vector<8x128xf32>
    %282 = vector.broadcast %251 : i32 to vector<8x128xi32>
    %283 = arith.cmpi slt, %282, %17 : vector<8x128xi32>
    %cst_83 = arith.constant 0.000000e+00 : f32
    %284 = vector.broadcast %cst_83 : f32 to vector<8x128xf32>
    %285 = arith.select %283, %281, %284 : vector<8x128xi1>, vector<8x128xf32>
    %286 = arith.select %283, %281, %197 : vector<8x128xi1>, vector<8x128xf32>
    %287 = arith.select %283, %279, %198 : vector<8x128xi1>, vector<8x128xf32>
    %288 = arith.index_cast %c2_i32 : i32 to index
    %c0_84 = arith.constant 0 : index
    %c0_85 = arith.constant 0 : index
    %289 = vector.load %arg6[%288, %c0_84, %c0_85] : memref<8x8x128xf32, #tpu.memory_space<vmem>>, vector<1x8x128xf32>
    %290 = vector.shape_cast %289 : vector<1x8x128xf32> to vector<8x128xf32>
    %291 = vector.shape_cast %245 : vector<8x128xf32> to vector<1x8x128xf32>
    tpu.vector_store %arg6[%288, %c0_84, %c0_85], %291 {strides = array<i32>} : memref<8x8x128xf32, #tpu.memory_space<vmem>>, vector<1x8x128xf32>,
    %292 = arith.index_cast %207 : i32 to index
    %c0_86 = arith.constant 0 : index
    %c0_87 = arith.constant 0 : index
    %293 = vector.load %arg7[%292, %c0_86, %c0_87] : memref<8x8x128xf32, #tpu.memory_space<vmem>>, vector<1x8x128xf32>
    %294 = vector.shape_cast %293 : vector<1x8x128xf32> to vector<8x128xf32>
    %295 = vector.shape_cast %285 : vector<8x128xf32> to vector<1x8x128xf32>
    tpu.vector_store %arg7[%292, %c0_86, %c0_87], %295 {strides = array<i32>} : memref<8x8x128xf32, #tpu.memory_space<vmem>>, vector<1x8x128xf32>,
    %c3_i32_88 = arith.constant 3 : i32
    %c7_i32_89 = arith.constant 7 : i32
    %296 = arith.subi %c7_i32_89, %c3_i32_88 : i32
    %c0_90 = arith.constant 0 : index
    %297 = arith.index_cast %c3_i32_88 : i32 to index
    %c0_91 = arith.constant 0 : index
    %c0_92 = arith.constant 0 : index
    %298 = vector.load %arg1[%c0_90, %297, %c0_91, %c0_92] : memref<1x8x8x512xbf16, #tpu.memory_space<vmem>>, vector<1x1x8x512xbf16>
    %299 = vector.shape_cast %298 : vector<1x1x8x512xbf16> to vector<8x512xbf16>
    %300 = arith.addi %18, %c3_i32_88 : i32
    %301 = arith.truncf %246 : vector<8x128xf32> to vector<8x128xbf16>
    %cst_93 = arith.constant dense<0.000000e+00> : vector<8x512xf32>
    %302 = tpu.matmul %301, %4, %cst_93 {dimension_numbers = #tpu.dot_dimension_numbers<[1], [0], [0], [1], [0, 0, 1, 1], [], []>} : vector<8x128xbf16>, vector<128x512xbf16>, vector<8x512xf32> -> vector<8x512xf32>
    %303 = arith.extf %299 : vector<8x512xbf16> to vector<8x512xf32>
    %304 = arith.addf %302, %303 : vector<8x512xf32>
    %305 = arith.addf %304, %10 : vector<8x512xf32>
    %306 = vector.extract_strided_slice %305 {offsets = [0, 0], sizes = [8, 128], strides = [1, 1]} : vector<8x512xf32> to vector<8x128xf32>
    %307 = arith.negf %306 : vector<8x128xf32>
    %308 = math.exp %307 : vector<8x128xf32>
    %cst_94 = arith.constant 1.000000e+00 : f32
    %309 = vector.broadcast %cst_94 : f32 to vector<8x128xf32>
    %310 = arith.addf %309, %308 : vector<8x128xf32>
    %311 = arith.divf %309, %310 : vector<8x128xf32>
    %312 = vector.extract_strided_slice %305 {offsets = [0, 128], sizes = [8, 128], strides = [1, 1]} : vector<8x512xf32> to vector<8x128xf32>
    %313 = arith.negf %312 : vector<8x128xf32>
    %314 = math.exp %313 : vector<8x128xf32>
    %cst_95 = arith.constant 1.000000e+00 : f32
    %315 = vector.broadcast %cst_95 : f32 to vector<8x128xf32>
    %316 = arith.addf %315, %314 : vector<8x128xf32>
    %317 = arith.divf %315, %316 : vector<8x128xf32>
    %318 = vector.extract_strided_slice %305 {offsets = [0, 256], sizes = [8, 128], strides = [1, 1]} : vector<8x512xf32> to vector<8x128xf32>
    %319 = math.tanh %318 : vector<8x128xf32>
    %320 = vector.extract_strided_slice %305 {offsets = [0, 384], sizes = [8, 128], strides = [1, 1]} : vector<8x512xf32> to vector<8x128xf32>
    %321 = arith.negf %320 : vector<8x128xf32>
    %322 = math.exp %321 : vector<8x128xf32>
    %cst_96 = arith.constant 1.000000e+00 : f32
    %323 = vector.broadcast %cst_96 : f32 to vector<8x128xf32>
    %324 = arith.addf %323, %322 : vector<8x128xf32>
    %325 = arith.divf %323, %324 : vector<8x128xf32>
    %326 = arith.mulf %317, %247 : vector<8x128xf32>
    %327 = arith.mulf %311, %319 : vector<8x128xf32>
    %328 = arith.addf %326, %327 : vector<8x128xf32>
    %329 = math.tanh %328 : vector<8x128xf32>
    %330 = arith.mulf %325, %329 : vector<8x128xf32>
    %331 = vector.broadcast %300 : i32 to vector<8x128xi32>
    %332 = arith.cmpi slt, %331, %17 : vector<8x128xi32>
    %cst_97 = arith.constant 0.000000e+00 : f32
    %333 = vector.broadcast %cst_97 : f32 to vector<8x128xf32>
    %334 = arith.select %332, %330, %333 : vector<8x128xi1>, vector<8x128xf32>
    %335 = arith.select %332, %330, %246 : vector<8x128xi1>, vector<8x128xf32>
    %336 = arith.select %332, %328, %247 : vector<8x128xi1>, vector<8x128xf32>
    %c0_98 = arith.constant 0 : index
    %337 = arith.index_cast %296 : i32 to index
    %c0_99 = arith.constant 0 : index
    %c0_100 = arith.constant 0 : index
    %338 = vector.load %arg2[%c0_98, %337, %c0_99, %c0_100] : memref<1x8x8x512xbf16, #tpu.memory_space<vmem>>, vector<1x1x8x512xbf16>
    %339 = vector.shape_cast %338 : vector<1x1x8x512xbf16> to vector<8x512xbf16>
    %340 = arith.addi %20, %296 : i32
    %341 = arith.truncf %286 : vector<8x128xf32> to vector<8x128xbf16>
    %cst_101 = arith.constant dense<0.000000e+00> : vector<8x512xf32>
    %342 = tpu.matmul %341, %6, %cst_101 {dimension_numbers = #tpu.dot_dimension_numbers<[1], [0], [0], [1], [0, 0, 1, 1], [], []>} : vector<8x128xbf16>, vector<128x512xbf16>, vector<8x512xf32> -> vector<8x512xf32>
    %343 = arith.extf %339 : vector<8x512xbf16> to vector<8x512xf32>
    %344 = arith.addf %342, %343 : vector<8x512xf32>
    %345 = arith.addf %344, %14 : vector<8x512xf32>
    %346 = vector.extract_strided_slice %345 {offsets = [0, 0], sizes = [8, 128], strides = [1, 1]} : vector<8x512xf32> to vector<8x128xf32>
    %347 = arith.negf %346 : vector<8x128xf32>
    %348 = math.exp %347 : vector<8x128xf32>
    %cst_102 = arith.constant 1.000000e+00 : f32
    %349 = vector.broadcast %cst_102 : f32 to vector<8x128xf32>
    %350 = arith.addf %349, %348 : vector<8x128xf32>
    %351 = arith.divf %349, %350 : vector<8x128xf32>
    %352 = vector.extract_strided_slice %345 {offsets = [0, 128], sizes = [8, 128], strides = [1, 1]} : vector<8x512xf32> to vector<8x128xf32>
    %353 = arith.negf %352 : vector<8x128xf32>
    %354 = math.exp %353 : vector<8x128xf32>
    %cst_103 = arith.constant 1.000000e+00 : f32
    %355 = vector.broadcast %cst_103 : f32 to vector<8x128xf32>
    %356 = arith.addf %355, %354 : vector<8x128xf32>
    %357 = arith.divf %355, %356 : vector<8x128xf32>
    %358 = vector.extract_strided_slice %345 {offsets = [0, 256], sizes = [8, 128], strides = [1, 1]} : vector<8x512xf32> to vector<8x128xf32>
    %359 = math.tanh %358 : vector<8x128xf32>
    %360 = vector.extract_strided_slice %345 {offsets = [0, 384], sizes = [8, 128], strides = [1, 1]} : vector<8x512xf32> to vector<8x128xf32>
    %361 = arith.negf %360 : vector<8x128xf32>
    %362 = math.exp %361 : vector<8x128xf32>
    %cst_104 = arith.constant 1.000000e+00 : f32
    %363 = vector.broadcast %cst_104 : f32 to vector<8x128xf32>
    %364 = arith.addf %363, %362 : vector<8x128xf32>
    %365 = arith.divf %363, %364 : vector<8x128xf32>
    %366 = arith.mulf %357, %287 : vector<8x128xf32>
    %367 = arith.mulf %351, %359 : vector<8x128xf32>
    %368 = arith.addf %366, %367 : vector<8x128xf32>
    %369 = math.tanh %368 : vector<8x128xf32>
    %370 = arith.mulf %365, %369 : vector<8x128xf32>
    %371 = vector.broadcast %340 : i32 to vector<8x128xi32>
    %372 = arith.cmpi slt, %371, %17 : vector<8x128xi32>
    %cst_105 = arith.constant 0.000000e+00 : f32
    %373 = vector.broadcast %cst_105 : f32 to vector<8x128xf32>
    %374 = arith.select %372, %370, %373 : vector<8x128xi1>, vector<8x128xf32>
    %375 = arith.select %372, %370, %286 : vector<8x128xi1>, vector<8x128xf32>
    %376 = arith.select %372, %368, %287 : vector<8x128xi1>, vector<8x128xf32>
    %377 = arith.index_cast %c3_i32_88 : i32 to index
    %c0_106 = arith.constant 0 : index
    %c0_107 = arith.constant 0 : index
    %378 = vector.load %arg6[%377, %c0_106, %c0_107] : memref<8x8x128xf32, #tpu.memory_space<vmem>>, vector<1x8x128xf32>
    %379 = vector.shape_cast %378 : vector<1x8x128xf32> to vector<8x128xf32>
    %380 = vector.shape_cast %334 : vector<8x128xf32> to vector<1x8x128xf32>
    tpu.vector_store %arg6[%377, %c0_106, %c0_107], %380 {strides = array<i32>} : memref<8x8x128xf32, #tpu.memory_space<vmem>>, vector<1x8x128xf32>,
    %381 = arith.index_cast %296 : i32 to index
    %c0_108 = arith.constant 0 : index
    %c0_109 = arith.constant 0 : index
    %382 = vector.load %arg7[%381, %c0_108, %c0_109] : memref<8x8x128xf32, #tpu.memory_space<vmem>>, vector<1x8x128xf32>
    %383 = vector.shape_cast %382 : vector<1x8x128xf32> to vector<8x128xf32>
    %384 = vector.shape_cast %374 : vector<8x128xf32> to vector<1x8x128xf32>
    tpu.vector_store %arg7[%381, %c0_108, %c0_109], %384 {strides = array<i32>} : memref<8x8x128xf32, #tpu.memory_space<vmem>>, vector<1x8x128xf32>,
    %c4_i32 = arith.constant 4 : i32
    %c7_i32_110 = arith.constant 7 : i32
    %385 = arith.subi %c7_i32_110, %c4_i32 : i32
    %c0_111 = arith.constant 0 : index
    %386 = arith.index_cast %c4_i32 : i32 to index
    %c0_112 = arith.constant 0 : index
    %c0_113 = arith.constant 0 : index
    %387 = vector.load %arg1[%c0_111, %386, %c0_112, %c0_113] : memref<1x8x8x512xbf16, #tpu.memory_space<vmem>>, vector<1x1x8x512xbf16>
    %388 = vector.shape_cast %387 : vector<1x1x8x512xbf16> to vector<8x512xbf16>
    %389 = arith.addi %18, %c4_i32 : i32
    %390 = arith.truncf %335 : vector<8x128xf32> to vector<8x128xbf16>
    %cst_114 = arith.constant dense<0.000000e+00> : vector<8x512xf32>
    %391 = tpu.matmul %390, %4, %cst_114 {dimension_numbers = #tpu.dot_dimension_numbers<[1], [0], [0], [1], [0, 0, 1, 1], [], []>} : vector<8x128xbf16>, vector<128x512xbf16>, vector<8x512xf32> -> vector<8x512xf32>
    %392 = arith.extf %388 : vector<8x512xbf16> to vector<8x512xf32>
    %393 = arith.addf %391, %392 : vector<8x512xf32>
    %394 = arith.addf %393, %10 : vector<8x512xf32>
    %395 = vector.extract_strided_slice %394 {offsets = [0, 0], sizes = [8, 128], strides = [1, 1]} : vector<8x512xf32> to vector<8x128xf32>
    %396 = arith.negf %395 : vector<8x128xf32>
    %397 = math.exp %396 : vector<8x128xf32>
    %cst_115 = arith.constant 1.000000e+00 : f32
    %398 = vector.broadcast %cst_115 : f32 to vector<8x128xf32>
    %399 = arith.addf %398, %397 : vector<8x128xf32>
    %400 = arith.divf %398, %399 : vector<8x128xf32>
    %401 = vector.extract_strided_slice %394 {offsets = [0, 128], sizes = [8, 128], strides = [1, 1]} : vector<8x512xf32> to vector<8x128xf32>
    %402 = arith.negf %401 : vector<8x128xf32>
    %403 = math.exp %402 : vector<8x128xf32>
    %cst_116 = arith.constant 1.000000e+00 : f32
    %404 = vector.broadcast %cst_116 : f32 to vector<8x128xf32>
    %405 = arith.addf %404, %403 : vector<8x128xf32>
    %406 = arith.divf %404, %405 : vector<8x128xf32>
    %407 = vector.extract_strided_slice %394 {offsets = [0, 256], sizes = [8, 128], strides = [1, 1]} : vector<8x512xf32> to vector<8x128xf32>
    %408 = math.tanh %407 : vector<8x128xf32>
    %409 = vector.extract_strided_slice %394 {offsets = [0, 384], sizes = [8, 128], strides = [1, 1]} : vector<8x512xf32> to vector<8x128xf32>
    %410 = arith.negf %409 : vector<8x128xf32>
    %411 = math.exp %410 : vector<8x128xf32>
    %cst_117 = arith.constant 1.000000e+00 : f32
    %412 = vector.broadcast %cst_117 : f32 to vector<8x128xf32>
    %413 = arith.addf %412, %411 : vector<8x128xf32>
    %414 = arith.divf %412, %413 : vector<8x128xf32>
    %415 = arith.mulf %406, %336 : vector<8x128xf32>
    %416 = arith.mulf %400, %408 : vector<8x128xf32>
    %417 = arith.addf %415, %416 : vector<8x128xf32>
    %418 = math.tanh %417 : vector<8x128xf32>
    %419 = arith.mulf %414, %418 : vector<8x128xf32>
    %420 = vector.broadcast %389 : i32 to vector<8x128xi32>
    %421 = arith.cmpi slt, %420, %17 : vector<8x128xi32>
    %cst_118 = arith.constant 0.000000e+00 : f32
    %422 = vector.broadcast %cst_118 : f32 to vector<8x128xf32>
    %423 = arith.select %421, %419, %422 : vector<8x128xi1>, vector<8x128xf32>
    %424 = arith.select %421, %419, %335 : vector<8x128xi1>, vector<8x128xf32>
    %425 = arith.select %421, %417, %336 : vector<8x128xi1>, vector<8x128xf32>
    %c0_119 = arith.constant 0 : index
    %426 = arith.index_cast %385 : i32 to index
    %c0_120 = arith.constant 0 : index
    %c0_121 = arith.constant 0 : index
    %427 = vector.load %arg2[%c0_119, %426, %c0_120, %c0_121] : memref<1x8x8x512xbf16, #tpu.memory_space<vmem>>, vector<1x1x8x512xbf16>
    %428 = vector.shape_cast %427 : vector<1x1x8x512xbf16> to vector<8x512xbf16>
    %429 = arith.addi %20, %385 : i32
    %430 = arith.truncf %375 : vector<8x128xf32> to vector<8x128xbf16>
    %cst_122 = arith.constant dense<0.000000e+00> : vector<8x512xf32>
    %431 = tpu.matmul %430, %6, %cst_122 {dimension_numbers = #tpu.dot_dimension_numbers<[1], [0], [0], [1], [0, 0, 1, 1], [], []>} : vector<8x128xbf16>, vector<128x512xbf16>, vector<8x512xf32> -> vector<8x512xf32>
    %432 = arith.extf %428 : vector<8x512xbf16> to vector<8x512xf32>
    %433 = arith.addf %431, %432 : vector<8x512xf32>
    %434 = arith.addf %433, %14 : vector<8x512xf32>
    %435 = vector.extract_strided_slice %434 {offsets = [0, 0], sizes = [8, 128], strides = [1, 1]} : vector<8x512xf32> to vector<8x128xf32>
    %436 = arith.negf %435 : vector<8x128xf32>
    %437 = math.exp %436 : vector<8x128xf32>
    %cst_123 = arith.constant 1.000000e+00 : f32
    %438 = vector.broadcast %cst_123 : f32 to vector<8x128xf32>
    %439 = arith.addf %438, %437 : vector<8x128xf32>
    %440 = arith.divf %438, %439 : vector<8x128xf32>
    %441 = vector.extract_strided_slice %434 {offsets = [0, 128], sizes = [8, 128], strides = [1, 1]} : vector<8x512xf32> to vector<8x128xf32>
    %442 = arith.negf %441 : vector<8x128xf32>
    %443 = math.exp %442 : vector<8x128xf32>
    %cst_124 = arith.constant 1.000000e+00 : f32
    %444 = vector.broadcast %cst_124 : f32 to vector<8x128xf32>
    %445 = arith.addf %444, %443 : vector<8x128xf32>
    %446 = arith.divf %444, %445 : vector<8x128xf32>
    %447 = vector.extract_strided_slice %434 {offsets = [0, 256], sizes = [8, 128], strides = [1, 1]} : vector<8x512xf32> to vector<8x128xf32>
    %448 = math.tanh %447 : vector<8x128xf32>
    %449 = vector.extract_strided_slice %434 {offsets = [0, 384], sizes = [8, 128], strides = [1, 1]} : vector<8x512xf32> to vector<8x128xf32>
    %450 = arith.negf %449 : vector<8x128xf32>
    %451 = math.exp %450 : vector<8x128xf32>
    %cst_125 = arith.constant 1.000000e+00 : f32
    %452 = vector.broadcast %cst_125 : f32 to vector<8x128xf32>
    %453 = arith.addf %452, %451 : vector<8x128xf32>
    %454 = arith.divf %452, %453 : vector<8x128xf32>
    %455 = arith.mulf %446, %376 : vector<8x128xf32>
    %456 = arith.mulf %440, %448 : vector<8x128xf32>
    %457 = arith.addf %455, %456 : vector<8x128xf32>
    %458 = math.tanh %457 : vector<8x128xf32>
    %459 = arith.mulf %454, %458 : vector<8x128xf32>
    %460 = vector.broadcast %429 : i32 to vector<8x128xi32>
    %461 = arith.cmpi slt, %460, %17 : vector<8x128xi32>
    %cst_126 = arith.constant 0.000000e+00 : f32
    %462 = vector.broadcast %cst_126 : f32 to vector<8x128xf32>
    %463 = arith.select %461, %459, %462 : vector<8x128xi1>, vector<8x128xf32>
    %464 = arith.select %461, %459, %375 : vector<8x128xi1>, vector<8x128xf32>
    %465 = arith.select %461, %457, %376 : vector<8x128xi1>, vector<8x128xf32>
    %466 = arith.index_cast %c4_i32 : i32 to index
    %c0_127 = arith.constant 0 : index
    %c0_128 = arith.constant 0 : index
    %467 = vector.load %arg6[%466, %c0_127, %c0_128] : memref<8x8x128xf32, #tpu.memory_space<vmem>>, vector<1x8x128xf32>
    %468 = vector.shape_cast %467 : vector<1x8x128xf32> to vector<8x128xf32>
    %469 = vector.shape_cast %423 : vector<8x128xf32> to vector<1x8x128xf32>
    tpu.vector_store %arg6[%466, %c0_127, %c0_128], %469 {strides = array<i32>} : memref<8x8x128xf32, #tpu.memory_space<vmem>>, vector<1x8x128xf32>,
    %470 = arith.index_cast %385 : i32 to index
    %c0_129 = arith.constant 0 : index
    %c0_130 = arith.constant 0 : index
    %471 = vector.load %arg7[%470, %c0_129, %c0_130] : memref<8x8x128xf32, #tpu.memory_space<vmem>>, vector<1x8x128xf32>
    %472 = vector.shape_cast %471 : vector<1x8x128xf32> to vector<8x128xf32>
    %473 = vector.shape_cast %463 : vector<8x128xf32> to vector<1x8x128xf32>
    tpu.vector_store %arg7[%470, %c0_129, %c0_130], %473 {strides = array<i32>} : memref<8x8x128xf32, #tpu.memory_space<vmem>>, vector<1x8x128xf32>,
    %c5_i32 = arith.constant 5 : i32
    %c7_i32_131 = arith.constant 7 : i32
    %474 = arith.subi %c7_i32_131, %c5_i32 : i32
    %c0_132 = arith.constant 0 : index
    %475 = arith.index_cast %c5_i32 : i32 to index
    %c0_133 = arith.constant 0 : index
    %c0_134 = arith.constant 0 : index
    %476 = vector.load %arg1[%c0_132, %475, %c0_133, %c0_134] : memref<1x8x8x512xbf16, #tpu.memory_space<vmem>>, vector<1x1x8x512xbf16>
    %477 = vector.shape_cast %476 : vector<1x1x8x512xbf16> to vector<8x512xbf16>
    %478 = arith.addi %18, %c5_i32 : i32
    %479 = arith.truncf %424 : vector<8x128xf32> to vector<8x128xbf16>
    %cst_135 = arith.constant dense<0.000000e+00> : vector<8x512xf32>
    %480 = tpu.matmul %479, %4, %cst_135 {dimension_numbers = #tpu.dot_dimension_numbers<[1], [0], [0], [1], [0, 0, 1, 1], [], []>} : vector<8x128xbf16>, vector<128x512xbf16>, vector<8x512xf32> -> vector<8x512xf32>
    %481 = arith.extf %477 : vector<8x512xbf16> to vector<8x512xf32>
    %482 = arith.addf %480, %481 : vector<8x512xf32>
    %483 = arith.addf %482, %10 : vector<8x512xf32>
    %484 = vector.extract_strided_slice %483 {offsets = [0, 0], sizes = [8, 128], strides = [1, 1]} : vector<8x512xf32> to vector<8x128xf32>
    %485 = arith.negf %484 : vector<8x128xf32>
    %486 = math.exp %485 : vector<8x128xf32>
    %cst_136 = arith.constant 1.000000e+00 : f32
    %487 = vector.broadcast %cst_136 : f32 to vector<8x128xf32>
    %488 = arith.addf %487, %486 : vector<8x128xf32>
    %489 = arith.divf %487, %488 : vector<8x128xf32>
    %490 = vector.extract_strided_slice %483 {offsets = [0, 128], sizes = [8, 128], strides = [1, 1]} : vector<8x512xf32> to vector<8x128xf32>
    %491 = arith.negf %490 : vector<8x128xf32>
    %492 = math.exp %491 : vector<8x128xf32>
    %cst_137 = arith.constant 1.000000e+00 : f32
    %493 = vector.broadcast %cst_137 : f32 to vector<8x128xf32>
    %494 = arith.addf %493, %492 : vector<8x128xf32>
    %495 = arith.divf %493, %494 : vector<8x128xf32>
    %496 = vector.extract_strided_slice %483 {offsets = [0, 256], sizes = [8, 128], strides = [1, 1]} : vector<8x512xf32> to vector<8x128xf32>
    %497 = math.tanh %496 : vector<8x128xf32>
    %498 = vector.extract_strided_slice %483 {offsets = [0, 384], sizes = [8, 128], strides = [1, 1]} : vector<8x512xf32> to vector<8x128xf32>
    %499 = arith.negf %498 : vector<8x128xf32>
    %500 = math.exp %499 : vector<8x128xf32>
    %cst_138 = arith.constant 1.000000e+00 : f32
    %501 = vector.broadcast %cst_138 : f32 to vector<8x128xf32>
    %502 = arith.addf %501, %500 : vector<8x128xf32>
    %503 = arith.divf %501, %502 : vector<8x128xf32>
    %504 = arith.mulf %495, %425 : vector<8x128xf32>
    %505 = arith.mulf %489, %497 : vector<8x128xf32>
    %506 = arith.addf %504, %505 : vector<8x128xf32>
    %507 = math.tanh %506 : vector<8x128xf32>
    %508 = arith.mulf %503, %507 : vector<8x128xf32>
    %509 = vector.broadcast %478 : i32 to vector<8x128xi32>
    %510 = arith.cmpi slt, %509, %17 : vector<8x128xi32>
    %cst_139 = arith.constant 0.000000e+00 : f32
    %511 = vector.broadcast %cst_139 : f32 to vector<8x128xf32>
    %512 = arith.select %510, %508, %511 : vector<8x128xi1>, vector<8x128xf32>
    %513 = arith.select %510, %508, %424 : vector<8x128xi1>, vector<8x128xf32>
    %514 = arith.select %510, %506, %425 : vector<8x128xi1>, vector<8x128xf32>
    %c0_140 = arith.constant 0 : index
    %515 = arith.index_cast %474 : i32 to index
    %c0_141 = arith.constant 0 : index
    %c0_142 = arith.constant 0 : index
    %516 = vector.load %arg2[%c0_140, %515, %c0_141, %c0_142] : memref<1x8x8x512xbf16, #tpu.memory_space<vmem>>, vector<1x1x8x512xbf16>
    %517 = vector.shape_cast %516 : vector<1x1x8x512xbf16> to vector<8x512xbf16>
    %518 = arith.addi %20, %474 : i32
    %519 = arith.truncf %464 : vector<8x128xf32> to vector<8x128xbf16>
    %cst_143 = arith.constant dense<0.000000e+00> : vector<8x512xf32>
    %520 = tpu.matmul %519, %6, %cst_143 {dimension_numbers = #tpu.dot_dimension_numbers<[1], [0], [0], [1], [0, 0, 1, 1], [], []>} : vector<8x128xbf16>, vector<128x512xbf16>, vector<8x512xf32> -> vector<8x512xf32>
    %521 = arith.extf %517 : vector<8x512xbf16> to vector<8x512xf32>
    %522 = arith.addf %520, %521 : vector<8x512xf32>
    %523 = arith.addf %522, %14 : vector<8x512xf32>
    %524 = vector.extract_strided_slice %523 {offsets = [0, 0], sizes = [8, 128], strides = [1, 1]} : vector<8x512xf32> to vector<8x128xf32>
    %525 = arith.negf %524 : vector<8x128xf32>
    %526 = math.exp %525 : vector<8x128xf32>
    %cst_144 = arith.constant 1.000000e+00 : f32
    %527 = vector.broadcast %cst_144 : f32 to vector<8x128xf32>
    %528 = arith.addf %527, %526 : vector<8x128xf32>
    %529 = arith.divf %527, %528 : vector<8x128xf32>
    %530 = vector.extract_strided_slice %523 {offsets = [0, 128], sizes = [8, 128], strides = [1, 1]} : vector<8x512xf32> to vector<8x128xf32>
    %531 = arith.negf %530 : vector<8x128xf32>
    %532 = math.exp %531 : vector<8x128xf32>
    %cst_145 = arith.constant 1.000000e+00 : f32
    %533 = vector.broadcast %cst_145 : f32 to vector<8x128xf32>
    %534 = arith.addf %533, %532 : vector<8x128xf32>
    %535 = arith.divf %533, %534 : vector<8x128xf32>
    %536 = vector.extract_strided_slice %523 {offsets = [0, 256], sizes = [8, 128], strides = [1, 1]} : vector<8x512xf32> to vector<8x128xf32>
    %537 = math.tanh %536 : vector<8x128xf32>
    %538 = vector.extract_strided_slice %523 {offsets = [0, 384], sizes = [8, 128], strides = [1, 1]} : vector<8x512xf32> to vector<8x128xf32>
    %539 = arith.negf %538 : vector<8x128xf32>
    %540 = math.exp %539 : vector<8x128xf32>
    %cst_146 = arith.constant 1.000000e+00 : f32
    %541 = vector.broadcast %cst_146 : f32 to vector<8x128xf32>
    %542 = arith.addf %541, %540 : vector<8x128xf32>
    %543 = arith.divf %541, %542 : vector<8x128xf32>
    %544 = arith.mulf %535, %465 : vector<8x128xf32>
    %545 = arith.mulf %529, %537 : vector<8x128xf32>
    %546 = arith.addf %544, %545 : vector<8x128xf32>
    %547 = math.tanh %546 : vector<8x128xf32>
    %548 = arith.mulf %543, %547 : vector<8x128xf32>
    %549 = vector.broadcast %518 : i32 to vector<8x128xi32>
    %550 = arith.cmpi slt, %549, %17 : vector<8x128xi32>
    %cst_147 = arith.constant 0.000000e+00 : f32
    %551 = vector.broadcast %cst_147 : f32 to vector<8x128xf32>
    %552 = arith.select %550, %548, %551 : vector<8x128xi1>, vector<8x128xf32>
    %553 = arith.select %550, %548, %464 : vector<8x128xi1>, vector<8x128xf32>
    %554 = arith.select %550, %546, %465 : vector<8x128xi1>, vector<8x128xf32>
    %555 = arith.index_cast %c5_i32 : i32 to index
    %c0_148 = arith.constant 0 : index
    %c0_149 = arith.constant 0 : index
    %556 = vector.load %arg6[%555, %c0_148, %c0_149] : memref<8x8x128xf32, #tpu.memory_space<vmem>>, vector<1x8x128xf32>
    %557 = vector.shape_cast %556 : vector<1x8x128xf32> to vector<8x128xf32>
    %558 = vector.shape_cast %512 : vector<8x128xf32> to vector<1x8x128xf32>
    tpu.vector_store %arg6[%555, %c0_148, %c0_149], %558 {strides = array<i32>} : memref<8x8x128xf32, #tpu.memory_space<vmem>>, vector<1x8x128xf32>,
    %559 = arith.index_cast %474 : i32 to index
    %c0_150 = arith.constant 0 : index
    %c0_151 = arith.constant 0 : index
    %560 = vector.load %arg7[%559, %c0_150, %c0_151] : memref<8x8x128xf32, #tpu.memory_space<vmem>>, vector<1x8x128xf32>
    %561 = vector.shape_cast %560 : vector<1x8x128xf32> to vector<8x128xf32>
    %562 = vector.shape_cast %552 : vector<8x128xf32> to vector<1x8x128xf32>
    tpu.vector_store %arg7[%559, %c0_150, %c0_151], %562 {strides = array<i32>} : memref<8x8x128xf32, #tpu.memory_space<vmem>>, vector<1x8x128xf32>,
    %c6_i32 = arith.constant 6 : i32
    %c7_i32_152 = arith.constant 7 : i32
    %563 = arith.subi %c7_i32_152, %c6_i32 : i32
    %c0_153 = arith.constant 0 : index
    %564 = arith.index_cast %c6_i32 : i32 to index
    %c0_154 = arith.constant 0 : index
    %c0_155 = arith.constant 0 : index
    %565 = vector.load %arg1[%c0_153, %564, %c0_154, %c0_155] : memref<1x8x8x512xbf16, #tpu.memory_space<vmem>>, vector<1x1x8x512xbf16>
    %566 = vector.shape_cast %565 : vector<1x1x8x512xbf16> to vector<8x512xbf16>
    %567 = arith.addi %18, %c6_i32 : i32
    %568 = arith.truncf %513 : vector<8x128xf32> to vector<8x128xbf16>
    %cst_156 = arith.constant dense<0.000000e+00> : vector<8x512xf32>
    %569 = tpu.matmul %568, %4, %cst_156 {dimension_numbers = #tpu.dot_dimension_numbers<[1], [0], [0], [1], [0, 0, 1, 1], [], []>} : vector<8x128xbf16>, vector<128x512xbf16>, vector<8x512xf32> -> vector<8x512xf32>
    %570 = arith.extf %566 : vector<8x512xbf16> to vector<8x512xf32>
    %571 = arith.addf %569, %570 : vector<8x512xf32>
    %572 = arith.addf %571, %10 : vector<8x512xf32>
    %573 = vector.extract_strided_slice %572 {offsets = [0, 0], sizes = [8, 128], strides = [1, 1]} : vector<8x512xf32> to vector<8x128xf32>
    %574 = arith.negf %573 : vector<8x128xf32>
    %575 = math.exp %574 : vector<8x128xf32>
    %cst_157 = arith.constant 1.000000e+00 : f32
    %576 = vector.broadcast %cst_157 : f32 to vector<8x128xf32>
    %577 = arith.addf %576, %575 : vector<8x128xf32>
    %578 = arith.divf %576, %577 : vector<8x128xf32>
    %579 = vector.extract_strided_slice %572 {offsets = [0, 128], sizes = [8, 128], strides = [1, 1]} : vector<8x512xf32> to vector<8x128xf32>
    %580 = arith.negf %579 : vector<8x128xf32>
    %581 = math.exp %580 : vector<8x128xf32>
    %cst_158 = arith.constant 1.000000e+00 : f32
    %582 = vector.broadcast %cst_158 : f32 to vector<8x128xf32>
    %583 = arith.addf %582, %581 : vector<8x128xf32>
    %584 = arith.divf %582, %583 : vector<8x128xf32>
    %585 = vector.extract_strided_slice %572 {offsets = [0, 256], sizes = [8, 128], strides = [1, 1]} : vector<8x512xf32> to vector<8x128xf32>
    %586 = math.tanh %585 : vector<8x128xf32>
    %587 = vector.extract_strided_slice %572 {offsets = [0, 384], sizes = [8, 128], strides = [1, 1]} : vector<8x512xf32> to vector<8x128xf32>
    %588 = arith.negf %587 : vector<8x128xf32>
    %589 = math.exp %588 : vector<8x128xf32>
    %cst_159 = arith.constant 1.000000e+00 : f32
    %590 = vector.broadcast %cst_159 : f32 to vector<8x128xf32>
    %591 = arith.addf %590, %589 : vector<8x128xf32>
    %592 = arith.divf %590, %591 : vector<8x128xf32>
    %593 = arith.mulf %584, %514 : vector<8x128xf32>
    %594 = arith.mulf %578, %586 : vector<8x128xf32>
    %595 = arith.addf %593, %594 : vector<8x128xf32>
    %596 = math.tanh %595 : vector<8x128xf32>
    %597 = arith.mulf %592, %596 : vector<8x128xf32>
    %598 = vector.broadcast %567 : i32 to vector<8x128xi32>
    %599 = arith.cmpi slt, %598, %17 : vector<8x128xi32>
    %cst_160 = arith.constant 0.000000e+00 : f32
    %600 = vector.broadcast %cst_160 : f32 to vector<8x128xf32>
    %601 = arith.select %599, %597, %600 : vector<8x128xi1>, vector<8x128xf32>
    %602 = arith.select %599, %597, %513 : vector<8x128xi1>, vector<8x128xf32>
    %603 = arith.select %599, %595, %514 : vector<8x128xi1>, vector<8x128xf32>
    %c0_161 = arith.constant 0 : index
    %604 = arith.index_cast %563 : i32 to index
    %c0_162 = arith.constant 0 : index
    %c0_163 = arith.constant 0 : index
    %605 = vector.load %arg2[%c0_161, %604, %c0_162, %c0_163] : memref<1x8x8x512xbf16, #tpu.memory_space<vmem>>, vector<1x1x8x512xbf16>
    %606 = vector.shape_cast %605 : vector<1x1x8x512xbf16> to vector<8x512xbf16>
    %607 = arith.addi %20, %563 : i32
    %608 = arith.truncf %553 : vector<8x128xf32> to vector<8x128xbf16>
    %cst_164 = arith.constant dense<0.000000e+00> : vector<8x512xf32>
    %609 = tpu.matmul %608, %6, %cst_164 {dimension_numbers = #tpu.dot_dimension_numbers<[1], [0], [0], [1], [0, 0, 1, 1], [], []>} : vector<8x128xbf16>, vector<128x512xbf16>, vector<8x512xf32> -> vector<8x512xf32>
    %610 = arith.extf %606 : vector<8x512xbf16> to vector<8x512xf32>
    %611 = arith.addf %609, %610 : vector<8x512xf32>
    %612 = arith.addf %611, %14 : vector<8x512xf32>
    %613 = vector.extract_strided_slice %612 {offsets = [0, 0], sizes = [8, 128], strides = [1, 1]} : vector<8x512xf32> to vector<8x128xf32>
    %614 = arith.negf %613 : vector<8x128xf32>
    %615 = math.exp %614 : vector<8x128xf32>
    %cst_165 = arith.constant 1.000000e+00 : f32
    %616 = vector.broadcast %cst_165 : f32 to vector<8x128xf32>
    %617 = arith.addf %616, %615 : vector<8x128xf32>
    %618 = arith.divf %616, %617 : vector<8x128xf32>
    %619 = vector.extract_strided_slice %612 {offsets = [0, 128], sizes = [8, 128], strides = [1, 1]} : vector<8x512xf32> to vector<8x128xf32>
    %620 = arith.negf %619 : vector<8x128xf32>
    %621 = math.exp %620 : vector<8x128xf32>
    %cst_166 = arith.constant 1.000000e+00 : f32
    %622 = vector.broadcast %cst_166 : f32 to vector<8x128xf32>
    %623 = arith.addf %622, %621 : vector<8x128xf32>
    %624 = arith.divf %622, %623 : vector<8x128xf32>
    %625 = vector.extract_strided_slice %612 {offsets = [0, 256], sizes = [8, 128], strides = [1, 1]} : vector<8x512xf32> to vector<8x128xf32>
    %626 = math.tanh %625 : vector<8x128xf32>
    %627 = vector.extract_strided_slice %612 {offsets = [0, 384], sizes = [8, 128], strides = [1, 1]} : vector<8x512xf32> to vector<8x128xf32>
    %628 = arith.negf %627 : vector<8x128xf32>
    %629 = math.exp %628 : vector<8x128xf32>
    %cst_167 = arith.constant 1.000000e+00 : f32
    %630 = vector.broadcast %cst_167 : f32 to vector<8x128xf32>
    %631 = arith.addf %630, %629 : vector<8x128xf32>
    %632 = arith.divf %630, %631 : vector<8x128xf32>
    %633 = arith.mulf %624, %554 : vector<8x128xf32>
    %634 = arith.mulf %618, %626 : vector<8x128xf32>
    %635 = arith.addf %633, %634 : vector<8x128xf32>
    %636 = math.tanh %635 : vector<8x128xf32>
    %637 = arith.mulf %632, %636 : vector<8x128xf32>
    %638 = vector.broadcast %607 : i32 to vector<8x128xi32>
    %639 = arith.cmpi slt, %638, %17 : vector<8x128xi32>
    %cst_168 = arith.constant 0.000000e+00 : f32
    %640 = vector.broadcast %cst_168 : f32 to vector<8x128xf32>
    %641 = arith.select %639, %637, %640 : vector<8x128xi1>, vector<8x128xf32>
    %642 = arith.select %639, %637, %553 : vector<8x128xi1>, vector<8x128xf32>
    %643 = arith.select %639, %635, %554 : vector<8x128xi1>, vector<8x128xf32>
    %644 = arith.index_cast %c6_i32 : i32 to index
    %c0_169 = arith.constant 0 : index
    %c0_170 = arith.constant 0 : index
    %645 = vector.load %arg6[%644, %c0_169, %c0_170] : memref<8x8x128xf32, #tpu.memory_space<vmem>>, vector<1x8x128xf32>
    %646 = vector.shape_cast %645 : vector<1x8x128xf32> to vector<8x128xf32>
    %647 = vector.shape_cast %601 : vector<8x128xf32> to vector<1x8x128xf32>
    tpu.vector_store %arg6[%644, %c0_169, %c0_170], %647 {strides = array<i32>} : memref<8x8x128xf32, #tpu.memory_space<vmem>>, vector<1x8x128xf32>,
    %648 = arith.index_cast %563 : i32 to index
    %c0_171 = arith.constant 0 : index
    %c0_172 = arith.constant 0 : index
    %649 = vector.load %arg7[%648, %c0_171, %c0_172] : memref<8x8x128xf32, #tpu.memory_space<vmem>>, vector<1x8x128xf32>
    %650 = vector.shape_cast %649 : vector<1x8x128xf32> to vector<8x128xf32>
    %651 = vector.shape_cast %641 : vector<8x128xf32> to vector<1x8x128xf32>
    tpu.vector_store %arg7[%648, %c0_171, %c0_172], %651 {strides = array<i32>} : memref<8x8x128xf32, #tpu.memory_space<vmem>>, vector<1x8x128xf32>,
    %c7_i32_173 = arith.constant 7 : i32
    %c7_i32_174 = arith.constant 7 : i32
    %652 = arith.subi %c7_i32_174, %c7_i32_173 : i32
    %c0_175 = arith.constant 0 : index
    %653 = arith.index_cast %c7_i32_173 : i32 to index
    %c0_176 = arith.constant 0 : index
    %c0_177 = arith.constant 0 : index
    %654 = vector.load %arg1[%c0_175, %653, %c0_176, %c0_177] : memref<1x8x8x512xbf16, #tpu.memory_space<vmem>>, vector<1x1x8x512xbf16>
    %655 = vector.shape_cast %654 : vector<1x1x8x512xbf16> to vector<8x512xbf16>
    %656 = arith.addi %18, %c7_i32_173 : i32
    %657 = arith.truncf %602 : vector<8x128xf32> to vector<8x128xbf16>
    %cst_178 = arith.constant dense<0.000000e+00> : vector<8x512xf32>
    %658 = tpu.matmul %657, %4, %cst_178 {dimension_numbers = #tpu.dot_dimension_numbers<[1], [0], [0], [1], [0, 0, 1, 1], [], []>} : vector<8x128xbf16>, vector<128x512xbf16>, vector<8x512xf32> -> vector<8x512xf32>
    %659 = arith.extf %655 : vector<8x512xbf16> to vector<8x512xf32>
    %660 = arith.addf %658, %659 : vector<8x512xf32>
    %661 = arith.addf %660, %10 : vector<8x512xf32>
    %662 = vector.extract_strided_slice %661 {offsets = [0, 0], sizes = [8, 128], strides = [1, 1]} : vector<8x512xf32> to vector<8x128xf32>
    %663 = arith.negf %662 : vector<8x128xf32>
    %664 = math.exp %663 : vector<8x128xf32>
    %cst_179 = arith.constant 1.000000e+00 : f32
    %665 = vector.broadcast %cst_179 : f32 to vector<8x128xf32>
    %666 = arith.addf %665, %664 : vector<8x128xf32>
    %667 = arith.divf %665, %666 : vector<8x128xf32>
    %668 = vector.extract_strided_slice %661 {offsets = [0, 128], sizes = [8, 128], strides = [1, 1]} : vector<8x512xf32> to vector<8x128xf32>
    %669 = arith.negf %668 : vector<8x128xf32>
    %670 = math.exp %669 : vector<8x128xf32>
    %cst_180 = arith.constant 1.000000e+00 : f32
    %671 = vector.broadcast %cst_180 : f32 to vector<8x128xf32>
    %672 = arith.addf %671, %670 : vector<8x128xf32>
    %673 = arith.divf %671, %672 : vector<8x128xf32>
    %674 = vector.extract_strided_slice %661 {offsets = [0, 256], sizes = [8, 128], strides = [1, 1]} : vector<8x512xf32> to vector<8x128xf32>
    %675 = math.tanh %674 : vector<8x128xf32>
    %676 = vector.extract_strided_slice %661 {offsets = [0, 384], sizes = [8, 128], strides = [1, 1]} : vector<8x512xf32> to vector<8x128xf32>
    %677 = arith.negf %676 : vector<8x128xf32>
    %678 = math.exp %677 : vector<8x128xf32>
    %cst_181 = arith.constant 1.000000e+00 : f32
    %679 = vector.broadcast %cst_181 : f32 to vector<8x128xf32>
    %680 = arith.addf %679, %678 : vector<8x128xf32>
    %681 = arith.divf %679, %680 : vector<8x128xf32>
    %682 = arith.mulf %673, %603 : vector<8x128xf32>
    %683 = arith.mulf %667, %675 : vector<8x128xf32>
    %684 = arith.addf %682, %683 : vector<8x128xf32>
    %685 = math.tanh %684 : vector<8x128xf32>
    %686 = arith.mulf %681, %685 : vector<8x128xf32>
    %687 = vector.broadcast %656 : i32 to vector<8x128xi32>
    %688 = arith.cmpi slt, %687, %17 : vector<8x128xi32>
    %cst_182 = arith.constant 0.000000e+00 : f32
    %689 = vector.broadcast %cst_182 : f32 to vector<8x128xf32>
    %690 = arith.select %688, %686, %689 : vector<8x128xi1>, vector<8x128xf32>
    %691 = arith.select %688, %686, %602 : vector<8x128xi1>, vector<8x128xf32>
    %692 = arith.select %688, %684, %603 : vector<8x128xi1>, vector<8x128xf32>
    %c0_183 = arith.constant 0 : index
    %693 = arith.index_cast %652 : i32 to index
    %c0_184 = arith.constant 0 : index
    %c0_185 = arith.constant 0 : index
    %694 = vector.load %arg2[%c0_183, %693, %c0_184, %c0_185] : memref<1x8x8x512xbf16, #tpu.memory_space<vmem>>, vector<1x1x8x512xbf16>
    %695 = vector.shape_cast %694 : vector<1x1x8x512xbf16> to vector<8x512xbf16>
    %696 = arith.addi %20, %652 : i32
    %697 = arith.truncf %642 : vector<8x128xf32> to vector<8x128xbf16>
    %cst_186 = arith.constant dense<0.000000e+00> : vector<8x512xf32>
    %698 = tpu.matmul %697, %6, %cst_186 {dimension_numbers = #tpu.dot_dimension_numbers<[1], [0], [0], [1], [0, 0, 1, 1], [], []>} : vector<8x128xbf16>, vector<128x512xbf16>, vector<8x512xf32> -> vector<8x512xf32>
    %699 = arith.extf %695 : vector<8x512xbf16> to vector<8x512xf32>
    %700 = arith.addf %698, %699 : vector<8x512xf32>
    %701 = arith.addf %700, %14 : vector<8x512xf32>
    %702 = vector.extract_strided_slice %701 {offsets = [0, 0], sizes = [8, 128], strides = [1, 1]} : vector<8x512xf32> to vector<8x128xf32>
    %703 = arith.negf %702 : vector<8x128xf32>
    %704 = math.exp %703 : vector<8x128xf32>
    %cst_187 = arith.constant 1.000000e+00 : f32
    %705 = vector.broadcast %cst_187 : f32 to vector<8x128xf32>
    %706 = arith.addf %705, %704 : vector<8x128xf32>
    %707 = arith.divf %705, %706 : vector<8x128xf32>
    %708 = vector.extract_strided_slice %701 {offsets = [0, 128], sizes = [8, 128], strides = [1, 1]} : vector<8x512xf32> to vector<8x128xf32>
    %709 = arith.negf %708 : vector<8x128xf32>
    %710 = math.exp %709 : vector<8x128xf32>
    %cst_188 = arith.constant 1.000000e+00 : f32
    %711 = vector.broadcast %cst_188 : f32 to vector<8x128xf32>
    %712 = arith.addf %711, %710 : vector<8x128xf32>
    %713 = arith.divf %711, %712 : vector<8x128xf32>
    %714 = vector.extract_strided_slice %701 {offsets = [0, 256], sizes = [8, 128], strides = [1, 1]} : vector<8x512xf32> to vector<8x128xf32>
    %715 = math.tanh %714 : vector<8x128xf32>
    %716 = vector.extract_strided_slice %701 {offsets = [0, 384], sizes = [8, 128], strides = [1, 1]} : vector<8x512xf32> to vector<8x128xf32>
    %717 = arith.negf %716 : vector<8x128xf32>
    %718 = math.exp %717 : vector<8x128xf32>
    %cst_189 = arith.constant 1.000000e+00 : f32
    %719 = vector.broadcast %cst_189 : f32 to vector<8x128xf32>
    %720 = arith.addf %719, %718 : vector<8x128xf32>
    %721 = arith.divf %719, %720 : vector<8x128xf32>
    %722 = arith.mulf %713, %643 : vector<8x128xf32>
    %723 = arith.mulf %707, %715 : vector<8x128xf32>
    %724 = arith.addf %722, %723 : vector<8x128xf32>
    %725 = math.tanh %724 : vector<8x128xf32>
    %726 = arith.mulf %721, %725 : vector<8x128xf32>
    %727 = vector.broadcast %696 : i32 to vector<8x128xi32>
    %728 = arith.cmpi slt, %727, %17 : vector<8x128xi32>
    %cst_190 = arith.constant 0.000000e+00 : f32
    %729 = vector.broadcast %cst_190 : f32 to vector<8x128xf32>
    %730 = arith.select %728, %726, %729 : vector<8x128xi1>, vector<8x128xf32>
    %731 = arith.select %728, %726, %642 : vector<8x128xi1>, vector<8x128xf32>
    %732 = arith.select %728, %724, %643 : vector<8x128xi1>, vector<8x128xf32>
    %733 = arith.index_cast %c7_i32_173 : i32 to index
    %c0_191 = arith.constant 0 : index
    %c0_192 = arith.constant 0 : index
    %734 = vector.load %arg6[%733, %c0_191, %c0_192] : memref<8x8x128xf32, #tpu.memory_space<vmem>>, vector<1x8x128xf32>
    %735 = vector.shape_cast %734 : vector<1x8x128xf32> to vector<8x128xf32>
    %736 = vector.shape_cast %690 : vector<8x128xf32> to vector<1x8x128xf32>
    tpu.vector_store %arg6[%733, %c0_191, %c0_192], %736 {strides = array<i32>} : memref<8x8x128xf32, #tpu.memory_space<vmem>>, vector<1x8x128xf32>,
    %737 = arith.index_cast %652 : i32 to index
    %c0_193 = arith.constant 0 : index
    %c0_194 = arith.constant 0 : index
    %738 = vector.load %arg7[%737, %c0_193, %c0_194] : memref<8x8x128xf32, #tpu.memory_space<vmem>>, vector<1x8x128xf32>
    %739 = vector.shape_cast %738 : vector<1x8x128xf32> to vector<8x128xf32>
    %740 = vector.shape_cast %730 : vector<8x128xf32> to vector<1x8x128xf32>
    tpu.vector_store %arg7[%737, %c0_193, %c0_194], %740 {strides = array<i32>} : memref<8x8x128xf32, #tpu.memory_space<vmem>>, vector<1x8x128xf32>,
    %c8_i32_195 = arith.constant 8 : i32
    %c0_196 = arith.constant 0 : index
    %c0_197 = arith.constant 0 : index
    %c0_198 = arith.constant 0 : index
    %741 = vector.load %arg10[%c0_196, %c0_197, %c0_198] : memref<2x8x128xf32, #tpu.memory_space<vmem>>, vector<1x8x128xf32>
    %742 = vector.shape_cast %741 : vector<1x8x128xf32> to vector<8x128xf32>
    %743 = vector.shape_cast %691 : vector<8x128xf32> to vector<1x8x128xf32>
    tpu.vector_store %arg10[%c0_196, %c0_197, %c0_198], %743 {strides = array<i32>} : memref<2x8x128xf32, #tpu.memory_space<vmem>>, vector<1x8x128xf32>,
    %c0_199 = arith.constant 0 : index
    %c0_200 = arith.constant 0 : index
    %c0_201 = arith.constant 0 : index
    %744 = vector.load %arg11[%c0_199, %c0_200, %c0_201] : memref<2x8x128xf32, #tpu.memory_space<vmem>>, vector<1x8x128xf32>
    %745 = vector.shape_cast %744 : vector<1x8x128xf32> to vector<8x128xf32>
    %746 = vector.shape_cast %692 : vector<8x128xf32> to vector<1x8x128xf32>
    tpu.vector_store %arg11[%c0_199, %c0_200, %c0_201], %746 {strides = array<i32>} : memref<2x8x128xf32, #tpu.memory_space<vmem>>, vector<1x8x128xf32>,
    %c1_202 = arith.constant 1 : index
    %c0_203 = arith.constant 0 : index
    %c0_204 = arith.constant 0 : index
    %747 = vector.load %arg10[%c1_202, %c0_203, %c0_204] : memref<2x8x128xf32, #tpu.memory_space<vmem>>, vector<1x8x128xf32>
    %748 = vector.shape_cast %747 : vector<1x8x128xf32> to vector<8x128xf32>
    %749 = vector.shape_cast %731 : vector<8x128xf32> to vector<1x8x128xf32>
    tpu.vector_store %arg10[%c1_202, %c0_203, %c0_204], %749 {strides = array<i32>} : memref<2x8x128xf32, #tpu.memory_space<vmem>>, vector<1x8x128xf32>,
    %c1_205 = arith.constant 1 : index
    %c0_206 = arith.constant 0 : index
    %c0_207 = arith.constant 0 : index
    %750 = vector.load %arg11[%c1_205, %c0_206, %c0_207] : memref<2x8x128xf32, #tpu.memory_space<vmem>>, vector<1x8x128xf32>
    %751 = vector.shape_cast %750 : vector<1x8x128xf32> to vector<8x128xf32>
    %752 = vector.shape_cast %732 : vector<8x128xf32> to vector<1x8x128xf32>
    tpu.vector_store %arg11[%c1_205, %c0_206, %c0_207], %752 {strides = array<i32>} : memref<2x8x128xf32, #tpu.memory_space<vmem>>, vector<1x8x128xf32>,
    %c3_i32_208 = arith.constant 3 : i32
    %753 = arith.cmpi eq, %arg0, %c3_i32_208 : i32
    %754 = arith.extui %753 : i1 to i32
    %c0_i32_209 = arith.constant 0 : i32
    %755 = arith.cmpi ne, %754, %c0_i32_209 : i32
    scf.if %755 {
      %c0_210 = arith.constant 0 : index
      %c0_211 = arith.constant 0 : index
      %c0_212 = arith.constant 0 : index
      %756 = vector.load %arg8[%c0_210, %c0_211, %c0_212] : memref<2x8x128xf32, #tpu.memory_space<vmem>>, vector<1x8x128xf32>
      %757 = vector.shape_cast %756 : vector<1x8x128xf32> to vector<8x128xf32>
      %758 = vector.shape_cast %691 : vector<8x128xf32> to vector<1x8x128xf32>
      tpu.vector_store %arg8[%c0_210, %c0_211, %c0_212], %758 {strides = array<i32>} : memref<2x8x128xf32, #tpu.memory_space<vmem>>, vector<1x8x128xf32>,
      %c1_213 = arith.constant 1 : index
      %c0_214 = arith.constant 0 : index
      %c0_215 = arith.constant 0 : index
      %759 = vector.load %arg8[%c1_213, %c0_214, %c0_215] : memref<2x8x128xf32, #tpu.memory_space<vmem>>, vector<1x8x128xf32>
      %760 = vector.shape_cast %759 : vector<1x8x128xf32> to vector<8x128xf32>
      %761 = vector.shape_cast %731 : vector<8x128xf32> to vector<1x8x128xf32>
      tpu.vector_store %arg8[%c1_213, %c0_214, %c0_215], %761 {strides = array<i32>} : memref<2x8x128xf32, #tpu.memory_space<vmem>>, vector<1x8x128xf32>,
      %c0_216 = arith.constant 0 : index
      %c0_217 = arith.constant 0 : index
      %c0_218 = arith.constant 0 : index
      %762 = vector.load %arg9[%c0_216, %c0_217, %c0_218] : memref<2x8x128xf32, #tpu.memory_space<vmem>>, vector<1x8x128xf32>
      %763 = vector.shape_cast %762 : vector<1x8x128xf32> to vector<8x128xf32>
      %764 = vector.shape_cast %692 : vector<8x128xf32> to vector<1x8x128xf32>
      tpu.vector_store %arg9[%c0_216, %c0_217, %c0_218], %764 {strides = array<i32>} : memref<2x8x128xf32, #tpu.memory_space<vmem>>, vector<1x8x128xf32>,
      %c1_219 = arith.constant 1 : index
      %c0_220 = arith.constant 0 : index
      %c0_221 = arith.constant 0 : index
      %765 = vector.load %arg9[%c1_219, %c0_220, %c0_221] : memref<2x8x128xf32, #tpu.memory_space<vmem>>, vector<1x8x128xf32>
      %766 = vector.shape_cast %765 : vector<1x8x128xf32> to vector<8x128xf32>
      %767 = vector.shape_cast %732 : vector<8x128xf32> to vector<1x8x128xf32>
      tpu.vector_store %arg9[%c1_219, %c0_220, %c0_221], %767 {strides = array<i32>} : memref<2x8x128xf32, #tpu.memory_space<vmem>>, vector<1x8x128xf32>,
    } else {
    }
    return
  }
  func.func @transform_0(%arg0: i32) -> (i32, i32, i32, i32) {
    %c0_i32 = arith.constant 0 : i32
    %c0_i32_0 = arith.constant 0 : i32
    %c0_i32_1 = arith.constant 0 : i32
    %c0_i32_2 = arith.constant 0 : i32
    return %c0_i32, %arg0, %c0_i32_0, %c0_i32_1 : i32, i32, i32, i32
  }
  func.func @transform_1(%arg0: i32) -> (i32, i32, i32, i32) {
    %c3_i32 = arith.constant 3 : i32
    %0 = arith.subi %c3_i32, %arg0 : i32
    %c1_i32 = arith.constant 1 : i32
    %c0_i32 = arith.constant 0 : i32
    %c0_i32_0 = arith.constant 0 : i32
    %c0_i32_1 = arith.constant 0 : i32
    return %c1_i32, %0, %c0_i32, %c0_i32_0 : i32, i32, i32, i32
  }
  func.func @transform_2(%arg0: i32) -> (i32, i32, i32) {
    %c0_i32 = arith.constant 0 : i32
    %c0_i32_0 = arith.constant 0 : i32
    %c0_i32_1 = arith.constant 0 : i32
    %c0_i32_2 = arith.constant 0 : i32
    return %c0_i32, %c0_i32_0, %c0_i32_1 : i32, i32, i32
  }
  func.func @transform_3(%arg0: i32) -> (i32, i32, i32) {
    %c0_i32 = arith.constant 0 : i32
    %c0_i32_0 = arith.constant 0 : i32
    %c0_i32_1 = arith.constant 0 : i32
    %c0_i32_2 = arith.constant 0 : i32
    return %c0_i32, %c0_i32_0, %c0_i32_1 : i32, i32, i32
  }
  func.func @transform_4(%arg0: i32) -> (i32, i32) {
    %c0_i32 = arith.constant 0 : i32
    %c0_i32_0 = arith.constant 0 : i32
    %c0_i32_1 = arith.constant 0 : i32
    return %c0_i32, %c0_i32_0 : i32, i32
  }
  func.func @transform_5(%arg0: i32) -> (i32, i32, i32) {
    %c0_i32 = arith.constant 0 : i32
    %c0_i32_0 = arith.constant 0 : i32
    %c0_i32_1 = arith.constant 0 : i32
    return %arg0, %c0_i32, %c0_i32_0 : i32, i32, i32
  }
  func.func @transform_6(%arg0: i32) -> (i32, i32, i32) {
    %c3_i32 = arith.constant 3 : i32
    %0 = arith.subi %c3_i32, %arg0 : i32
    %c0_i32 = arith.constant 0 : i32
    %c0_i32_0 = arith.constant 0 : i32
    %c0_i32_1 = arith.constant 0 : i32
    return %0, %c0_i32, %c0_i32_0 : i32, i32, i32
  }
  func.func @transform_7(%arg0: i32) -> (i32, i32, i32) {
    %c0_i32 = arith.constant 0 : i32
    %c0_i32_0 = arith.constant 0 : i32
    %c0_i32_1 = arith.constant 0 : i32
    %c0_i32_2 = arith.constant 0 : i32
    return %c0_i32, %c0_i32_0, %c0_i32_1 : i32, i32, i32
  }
  func.func @transform_8(%arg0: i32) -> (i32, i32, i32) {
    %c0_i32 = arith.constant 0 : i32
    %c0_i32_0 = arith.constant 0 : i32
    %c0_i32_1 = arith.constant 0 : i32
    %c0_i32_2 = arith.constant 0 : i32
    return %c0_i32, %c0_i32_0, %c0_i32_1 : i32, i32, i32
  }
}

</mosaic_0001>

<llo_original>
// kernel: _bilstm_device.1
$region0: #{_bilstm_device.1}
  #allocation0 [shape = 'u32[]', space=smem, size = 0x4, offset = 0x4, fixed_abs, tag = 'smem constant byte address 0x4 - core index']
  #allocation1 [shape = 'u32[72,128]{1,0:T(1,128)}', space=vmem, size = 0x9000, scoped, tag = 'internal scratch']
  #allocation2 [shape = 'f32[2,8,128]{2,1,0:T(8,128)}', space=vmem, size = 0x2000, scoped, tag = 'scratch operand']
  #allocation3 [shape = 'f32[2,8,128]{2,1,0:T(8,128)}', space=vmem, size = 0x2000, scoped, tag = 'scratch operand']
  %s0 = inlined_call_operand.vmem [shape: bf16[2,32,8,512], index: 0, kind: input, shape index: {}, may-alias: {0,1}]
  %s1 = inlined_call_operand.vmem [shape: bf16[2,32,8,512], index: 1, kind: input, shape index: {}, may-alias: {0,1}]
  %s2 = inlined_call_operand.vmem [shape: bf16[2,128,512], index: 2, kind: input, shape index: {}]
  %s3 = inlined_call_operand.vmem [shape: f32[2,1,512], index: 3, kind: input, shape index: {}]
  %s4 = inlined_call_operand.vmem [shape: s32[8,1], index: 4, kind: input, shape index: {}]
  %s5 = inlined_call_operand.vmem [shape: f32[32,8,128], index: 5, kind: output, shape index: {0}]
  %s6 = inlined_call_operand.vmem [shape: f32[32,8,128], index: 6, kind: output, shape index: {1}]
  %s7 = inlined_call_operand.vmem [shape: f32[2,8,128], index: 7, kind: output, shape index: {2}]
  %s8 = inlined_call_operand.vmem [shape: f32[2,8,128], index: 8, kind: output, shape index: {3}]
  %9 = xla_tuple %s5, %s6, %s7, %s8
  %s10 = sld [smem:[#allocation0]]
  $region85: #{_bilstm_device.1} parent=0
    _
  %s12 = ssub.s32 1, %s10
  %s13 = scalar_select 0, %s12, %s10
  loop: start=0, step=1, limit=6
  $region2: #{_bilstm_device.1} parent=0 // loop_pre_header
    _
  $region3: #{_bilstm_device.1} parent=0 // loop_header
    %s15 = sphi 0, %s19
    %p16 = scmp.ge.s32.totalorder %s15, 6
    %s25 = sphi 0, %s27
    %s28 = sphi 0, %s25
    %s29 = sphi 0, %s28
    %s45 = sphi 0, %s29
    %s53 = sphi 0, %s55
    %s56 = sphi 0, %s53
    %s57 = sphi 0, %s56
    %s73 = sphi 0, %s57
    %s77 = sphi 0, %s77
    %s79 = sphi 0, %s77
    %s80 = sphi 0, %s79
    %s94 = sphi 0, %s80
    %s98 = sphi 0, %s98
    %s100 = sphi 0, %s98
    %s101 = sphi 0, %s100
    %s115 = sphi 0, %s101
    %s119 = sphi 0, %s119
    %s121 = sphi 0, %s119
    %s122 = sphi 0, %s121
    %s136 = sphi 0, %s122
    %s142 = sphi 0, %s144
    %s145 = sphi 0, %s142
    %s146 = sphi 0, %s145
    %s162 = sphi 0, %s146
    %s170 = sphi 0, %s172
    %s173 = sphi 0, %s170
    %s174 = sphi 0, %s173
    %s190 = sphi 0, %s174
    %s194 = sphi 0, %s194
    %s196 = sphi 0, %s194
    %s197 = sphi 0, %s196
    %s211 = sphi 0, %s197
    %s215 = sphi 0, %s215
    %s217 = sphi 0, %s215
    %s218 = sphi 0, %s217
    %s232 = sphi 0, %s218
  $region4: #{_bilstm_device.1} parent=0 // loop_header_branch
    %18 = sbr.rel (%p16) target = $region8
  $region5: #{_bilstm_device.1} parent=0 // loop_body
    %s20 = ssub.s32 %s15, 1
    %s21 = ssub.s32 %s15, 2
    %s22 = sadd.s32 %s15, 1
    %s23 = ssub.s32 %s15, %s22
    %p24 = scmp.eq.s32.totalorder %s23, 0
    %s26 = sadd.s32 %s25, 1
    %s27 = scalar_select %p24, %s25, %s26
    %p30 = pneg %p24
    %p31 = scmp.eq.s32.totalorder %s15, 3
    %p32 = por %p30, %p31
    %p33 = scmp.ne.s32.totalorder %s25, %s28
    %p34 = scmp.eq.s32.totalorder %s15, 0
    %p35 = por %p33, %p34
    %p36 = scmp.ne.s32.totalorder %s25, %s28
    %p37 = scmp.eq.s32.totalorder %s20, 3
    %p38 = por %p36, %p37
    %p39 = scmp.ne.s32.totalorder %s28, %s29
    %p40 = scmp.eq.s32.totalorder %s20, 0
    %p41 = por %p39, %p40
    %p42 = scmp.ne.s32.totalorder %s28, %s29
    %p43 = scmp.eq.s32.totalorder %s21, 3
    %p44 = por %p42, %p43
    %p46 = scmp.ne.s32.totalorder %s29, %s45
    %p47 = scmp.eq.s32.totalorder %s21, 0
    %p48 = por %p46, %p47
    %s49 = ssub.s32 3, %s15
    %s50 = ssub.s32 3, %s22
    %s51 = ssub.s32 %s49, %s50
    %p52 = scmp.eq.s32.totalorder %s51, 0
    %s54 = sadd.s32 %s53, 1
    %s55 = scalar_select %p52, %s53, %s54
    %p58 = pneg %p52
    %p59 = scmp.eq.s32.totalorder %s15, 3
    %p60 = por %p58, %p59
    %p61 = scmp.ne.s32.totalorder %s53, %s56
    %p62 = scmp.eq.s32.totalorder %s15, 0
    %p63 = por %p61, %p62
    %p64 = scmp.ne.s32.totalorder %s53, %s56
    %p65 = scmp.eq.s32.totalorder %s20, 3
    %p66 = por %p64, %p65
    %p67 = scmp.ne.s32.totalorder %s56, %s57
    %p68 = scmp.eq.s32.totalorder %s20, 0
    %p69 = por %p67, %p68
    %p70 = scmp.ne.s32.totalorder %s56, %s57
    %p71 = scmp.eq.s32.totalorder %s21, 3
    %p72 = por %p70, %p71
    %p74 = scmp.ne.s32.totalorder %s57, %s73
    %p75 = scmp.eq.s32.totalorder %s21, 0
    %p76 = por %p74, %p75
    %s78 = sadd.s32 %s77, 1
    %p81 = scmp.eq.s32.totalorder %s15, 3
    %p82 = scmp.ne.s32.totalorder %s77, %s79
    %p83 = scmp.eq.s32.totalorder %s15, 0
    %p84 = por %p82, %p83
    %p85 = scmp.ne.s32.totalorder %s77, %s79
    %p86 = scmp.eq.s32.totalorder %s20, 3
    %p87 = por %p85, %p86
    %p88 = scmp.ne.s32.totalorder %s79, %s80
    %p89 = scmp.eq.s32.totalorder %s20, 0
    %p90 = por %p88, %p89
    %p91 = scmp.ne.s32.totalorder %s79, %s80
    %p92 = scmp.eq.s32.totalorder %s21, 3
    %p93 = por %p91, %p92
    %p95 = scmp.ne.s32.totalorder %s80, %s94
    %p96 = scmp.eq.s32.totalorder %s21, 0
    %p97 = por %p95, %p96
    %s99 = sadd.s32 %s98, 1
    %p102 = scmp.eq.s32.totalorder %s15, 3
    %p103 = scmp.ne.s32.totalorder %s98, %s100
    %p104 = scmp.eq.s32.totalorder %s15, 0
    %p105 = por %p103, %p104
    %p106 = scmp.ne.s32.totalorder %s98, %s100
    %p107 = scmp.eq.s32.totalorder %s20, 3
    %p108 = por %p106, %p107
    %p109 = scmp.ne.s32.totalorder %s100, %s101
    %p110 = scmp.eq.s32.totalorder %s20, 0
    %p111 = por %p109, %p110
    %p112 = scmp.ne.s32.totalorder %s100, %s101
    %p113 = scmp.eq.s32.totalorder %s21, 3
    %p114 = por %p112, %p113
    %p116 = scmp.ne.s32.totalorder %s101, %s115
    %p117 = scmp.eq.s32.totalorder %s21, 0
    %p118 = por %p116, %p117
    %s120 = sadd.s32 %s119, 1
    %p123 = scmp.eq.s32.totalorder %s15, 3
    %p124 = scmp.ne.s32.totalorder %s119, %s121
    %p125 = scmp.eq.s32.totalorder %s15, 0
    %p126 = por %p124, %p125
    %p127 = scmp.ne.s32.totalorder %s119, %s121
    %p128 = scmp.eq.s32.totalorder %s20, 3
    %p129 = por %p127, %p128
    %p130 = scmp.ne.s32.totalorder %s121, %s122
    %p131 = scmp.eq.s32.totalorder %s20, 0
    %p132 = por %p130, %p131
    %p133 = scmp.ne.s32.totalorder %s121, %s122
    %p134 = scmp.eq.s32.totalorder %s21, 3
    %p135 = por %p133, %p134
    %p137 = scmp.ne.s32.totalorder %s122, %s136
    %p138 = scmp.eq.s32.totalorder %s21, 0
    %p139 = por %p137, %p138
    %s140 = ssub.s32 %s15, %s22
    %p141 = scmp.eq.s32.totalorder %s140, 0
    %s143 = sadd.s32 %s142, 1
    %s144 = scalar_select %p141, %s142, %s143
    %p147 = pneg %p141
    %p148 = scmp.eq.s32.totalorder %s15, 3
    %p149 = por %p147, %p148
    %p150 = scmp.ne.s32.totalorder %s142, %s145
    %p151 = scmp.eq.s32.totalorder %s15, 0
    %p152 = por %p150, %p151
    %p153 = scmp.ne.s32.totalorder %s142, %s145
    %p154 = scmp.eq.s32.totalorder %s20, 3
    %p155 = por %p153, %p154
    %p156 = scmp.ne.s32.totalorder %s145, %s146
    %p157 = scmp.eq.s32.totalorder %s20, 0
    %p158 = por %p156, %p157
    %p159 = scmp.ne.s32.totalorder %s145, %s146
    %p160 = scmp.eq.s32.totalorder %s21, 3
    %p161 = por %p159, %p160
    %p163 = scmp.ne.s32.totalorder %s146, %s162
    %p164 = scmp.eq.s32.totalorder %s21, 0
    %p165 = por %p163, %p164
    %s166 = ssub.s32 3, %s15
    %s167 = ssub.s32 3, %s22
    %s168 = ssub.s32 %s166, %s167
    %p169 = scmp.eq.s32.totalorder %s168, 0
    %s171 = sadd.s32 %s170, 1
    %s172 = scalar_select %p169, %s170, %s171
    %p175 = pneg %p169
    %p176 = scmp.eq.s32.totalorder %s15, 3
    %p177 = por %p175, %p176
    %p178 = scmp.ne.s32.totalorder %s170, %s173
    %p179 = scmp.eq.s32.totalorder %s15, 0
    %p180 = por %p178, %p179
    %p181 = scmp.ne.s32.totalorder %s170, %s173
    %p182 = scmp.eq.s32.totalorder %s20, 3
    %p183 = por %p181, %p182
    %p184 = scmp.ne.s32.totalorder %s173, %s174
    %p185 = scmp.eq.s32.totalorder %s20, 0
    %p186 = por %p184, %p185
    %p187 = scmp.ne.s32.totalorder %s173, %s174
    %p188 = scmp.eq.s32.totalorder %s21, 3
    %p189 = por %p187, %p188
    %p191 = scmp.ne.s32.totalorder %s174, %s190
    %p192 = scmp.eq.s32.totalorder %s21, 0
    %p193 = por %p191, %p192
    %s195 = sadd.s32 %s194, 1
    %p198 = scmp.eq.s32.totalorder %s15, 3
    %p199 = scmp.ne.s32.totalorder %s194, %s196
    %p200 = scmp.eq.s32.totalorder %s15, 0
    %p201 = por %p199, %p200
    %p202 = scmp.ne.s32.totalorder %s194, %s196
    %p203 = scmp.eq.s32.totalorder %s20, 3
    %p204 = por %p202, %p203
    %p205 = scmp.ne.s32.totalorder %s196, %s197
    %p206 = scmp.eq.s32.totalorder %s20, 0
    %p207 = por %p205, %p206
    %p208 = scmp.ne.s32.totalorder %s196, %s197
    %p209 = scmp.eq.s32.totalorder %s21, 3
    %p210 = por %p208, %p209
    %p212 = scmp.ne.s32.totalorder %s197, %s211
    %p213 = scmp.eq.s32.totalorder %s21, 0
    %p214 = por %p212, %p213
    %s216 = sadd.s32 %s215, 1
    %p219 = scmp.eq.s32.totalorder %s15, 3
    %p220 = scmp.ne.s32.totalorder %s215, %s217
    %p221 = scmp.eq.s32.totalorder %s15, 0
    %p222 = por %p220, %p221
    %p223 = scmp.ne.s32.totalorder %s215, %s217
    %p224 = scmp.eq.s32.totalorder %s20, 3
    %p225 = por %p223, %p224
    %p226 = scmp.ne.s32.totalorder %s217, %s218
    %p227 = scmp.eq.s32.totalorder %s20, 0
    %p228 = por %p226, %p227
    %p229 = scmp.ne.s32.totalorder %s217, %s218
    %p230 = scmp.eq.s32.totalorder %s21, 3
    %p231 = por %p229, %p230
    %p233 = scmp.ne.s32.totalorder %s218, %s232
    %p234 = scmp.eq.s32.totalorder %s21, 0
    %p235 = por %p233, %p234
    %p236 = scmp.le.s32.totalorder 1, %s15
    %p237 = scmp.lt.s32.totalorder %s15, 5
    %p238 = pnand %p236, %p237
    %p239 = pneg %p238
    // Predicated region
    $region9: #{_bilstm_device.1} parent=5 // pred_check
      _
    $region10: #{_bilstm_device.1} parent=5 // pred_check_branch
      %241 = sbr.rel (%p238) target = $region12
    $region11: #{_bilstm_device.1} parent=5 // pred_region
      %s242 = ssub.s32 %s15, 1
      // Predicated region
      $region13: #{_bilstm_device.1} parent=11 // pred_check
        %p243 = pneg %p90
      $region14: #{_bilstm_device.1} parent=11 // pred_check_branch
        %245 = sbr.rel (%p243) target = $region16
      $region15: #{_bilstm_device.1} parent=11 // pred_region
        _
      $region16: #{_bilstm_device.1} parent=11 // pred_fallthru
        _
      // Predicated region
      $region17: #{_bilstm_device.1} parent=11 // pred_check
        %p246 = pneg %p111
      $region18: #{_bilstm_device.1} parent=11 // pred_check_branch
        %248 = sbr.rel (%p246) target = $region20
      $region19: #{_bilstm_device.1} parent=11 // pred_region
        _
      $region20: #{_bilstm_device.1} parent=11 // pred_fallthru
        _
      // Predicated region
      $region21: #{_bilstm_device.1} parent=11 // pred_check
        %p249 = pneg %p132
      $region22: #{_bilstm_device.1} parent=11 // pred_check_branch
        %251 = sbr.rel (%p249) target = $region24
      $region23: #{_bilstm_device.1} parent=11 // pred_region
        _
      $region24: #{_bilstm_device.1} parent=11 // pred_fallthru
        _
    $region12: #{_bilstm_device.1} parent=5 // pred_fallthru
      _
    %p252 = scmp.lt.s32.totalorder %s15, 4
    // Predicated region
    $region25: #{_bilstm_device.1} parent=5 // pred_check
      %p253 = pneg %p252
    $region26: #{_bilstm_device.1} parent=5 // pred_check_branch
      %255 = sbr.rel (%p253) target = $region28
    $region27: #{_bilstm_device.1} parent=5 // pred_region
      // Predicated region
      $region29: #{_bilstm_device.1} parent=27 // pred_check
        %p256 = pneg %p35
      $region30: #{_bilstm_device.1} parent=27 // pred_check_branch
        %258 = sbr.rel (%p256) target = $region32
      $region31: #{_bilstm_device.1} parent=27 // pred_region
        %s259 = smul.u32 8, %s15
        %p260 = scmp.lt.s32.totalorder %s259, 31
        %s261 = scalar_select %p260, %s259, 31
        %s262 = smul.addr %s261, 4
        %s263 = smul.addr %s262, 4
        %s264 = scalar_lea.vmem %s0, %s263
        %s265 = smul.u32 8, %s15
      $region32: #{_bilstm_device.1} parent=27 // pred_fallthru
        _
      // Predicated region
      $region33: #{_bilstm_device.1} parent=27 // pred_check
        %p266 = pneg %p63
      $region34: #{_bilstm_device.1} parent=27 // pred_check_branch
        %268 = sbr.rel (%p266) target = $region36
      $region35: #{_bilstm_device.1} parent=27 // pred_region
        %s269 = ssub.s32 3, %s15
        %s270 = smul.u32 8, %s269
        %p271 = scmp.lt.s32.totalorder %s270, 31
        %s272 = scalar_select %p271, %s270, 31
        %s273 = smul.addr %s272, 4
        %s274 = sadd.s32 %s273, 128
        %s275 = smul.addr %s274, 4
        %s276 = scalar_lea.vmem %s1, %s275
        %s277 = ssub.s32 3, %s15
        %s278 = smul.u32 8, %s277
      $region36: #{_bilstm_device.1} parent=27 // pred_fallthru
        _
    $region28: #{_bilstm_device.1} parent=5 // pred_fallthru
      _
    %p279 = scmp.le.s32.totalorder 1, %s15
    %p280 = scmp.lt.s32.totalorder %s15, 5
    %p281 = pnand %p279, %p280
    %p282 = pneg %p281
    // Predicated region
    $region37: #{_bilstm_device.1} parent=5 // pred_check
      _
    $region38: #{_bilstm_device.1} parent=5 // pred_check_branch
      %284 = sbr.rel (%p281) target = $region40
    $region39: #{_bilstm_device.1} parent=5 // pred_region
      %s285 = ssub.s32 %s15, 1
      %s286 = smul.u32 8, %s20
      %p287 = scmp.lt.s32.totalorder %s286, 31
      %s288 = scalar_select %p287, %s286, 31
      %s289 = smul.addr %s288, 4
      %s290 = smul.addr %s289, 4
      %s291 = scalar_lea.vmem %s0, %s290
      %p292 = pneg %p41
      %p293 = pneg %p38
      %s294 = ssub.s32 3, %s20
      %s295 = smul.u32 8, %s294
      %p296 = scmp.lt.s32.totalorder %s295, 31
      %s297 = scalar_select %p296, %s295, 31
      %s298 = smul.addr %s297, 4
      %s299 = sadd.s32 %s298, 128
      %s300 = smul.addr %s299, 4
      %s301 = scalar_lea.vmem %s1, %s300
      %p302 = pneg %p69
      %p303 = pneg %p66
      %p304 = pneg %p90
      %p305 = pneg %p87
      %p306 = pneg %p111
      %p307 = pneg %p108
      %p308 = pneg %p132
      %p309 = pneg %p129
      %p310 = pneg %p158
      %p311 = pneg %p155
      %s312 = smul.u32 8, %s20
      %p313 = scmp.lt.s32.totalorder %s312, 31
      %s314 = scalar_select %p313, %s312, 31
      %s315 = smul.addr %s314, 8
      %s316 = scalar_lea.vmem %s5, %s315
      %p317 = pneg %p186
      %p318 = pneg %p183
      %s319 = ssub.s32 3, %s20
      %s320 = smul.u32 8, %s319
      %p321 = scmp.lt.s32.totalorder %s320, 31
      %s322 = scalar_select %p321, %s320, 31
      %s323 = smul.addr %s322, 8
      %s324 = scalar_lea.vmem %s6, %s323
      %p325 = pneg %p207
      %p326 = pneg %p204
      %p327 = pneg %p228
      %p328 = pneg %p225
      %s329 = smul.u32 8, %s20
      %p330 = scmp.lt.s32.totalorder %s329, 31
      %s331 = scalar_select %p330, %s329, 31
      %s332 = smul.addr %s331, 4
      %s333 = smul.addr %s332, 4
      %s334 = scalar_lea.vmem %s0, %s333
      %s335 = smul.u32 8, %s20
      %s336 = ssub.s32 3, %s20
      %s337 = smul.u32 8, %s336
      %p338 = scmp.lt.s32.totalorder %s337, 31
      %s339 = scalar_select %p338, %s337, 31
      %s340 = smul.addr %s339, 4
      %s341 = sadd.s32 %s340, 128
      %s342 = smul.addr %s341, 4
      %s343 = scalar_lea.vmem %s1, %s342
      %s344 = ssub.s32 3, %s20
      %s345 = smul.u32 8, %s344
      %s346 = smul.u32 8, %s20
      %p347 = scmp.lt.s32.totalorder %s346, 31
      %s348 = scalar_select %p347, %s346, 31
      %s349 = smul.addr %s348, 8
      %s350 = scalar_lea.vmem %s5, %s349
      %s351 = smul.u32 8, %s20
      %s352 = ssub.s32 3, %s20
      %s353 = smul.u32 8, %s352
      %p354 = scmp.lt.s32.totalorder %s353, 31
      %s355 = scalar_select %p354, %s353, 31
      %s356 = smul.addr %s355, 8
      %s357 = scalar_lea.vmem %s6, %s356
      %s358 = ssub.s32 3, %s20
      %s359 = smul.u32 8, %s358
      %p360 = scmp.eq.s32.totalorder %s20, 0
      // Predicated region
      $region41: #{_bilstm_device.1} parent=39 // pred_check
        %p361 = pneg %p360
      $region42: #{_bilstm_device.1} parent=39 // pred_check_branch
        %363 = sbr.rel (%p361) target = $region44
      $region43: #{_bilstm_device.1} parent=39 // pred_region
        %364 = vst [vmem:[#allocation2] sm:$0xff] 0.0
        %365 = vst [vmem:[#allocation2 + $0x8] sm:$0xff] 0.0
        %366 = vst [vmem:[#allocation3] sm:$0xff] 0.0
        %367 = vst [vmem:[#allocation3 + $0x8] sm:$0xff] 0.0
      $region44: #{_bilstm_device.1} parent=39 // pred_fallthru
        _
      %v368 = vld [vmem:[%s2] sm:$0xff]
      %v369 = vld [vmem:[%s2 + $0x8] sm:$0xff]
      %v370 = vld [vmem:[%s2 + $0x10] sm:$0xff]
      %v371 = vld [vmem:[%s2 + $0x18] sm:$0xff]
      %v372 = vld [vmem:[%s2 + $0x20] sm:$0xff]
      %v373 = vld [vmem:[%s2 + $0x28] sm:$0xff]
      %v374 = vld [vmem:[%s2 + $0x30] sm:$0xff]
      %v375 = vld [vmem:[%s2 + $0x38] sm:$0xff]
      %v376 = vld [vmem:[%s2 + $0x40] sm:$0xff]
      %v377 = vld [vmem:[%s2 + $0x48] sm:$0xff]
      %v378 = vld [vmem:[%s2 + $0x50] sm:$0xff]
      %v379 = vld [vmem:[%s2 + $0x58] sm:$0xff]
      %v380 = vld [vmem:[%s2 + $0x60] sm:$0xff]
      %v381 = vld [vmem:[%s2 + $0x68] sm:$0xff]
      %v382 = vld [vmem:[%s2 + $0x70] sm:$0xff]
      %v383 = vld [vmem:[%s2 + $0x78] sm:$0xff]
      %v384 = vld [vmem:[%s2 + $0x80] sm:$0xff]
      %v385 = vld [vmem:[%s2 + $0x88] sm:$0xff]
      %v386 = vld [vmem:[%s2 + $0x90] sm:$0xff]
      %v387 = vld [vmem:[%s2 + $0x98] sm:$0xff]
      %v388 = vld [vmem:[%s2 + $0xa0] sm:$0xff]
      %v389 = vld [vmem:[%s2 + $0xa8] sm:$0xff]
      %v390 = vld [vmem:[%s2 + $0xb0] sm:$0xff]
      %v391 = vld [vmem:[%s2 + $0xb8] sm:$0xff]
      %v392 = vld [vmem:[%s2 + $0xc0] sm:$0xff]
      %v393 = vld [vmem:[%s2 + $0xc8] sm:$0xff]
      %v394 = vld [vmem:[%s2 + $0xd0] sm:$0xff]
      %v395 = vld [vmem:[%s2 + $0xd8] sm:$0xff]
      %v396 = vld [vmem:[%s2 + $0xe0] sm:$0xff]
      %v397 = vld [vmem:[%s2 + $0xe8] sm:$0xff]
      %v398 = vld [vmem:[%s2 + $0xf0] sm:$0xff]
      %v399 = vld [vmem:[%s2 + $0xf8] sm:$0xff]
      %s400 = scalar_lea.vmem %s2, 256
      %v401 = vld [vmem:[%s400] sm:$0xff]
      %v402 = vld [vmem:[%s400 + $0x8] sm:$0xff]
      %v403 = vld [vmem:[%s400 + $0x10] sm:$0xff]
      %v404 = vld [vmem:[%s400 + $0x18] sm:$0xff]
      %v405 = vld [vmem:[%s400 + $0x20] sm:$0xff]
      %v406 = vld [vmem:[%s400 + $0x28] sm:$0xff]
      %v407 = vld [vmem:[%s400 + $0x30] sm:$0xff]
      %v408 = vld [vmem:[%s400 + $0x38] sm:$0xff]
      %v409 = vld [vmem:[%s400 + $0x40] sm:$0xff]
      %v410 = vld [vmem:[%s400 + $0x48] sm:$0xff]
      %v411 = vld [vmem:[%s400 + $0x50] sm:$0xff]
      %v412 = vld [vmem:[%s400 + $0x58] sm:$0xff]
      %v413 = vld [vmem:[%s400 + $0x60] sm:$0xff]
      %v414 = vld [vmem:[%s400 + $0x68] sm:$0xff]
      %v415 = vld [vmem:[%s400 + $0x70] sm:$0xff]
      %v416 = vld [vmem:[%s400 + $0x78] sm:$0xff]
      %v417 = vld [vmem:[%s400 + $0x80] sm:$0xff]
      %v418 = vld [vmem:[%s400 + $0x88] sm:$0xff]
      %v419 = vld [vmem:[%s400 + $0x90] sm:$0xff]
      %v420 = vld [vmem:[%s400 + $0x98] sm:$0xff]
      %v421 = vld [vmem:[%s400 + $0xa0] sm:$0xff]
      %v422 = vld [vmem:[%s400 + $0xa8] sm:$0xff]
      %v423 = vld [vmem:[%s400 + $0xb0] sm:$0xff]
      %v424 = vld [vmem:[%s400 + $0xb8] sm:$0xff]
      %v425 = vld [vmem:[%s400 + $0xc0] sm:$0xff]
      %v426 = vld [vmem:[%s400 + $0xc8] sm:$0xff]
      %v427 = vld [vmem:[%s400 + $0xd0] sm:$0xff]
      %v428 = vld [vmem:[%s400 + $0xd8] sm:$0xff]
      %v429 = vld [vmem:[%s400 + $0xe0] sm:$0xff]
      %v430 = vld [vmem:[%s400 + $0xe8] sm:$0xff]
      %v431 = vld [vmem:[%s400 + $0xf0] sm:$0xff]
      %v432 = vld [vmem:[%s400 + $0xf8] sm:$0xff]
      %v433 = vld [vmem:[%s3] sm:$0xf]
      %v435 = vperm.slane %v433, 0
      %v436 = vperm.slane %v433, 1
      %v437 = vperm.slane %v433, 2
      %v438 = vperm.slane %v433, 3
      %s443 = scalar_lea.vmem %s3, 4
      %v444 = vld [vmem:[%s443] sm:$0xf]
      %v446 = vperm.slane %v444, 0
      %v447 = vperm.slane %v444, 1
      %v448 = vperm.slane %v444, 2
      %v449 = vperm.slane %v444, 3
      %v454 = vld [vmem:[%s4] sm:$0xff]
      %455 = vset.pattern.permute.xlu0 0
      %456 = vperm.xlu0 %455, %v454
      %v457 = vpop.permute.xlu0 %456
      %s458 = smul.u32 %s20, 8
      %s459 = ssub.s32 3, %s20
      %s460 = smul.u32 %s459, 8
      %v461 = vld [vmem:[#allocation2] sm:$0xff]
      %v462 = vld [vmem:[#allocation3] sm:$0xff]
      %s463 = scalar_lea.vmem [#allocation2], 8
      %v464 = vld [vmem:[%s463] sm:$0xff]
      %s465 = scalar_lea.vmem [#allocation3], 8
      %v466 = vld [vmem:[%s465] sm:$0xff]
      %v467 = vld [vmem:[%s334] sm:$0xff]
      %v468 = vld [vmem:[%s334 + $0x8] sm:$0xff]
      %v469 = vpack.c.bf16 %v461, %v461
      %v470 = vunpack.c.l.bf16 %v467
      %v471 = vunpack.c.h.bf16 %v467
      %v472 = vunpack.c.l.bf16 %v468
      %v473 = vunpack.c.h.bf16 %v468
      %v506 = vunpack.c.l.b16 %v368
      %v507 = vunpack.c.h.b16 %v368
      %v508 = vunpack.c.l.b16 %v369
      %v509 = vunpack.c.h.b16 %v369
      %v510 = vunpack.c.l.b16 %v370
      %v511 = vunpack.c.h.b16 %v370
      %v512 = vunpack.c.l.b16 %v371
      %v513 = vunpack.c.h.b16 %v371
      %v514 = vunpack.c.l.b16 %v372
      %v515 = vunpack.c.h.b16 %v372
      %v516 = vunpack.c.l.b16 %v373
      %v517 = vunpack.c.h.b16 %v373
      %v518 = vunpack.c.l.b16 %v374
      %v519 = vunpack.c.h.b16 %v374
      %v520 = vunpack.c.l.b16 %v375
      %v521 = vunpack.c.h.b16 %v375
      %v522 = vunpack.c.l.b16 %v376
      %v523 = vunpack.c.h.b16 %v376
      %v524 = vunpack.c.l.b16 %v377
      %v525 = vunpack.c.h.b16 %v377
      %v526 = vunpack.c.l.b16 %v378
      %v527 = vunpack.c.h.b16 %v378
      %v528 = vunpack.c.l.b16 %v379
      %v529 = vunpack.c.h.b16 %v379
      %v530 = vunpack.c.l.b16 %v380
      %v531 = vunpack.c.h.b16 %v380
      %v532 = vunpack.c.l.b16 %v381
      %v533 = vunpack.c.h.b16 %v381
      %v534 = vunpack.c.l.b16 %v382
      %v535 = vunpack.c.h.b16 %v382
      %v536 = vunpack.c.l.b16 %v383
      %v537 = vunpack.c.h.b16 %v383
      %v538 = vunpack.c.l.b16 %v384
      %v539 = vunpack.c.h.b16 %v384
      %v540 = vunpack.c.l.b16 %v385
      %v541 = vunpack.c.h.b16 %v385
      %v542 = vunpack.c.l.b16 %v386
      %v543 = vunpack.c.h.b16 %v386
      %v544 = vunpack.c.l.b16 %v387
      %v545 = vunpack.c.h.b16 %v387
      %v546 = vunpack.c.l.b16 %v388
      %v547 = vunpack.c.h.b16 %v388
      %v548 = vunpack.c.l.b16 %v389
      %v549 = vunpack.c.h.b16 %v389
      %v550 = vunpack.c.l.b16 %v390
      %v551 = vunpack.c.h.b16 %v390
      %v552 = vunpack.c.l.b16 %v391
      %v553 = vunpack.c.h.b16 %v391
      %v554 = vunpack.c.l.b16 %v392
      %v555 = vunpack.c.h.b16 %v392
      %v556 = vunpack.c.l.b16 %v393
      %v557 = vunpack.c.h.b16 %v393
      %v558 = vunpack.c.l.b16 %v394
      %v559 = vunpack.c.h.b16 %v394
      %v560 = vunpack.c.l.b16 %v395
      %v561 = vunpack.c.h.b16 %v395
      %v562 = vunpack.c.l.b16 %v396
      %v563 = vunpack.c.h.b16 %v396
      %v564 = vunpack.c.l.b16 %v397
      %v565 = vunpack.c.h.b16 %v397
      %v566 = vunpack.c.l.b16 %v398
      %v567 = vunpack.c.h.b16 %v398
      %v568 = vunpack.c.l.b16 %v399
      %v569 = vunpack.c.h.b16 %v399
      %v570 = vpack.c.b16 %v510, %v506
      %v571 = vpack.c.b16 %v511, %v507
      %v572 = vpack.c.b16 %v512, %v508
      %v573 = vpack.c.b16 %v513, %v509
      %v574 = vpack.c.b16 %v518, %v514
      %v575 = vpack.c.b16 %v519, %v515
      %v576 = vpack.c.b16 %v520, %v516
      %v577 = vpack.c.b16 %v521, %v517
      %v578 = vpack.c.b16 %v526, %v522
      %v579 = vpack.c.b16 %v527, %v523
      %v580 = vpack.c.b16 %v528, %v524
      %v581 = vpack.c.b16 %v529, %v525
      %v582 = vpack.c.b16 %v534, %v530
      %v583 = vpack.c.b16 %v535, %v531
      %v584 = vpack.c.b16 %v536, %v532
      %v585 = vpack.c.b16 %v537, %v533
      %v586 = vpack.c.b16 %v542, %v538
      %v587 = vpack.c.b16 %v543, %v539
      %v588 = vpack.c.b16 %v544, %v540
      %v589 = vpack.c.b16 %v545, %v541
      %v590 = vpack.c.b16 %v550, %v546
      %v591 = vpack.c.b16 %v551, %v547
      %v592 = vpack.c.b16 %v552, %v548
      %v593 = vpack.c.b16 %v553, %v549
      %v594 = vpack.c.b16 %v558, %v554
      %v595 = vpack.c.b16 %v559, %v555
      %v596 = vpack.c.b16 %v560, %v556
      %v597 = vpack.c.b16 %v561, %v557
      %v598 = vpack.c.b16 %v566, %v562
      %v599 = vpack.c.b16 %v567, %v563
      %v600 = vpack.c.b16 %v568, %v564
      %v601 = vpack.c.b16 %v569, %v565
      %634 = vmatpush.bf16.msra.mxu0 %v598
      %635 = vmatpush.bf16.msra.mxu0 %v594
      %636 = vmatpush.bf16.msra.mxu0 %v590
      %637 = vmatpush.bf16.msra.mxu0 %v586
      %638 = vmatpush.bf16.msra.mxu0 %v582
      %639 = vmatpush.bf16.msra.mxu0 %v578
      %640 = vmatpush.bf16.msra.mxu0 %v574
      %641 = vmatpush.bf16.msra.mxu0 %v570
      %642 = vmatmul.bf16.gmra.mxu0 %v469
      %v643 = vpop.f32.mrf.mxu0
      %v644 = vadd.f32 %v470, %v643
      %v645 = vpop.f32.mrf.mxu0
      %646 = vdwg.mxu0
      %647 = vmatpush.bf16.msra.mxu0 %v599
      %648 = vmatpush.bf16.msra.mxu0 %v595
      %649 = vmatpush.bf16.msra.mxu0 %v591
      %650 = vmatpush.bf16.msra.mxu0 %v587
      %651 = vmatpush.bf16.msra.mxu0 %v583
      %652 = vmatpush.bf16.msra.mxu0 %v579
      %653 = vmatpush.bf16.msra.mxu0 %v575
      %654 = vmatpush.bf16.msra.mxu0 %v571
      %655 = vmatmul.bf16.gmra.mxu0 %v469
      %v656 = vpop.f32.mrf.mxu0
      %v657 = vadd.f32 %v471, %v656
      %v658 = vpop.f32.mrf.mxu0
      %659 = vdwg.mxu0
      %660 = vmatpush.bf16.msra.mxu0 %v600
      %661 = vmatpush.bf16.msra.mxu0 %v596
      %662 = vmatpush.bf16.msra.mxu0 %v592
      %663 = vmatpush.bf16.msra.mxu0 %v588
      %664 = vmatpush.bf16.msra.mxu0 %v584
      %665 = vmatpush.bf16.msra.mxu0 %v580
      %666 = vmatpush.bf16.msra.mxu0 %v576
      %667 = vmatpush.bf16.msra.mxu0 %v572
      %668 = vmatmul.bf16.gmra.mxu0 %v469
      %v669 = vpop.f32.mrf.mxu0
      %v670 = vadd.f32 %v472, %v669
      %v671 = vpop.f32.mrf.mxu0
      %672 = vdwg.mxu0
      %673 = vmatpush.bf16.msra.mxu0 %v601
      %674 = vmatpush.bf16.msra.mxu0 %v597
      %675 = vmatpush.bf16.msra.mxu0 %v593
      %676 = vmatpush.bf16.msra.mxu0 %v589
      %677 = vmatpush.bf16.msra.mxu0 %v585
      %678 = vmatpush.bf16.msra.mxu0 %v581
      %679 = vmatpush.bf16.msra.mxu0 %v577
      %680 = vmatpush.bf16.msra.mxu0 %v573
      %681 = vmatmul.bf16.gmra.mxu0 %v469
      %v682 = vpop.f32.mrf.mxu0
      %v683 = vadd.f32 %v473, %v682
      %v684 = vpop.f32.mrf.mxu0
      %685 = vdwg.mxu0
      %v686 = vadd.f32 %v644, %v435
      %v687 = vadd.f32 %v657, %v436
      %v688 = vadd.f32 %v670, %v437
      %v689 = vadd.f32 %v683, %v438
      %v690 = vxor.u32 %v686, 2147483648
      %v691 = vmul.f32 %v690, 1.442695
      %v692 = vpow.pop %v691
      %v693 = vadd.f32 %v692, 1.0
      %v694 = vrcp.pop %v693
      %v695 = vmul.f32 %v693, %v694
      %v696 = vsub.f32 1.0, %v695
      %v697 = vmul.f32 %v694, %v696
      %v698 = vadd.f32 %v694, %v697
      %vm699 = vweird.f32 %v693
      %vm700 = vweird.f32 %v694
      %vm701 = vmor %vm699, %vm700
      %v702 = vsel %vm701, %v694, %v698
      %v703 = vand.u32 2147483647, %v693
      %vm704 = vcmp.eq.f32.partialorder %v703, 8.507059e+37
      %v705 = vand.u32 %v693, 2147483648
      %v706 = vor.u32 1.1754944e-38, %v705
      %v707 = vsel %vm704, %v706, %v702
      %v708 = vmul.f32 1.0, %v707
      %v709 = vxor.u32 %v687, 2147483648
      %v710 = vmul.f32 %v709, 1.442695
      %v711 = vpow.pop %v710
      %v712 = vadd.f32 %v711, 1.0
      %v713 = vrcp.pop %v712
      %v714 = vmul.f32 %v712, %v713
      %v715 = vsub.f32 1.0, %v714
      %v716 = vmul.f32 %v713, %v715
      %v717 = vadd.f32 %v713, %v716
      %vm718 = vweird.f32 %v712
      %vm719 = vweird.f32 %v713
      %vm720 = vmor %vm718, %vm719
      %v721 = vsel %vm720, %v713, %v717
      %v722 = vand.u32 2147483647, %v712
      %vm723 = vcmp.eq.f32.partialorder %v722, 8.507059e+37
      %v724 = vand.u32 %v712, 2147483648
      %v725 = vor.u32 1.1754944e-38, %v724
      %v726 = vsel %vm723, %v725, %v721
      %v727 = vmul.f32 1.0, %v726
      %v728 = vtanh.pop %v688
      %v729 = vxor.u32 %v689, 2147483648
      %v730 = vmul.f32 %v729, 1.442695
      %v731 = vpow.pop %v730
      %v732 = vadd.f32 %v731, 1.0
      %v733 = vrcp.pop %v732
      %v734 = vmul.f32 %v732, %v733
      %v735 = vsub.f32 1.0, %v734
      %v736 = vmul.f32 %v733, %v735
      %v737 = vadd.f32 %v733, %v736
      %vm738 = vweird.f32 %v732
      %vm739 = vweird.f32 %v733
      %vm740 = vmor %vm738, %vm739
      %v741 = vsel %vm740, %v733, %v737
      %v742 = vand.u32 2147483647, %v732
      %vm743 = vcmp.eq.f32.partialorder %v742, 8.507059e+37
      %v744 = vand.u32 %v732, 2147483648
      %v745 = vor.u32 1.1754944e-38, %v744
      %v746 = vsel %vm743, %v745, %v741
      %v747 = vmul.f32 1.0, %v746
      %v748 = vmul.f32 %v727, %v462
      %v749 = vmul.f32 %v708, %v728
      %v750 = vadd.f32 %v748, %v749
      %v751 = vtanh.pop %v750
      %v752 = vmul.f32 %v747, %v751
      %v753 = vstv %s458
      %vm754 = vcmp.lt.s32.totalorder %v753, %v457
      %v755 = vsel %vm754, %v752, 0.0
      %v756 = vsel %vm754, %v752, %v461
      %v757 = vsel %vm754, %v750, %v462
      %s758 = scalar_lea.vmem %s343, 112
      %v759 = vld [vmem:[%s758] sm:$0xff]
      %v760 = vld [vmem:[%s758 + $0x8] sm:$0xff]
      %s761 = sadd.s32 %s460, 7
      %v762 = vpack.c.bf16 %v464, %v464
      %v763 = vunpack.c.l.bf16 %v759
      %v764 = vunpack.c.h.bf16 %v759
      %v765 = vunpack.c.l.bf16 %v760
      %v766 = vunpack.c.h.bf16 %v760
      %v799 = vunpack.c.l.b16 %v401
      %v800 = vunpack.c.h.b16 %v401
      %v801 = vunpack.c.l.b16 %v402
      %v802 = vunpack.c.h.b16 %v402
      %v803 = vunpack.c.l.b16 %v403
      %v804 = vunpack.c.h.b16 %v403
      %v805 = vunpack.c.l.b16 %v404
      %v806 = vunpack.c.h.b16 %v404
      %v807 = vunpack.c.l.b16 %v405
      %v808 = vunpack.c.h.b16 %v405
      %v809 = vunpack.c.l.b16 %v406
      %v810 = vunpack.c.h.b16 %v406
      %v811 = vunpack.c.l.b16 %v407
      %v812 = vunpack.c.h.b16 %v407
      %v813 = vunpack.c.l.b16 %v408
      %v814 = vunpack.c.h.b16 %v408
      %v815 = vunpack.c.l.b16 %v409
      %v816 = vunpack.c.h.b16 %v409
      %v817 = vunpack.c.l.b16 %v410
      %v818 = vunpack.c.h.b16 %v410
      %v819 = vunpack.c.l.b16 %v411
      %v820 = vunpack.c.h.b16 %v411
      %v821 = vunpack.c.l.b16 %v412
      %v822 = vunpack.c.h.b16 %v412
      %v823 = vunpack.c.l.b16 %v413
      %v824 = vunpack.c.h.b16 %v413
      %v825 = vunpack.c.l.b16 %v414
      %v826 = vunpack.c.h.b16 %v414
      %v827 = vunpack.c.l.b16 %v415
      %v828 = vunpack.c.h.b16 %v415
      %v829 = vunpack.c.l.b16 %v416
      %v830 = vunpack.c.h.b16 %v416
      %v831 = vunpack.c.l.b16 %v417
      %v832 = vunpack.c.h.b16 %v417
      %v833 = vunpack.c.l.b16 %v418
      %v834 = vunpack.c.h.b16 %v418
      %v835 = vunpack.c.l.b16 %v419
      %v836 = vunpack.c.h.b16 %v419
      %v837 = vunpack.c.l.b16 %v420
      %v838 = vunpack.c.h.b16 %v420
      %v839 = vunpack.c.l.b16 %v421
      %v840 = vunpack.c.h.b16 %v421
      %v841 = vunpack.c.l.b16 %v422
      %v842 = vunpack.c.h.b16 %v422
      %v843 = vunpack.c.l.b16 %v423
      %v844 = vunpack.c.h.b16 %v423
      %v845 = vunpack.c.l.b16 %v424
      %v846 = vunpack.c.h.b16 %v424
      %v847 = vunpack.c.l.b16 %v425
      %v848 = vunpack.c.h.b16 %v425
      %v849 = vunpack.c.l.b16 %v426
      %v850 = vunpack.c.h.b16 %v426
      %v851 = vunpack.c.l.b16 %v427
      %v852 = vunpack.c.h.b16 %v427
      %v853 = vunpack.c.l.b16 %v428
      %v854 = vunpack.c.h.b16 %v428
      %v855 = vunpack.c.l.b16 %v429
      %v856 = vunpack.c.h.b16 %v429
      %v857 = vunpack.c.l.b16 %v430
      %v858 = vunpack.c.h.b16 %v430
      %v859 = vunpack.c.l.b16 %v431
      %v860 = vunpack.c.h.b16 %v431
      %v861 = vunpack.c.l.b16 %v432
      %v862 = vunpack.c.h.b16 %v432
      %v863 = vpack.c.b16 %v803, %v799
      %v864 = vpack.c.b16 %v804, %v800
      %v865 = vpack.c.b16 %v805, %v801
      %v866 = vpack.c.b16 %v806, %v802
      %v867 = vpack.c.b16 %v811, %v807
      %v868 = vpack.c.b16 %v812, %v808
      %v869 = vpack.c.b16 %v813, %v809
      %v870 = vpack.c.b16 %v814, %v810
      %v871 = vpack.c.b16 %v819, %v815
      %v872 = vpack.c.b16 %v820, %v816
      %v873 = vpack.c.b16 %v821, %v817
      %v874 = vpack.c.b16 %v822, %v818
      %v875 = vpack.c.b16 %v827, %v823
      %v876 = vpack.c.b16 %v828, %v824
      %v877 = vpack.c.b16 %v829, %v825
      %v878 = vpack.c.b16 %v830, %v826
      %v879 = vpack.c.b16 %v835, %v831
      %v880 = vpack.c.b16 %v836, %v832
      %v881 = vpack.c.b16 %v837, %v833
      %v882 = vpack.c.b16 %v838, %v834
      %v883 = vpack.c.b16 %v843, %v839
      %v884 = vpack.c.b16 %v844, %v840
      %v885 = vpack.c.b16 %v845, %v841
      %v886 = vpack.c.b16 %v846, %v842
      %v887 = vpack.c.b16 %v851, %v847
      %v888 = vpack.c.b16 %v852, %v848
      %v889 = vpack.c.b16 %v853, %v849
      %v890 = vpack.c.b16 %v854, %v850
      %v891 = vpack.c.b16 %v859, %v855
      %v892 = vpack.c.b16 %v860, %v856
      %v893 = vpack.c.b16 %v861, %v857
      %v894 = vpack.c.b16 %v862, %v858
      %927 = vmatpush.bf16.msra.mxu0 %v891
      %928 = vmatpush.bf16.msra.mxu0 %v887
      %929 = vmatpush.bf16.msra.mxu0 %v883
      %930 = vmatpush.bf16.msra.mxu0 %v879
      %931 = vmatpush.bf16.msra.mxu0 %v875
      %932 = vmatpush.bf16.msra.mxu0 %v871
      %933 = vmatpush.bf16.msra.mxu0 %v867
      %934 = vmatpush.bf16.msra.mxu0 %v863
      %935 = vmatmul.bf16.gmra.mxu0 %v762
      %v936 = vpop.f32.mrf.mxu0
      %v937 = vadd.f32 %v763, %v936
      %v938 = vpop.f32.mrf.mxu0
      %939 = vdwg.mxu0
      %940 = vmatpush.bf16.msra.mxu0 %v892
      %941 = vmatpush.bf16.msra.mxu0 %v888
      %942 = vmatpush.bf16.msra.mxu0 %v884
      %943 = vmatpush.bf16.msra.mxu0 %v880
      %944 = vmatpush.bf16.msra.mxu0 %v876
      %945 = vmatpush.bf16.msra.mxu0 %v872
      %946 = vmatpush.bf16.msra.mxu0 %v868
      %947 = vmatpush.bf16.msra.mxu0 %v864
      %948 = vmatmul.bf16.gmra.mxu0 %v762
      %v949 = vpop.f32.mrf.mxu0
      %v950 = vadd.f32 %v764, %v949
      %v951 = vpop.f32.mrf.mxu0
      %952 = vdwg.mxu0
      %953 = vmatpush.bf16.msra.mxu0 %v893
      %954 = vmatpush.bf16.msra.mxu0 %v889
      %955 = vmatpush.bf16.msra.mxu0 %v885
      %956 = vmatpush.bf16.msra.mxu0 %v881
      %957 = vmatpush.bf16.msra.mxu0 %v877
      %958 = vmatpush.bf16.msra.mxu0 %v873
      %959 = vmatpush.bf16.msra.mxu0 %v869
      %960 = vmatpush.bf16.msra.mxu0 %v865
      %961 = vmatmul.bf16.gmra.mxu0 %v762
      %v962 = vpop.f32.mrf.mxu0
      %v963 = vadd.f32 %v765, %v962
      %v964 = vpop.f32.mrf.mxu0
      %965 = vdwg.mxu0
      %966 = vmatpush.bf16.msra.mxu0 %v894
      %967 = vmatpush.bf16.msra.mxu0 %v890
      %968 = vmatpush.bf16.msra.mxu0 %v886
      %969 = vmatpush.bf16.msra.mxu0 %v882
      %970 = vmatpush.bf16.msra.mxu0 %v878
      %971 = vmatpush.bf16.msra.mxu0 %v874
      %972 = vmatpush.bf16.msra.mxu0 %v870
      %973 = vmatpush.bf16.msra.mxu0 %v866
      %974 = vmatmul.bf16.gmra.mxu0 %v762
      %v975 = vpop.f32.mrf.mxu0
      %v976 = vadd.f32 %v766, %v975
      %v977 = vpop.f32.mrf.mxu0
      %978 = vdwg.mxu0
      %v979 = vadd.f32 %v937, %v446
      %v980 = vadd.f32 %v950, %v447
      %v981 = vadd.f32 %v963, %v448
      %v982 = vadd.f32 %v976, %v449
      %v983 = vxor.u32 %v979, 2147483648
      %v984 = vmul.f32 %v983, 1.442695
      %v985 = vpow.pop %v984
      %v986 = vadd.f32 %v985, 1.0
      %v987 = vrcp.pop %v986
      %v988 = vmul.f32 %v986, %v987
      %v989 = vsub.f32 1.0, %v988
      %v990 = vmul.f32 %v987, %v989
      %v991 = vadd.f32 %v987, %v990
      %vm992 = vweird.f32 %v986
      %vm993 = vweird.f32 %v987
      %vm994 = vmor %vm992, %vm993
      %v995 = vsel %vm994, %v987, %v991
      %v996 = vand.u32 2147483647, %v986
      %vm997 = vcmp.eq.f32.partialorder %v996, 8.507059e+37
      %v998 = vand.u32 %v986, 2147483648
      %v999 = vor.u32 1.1754944e-38, %v998
      %v1000 = vsel %vm997, %v999, %v995
      %v1001 = vmul.f32 1.0, %v1000
      %v1002 = vxor.u32 %v980, 2147483648
      %v1003 = vmul.f32 %v1002, 1.442695
      %v1004 = vpow.pop %v1003
      %v1005 = vadd.f32 %v1004, 1.0
      %v1006 = vrcp.pop %v1005
      %v1007 = vmul.f32 %v1005, %v1006
      %v1008 = vsub.f32 1.0, %v1007
      %v1009 = vmul.f32 %v1006, %v1008
      %v1010 = vadd.f32 %v1006, %v1009
      %vm1011 = vweird.f32 %v1005
      %vm1012 = vweird.f32 %v1006
      %vm1013 = vmor %vm1011, %vm1012
      %v1014 = vsel %vm1013, %v1006, %v1010
      %v1015 = vand.u32 2147483647, %v1005
      %vm1016 = vcmp.eq.f32.partialorder %v1015, 8.507059e+37
      %v1017 = vand.u32 %v1005, 2147483648
      %v1018 = vor.u32 1.1754944e-38, %v1017
      %v1019 = vsel %vm1016, %v1018, %v1014
      %v1020 = vmul.f32 1.0, %v1019
      %v1021 = vtanh.pop %v981
      %v1022 = vxor.u32 %v982, 2147483648
      %v1023 = vmul.f32 %v1022, 1.442695
      %v1024 = vpow.pop %v1023
      %v1025 = vadd.f32 %v1024, 1.0
      %v1026 = vrcp.pop %v1025
      %v1027 = vmul.f32 %v1025, %v1026
      %v1028 = vsub.f32 1.0, %v1027
      %v1029 = vmul.f32 %v1026, %v1028
      %v1030 = vadd.f32 %v1026, %v1029
      %vm1031 = vweird.f32 %v1025
      %vm1032 = vweird.f32 %v1026
      %vm1033 = vmor %vm1031, %vm1032
      %v1034 = vsel %vm1033, %v1026, %v1030
      %v1035 = vand.u32 2147483647, %v1025
      %vm1036 = vcmp.eq.f32.partialorder %v1035, 8.507059e+37
      %v1037 = vand.u32 %v1025, 2147483648
      %v1038 = vor.u32 1.1754944e-38, %v1037
      %v1039 = vsel %vm1036, %v1038, %v1034
      %v1040 = vmul.f32 1.0, %v1039
      %v1041 = vmul.f32 %v1020, %v466
      %v1042 = vmul.f32 %v1001, %v1021
      %v1043 = vadd.f32 %v1041, %v1042
      %v1044 = vtanh.pop %v1043
      %v1045 = vmul.f32 %v1040, %v1044
      %v1046 = vstv %s761
      %vm1047 = vcmp.lt.s32.totalorder %v1046, %v457
      %v1048 = vsel %vm1047, %v1045, 0.0
      %v1049 = vsel %vm1047, %v1045, %v464
      %v1050 = vsel %vm1047, %v1043, %v466
      %1051 = vst [vmem:[%s350] sm:$0xff] %v755
      %s1052 = scalar_lea.vmem %s357, 56
      %1053 = vst [vmem:[%s1052] sm:$0xff] %v1048
      %s1054 = scalar_lea.vmem %s334, 16
      %v1055 = vld [vmem:[%s1054] sm:$0xff]
      %v1056 = vld [vmem:[%s1054 + $0x8] sm:$0xff]
      %s1057 = sadd.s32 %s458, 1
      %v1058 = vpack.c.bf16 %v756, %v756
      %v1059 = vunpack.c.l.bf16 %v1055
      %v1060 = vunpack.c.h.bf16 %v1055
      %v1061 = vunpack.c.l.bf16 %v1056
      %v1062 = vunpack.c.h.bf16 %v1056
      %1063 = vmatpush.bf16.msra.mxu0 %v598
      %1064 = vmatpush.bf16.msra.mxu0 %v594
      %1065 = vmatpush.bf16.msra.mxu0 %v590
      %1066 = vmatpush.bf16.msra.mxu0 %v586
      %1067 = vmatpush.bf16.msra.mxu0 %v582
      %1068 = vmatpush.bf16.msra.mxu0 %v578
      %1069 = vmatpush.bf16.msra.mxu0 %v574
      %1070 = vmatpush.bf16.msra.mxu0 %v570
      %1071 = vmatmul.bf16.gmra.mxu0 %v1058
      %v1072 = vpop.f32.mrf.mxu0
      %v1073 = vadd.f32 %v1059, %v1072
      %v1074 = vpop.f32.mrf.mxu0
      %1075 = vdwg.mxu0
      %1076 = vmatpush.bf16.msra.mxu0 %v599
      %1077 = vmatpush.bf16.msra.mxu0 %v595
      %1078 = vmatpush.bf16.msra.mxu0 %v591
      %1079 = vmatpush.bf16.msra.mxu0 %v587
      %1080 = vmatpush.bf16.msra.mxu0 %v583
      %1081 = vmatpush.bf16.msra.mxu0 %v579
      %1082 = vmatpush.bf16.msra.mxu0 %v575
      %1083 = vmatpush.bf16.msra.mxu0 %v571
      %1084 = vmatmul.bf16.gmra.mxu0 %v1058
      %v1085 = vpop.f32.mrf.mxu0
      %v1086 = vadd.f32 %v1060, %v1085
      %v1087 = vpop.f32.mrf.mxu0
      %1088 = vdwg.mxu0
      %1089 = vmatpush.bf16.msra.mxu0 %v600
      %1090 = vmatpush.bf16.msra.mxu0 %v596
      %1091 = vmatpush.bf16.msra.mxu0 %v592
      %1092 = vmatpush.bf16.msra.mxu0 %v588
      %1093 = vmatpush.bf16.msra.mxu0 %v584
      %1094 = vmatpush.bf16.msra.mxu0 %v580
      %1095 = vmatpush.bf16.msra.mxu0 %v576
      %1096 = vmatpush.bf16.msra.mxu0 %v572
      %1097 = vmatmul.bf16.gmra.mxu0 %v1058
      %v1098 = vpop.f32.mrf.mxu0
      %v1099 = vadd.f32 %v1061, %v1098
      %v1100 = vpop.f32.mrf.mxu0
      %1101 = vdwg.mxu0
      %1102 = vmatpush.bf16.msra.mxu0 %v601
      %1103 = vmatpush.bf16.msra.mxu0 %v597
      %1104 = vmatpush.bf16.msra.mxu0 %v593
      %1105 = vmatpush.bf16.msra.mxu0 %v589
      %1106 = vmatpush.bf16.msra.mxu0 %v585
      %1107 = vmatpush.bf16.msra.mxu0 %v581
      %1108 = vmatpush.bf16.msra.mxu0 %v577
      %1109 = vmatpush.bf16.msra.mxu0 %v573
      %1110 = vmatmul.bf16.gmra.mxu0 %v1058
      %v1111 = vpop.f32.mrf.mxu0
      %v1112 = vadd.f32 %v1062, %v1111
      %v1113 = vpop.f32.mrf.mxu0
      %1114 = vdwg.mxu0
      %v1115 = vadd.f32 %v1073, %v435
      %v1116 = vadd.f32 %v1086, %v436
      %v1117 = vadd.f32 %v1099, %v437
      %v1118 = vadd.f32 %v1112, %v438
      %v1119 = vxor.u32 %v1115, 2147483648
      %v1120 = vmul.f32 %v1119, 1.442695
      %v1121 = vpow.pop %v1120
      %v1122 = vadd.f32 %v1121, 1.0
      %v1123 = vrcp.pop %v1122
      %v1124 = vmul.f32 %v1122, %v1123
      %v1125 = vsub.f32 1.0, %v1124
      %v1126 = vmul.f32 %v1123, %v1125
      %v1127 = vadd.f32 %v1123, %v1126
      %vm1128 = vweird.f32 %v1122
      %vm1129 = vweird.f32 %v1123
      %vm1130 = vmor %vm1128, %vm1129
      %v1131 = vsel %vm1130, %v1123, %v1127
      %v1132 = vand.u32 2147483647, %v1122
      %vm1133 = vcmp.eq.f32.partialorder %v1132, 8.507059e+37
      %v1134 = vand.u32 %v1122, 2147483648
      %v1135 = vor.u32 1.1754944e-38, %v1134
      %v1136 = vsel %vm1133, %v1135, %v1131
      %v1137 = vmul.f32 1.0, %v1136
      %v1138 = vxor.u32 %v1116, 2147483648
      %v1139 = vmul.f32 %v1138, 1.442695
      %v1140 = vpow.pop %v1139
      %v1141 = vadd.f32 %v1140, 1.0
      %v1142 = vrcp.pop %v1141
      %v1143 = vmul.f32 %v1141, %v1142
      %v1144 = vsub.f32 1.0, %v1143
      %v1145 = vmul.f32 %v1142, %v1144
      %v1146 = vadd.f32 %v1142, %v1145
      %vm1147 = vweird.f32 %v1141
      %vm1148 = vweird.f32 %v1142
      %vm1149 = vmor %vm1147, %vm1148
      %v1150 = vsel %vm1149, %v1142, %v1146
      %v1151 = vand.u32 2147483647, %v1141
      %vm1152 = vcmp.eq.f32.partialorder %v1151, 8.507059e+37
      %v1153 = vand.u32 %v1141, 2147483648
      %v1154 = vor.u32 1.1754944e-38, %v1153
      %v1155 = vsel %vm1152, %v1154, %v1150
      %v1156 = vmul.f32 1.0, %v1155
      %v1157 = vtanh.pop %v1117
      %v1158 = vxor.u32 %v1118, 2147483648
      %v1159 = vmul.f32 %v1158, 1.442695
      %v1160 = vpow.pop %v1159
      %v1161 = vadd.f32 %v1160, 1.0
      %v1162 = vrcp.pop %v1161
      %v1163 = vmul.f32 %v1161, %v1162
      %v1164 = vsub.f32 1.0, %v1163
      %v1165 = vmul.f32 %v1162, %v1164
      %v1166 = vadd.f32 %v1162, %v1165
      %vm1167 = vweird.f32 %v1161
      %vm1168 = vweird.f32 %v1162
      %vm1169 = vmor %vm1167, %vm1168
      %v1170 = vsel %vm1169, %v1162, %v1166
      %v1171 = vand.u32 2147483647, %v1161
      %vm1172 = vcmp.eq.f32.partialorder %v1171, 8.507059e+37
      %v1173 = vand.u32 %v1161, 2147483648
      %v1174 = vor.u32 1.1754944e-38, %v1173
      %v1175 = vsel %vm1172, %v1174, %v1170
      %v1176 = vmul.f32 1.0, %v1175
      %v1177 = vmul.f32 %v1156, %v757
      %v1178 = vmul.f32 %v1137, %v1157
      %v1179 = vadd.f32 %v1177, %v1178
      %v1180 = vtanh.pop %v1179
      %v1181 = vmul.f32 %v1176, %v1180
      %v1182 = vstv %s1057
      %vm1183 = vcmp.lt.s32.totalorder %v1182, %v457
      %v1184 = vsel %vm1183, %v1181, 0.0
      %v1185 = vsel %vm1183, %v1181, %v756
      %v1186 = vsel %vm1183, %v1179, %v757
      %s1187 = scalar_lea.vmem %s343, 96
      %v1188 = vld [vmem:[%s1187] sm:$0xff]
      %v1189 = vld [vmem:[%s1187 + $0x8] sm:$0xff]
      %s1190 = sadd.s32 %s460, 6
      %v1191 = vpack.c.bf16 %v1049, %v1049
      %v1192 = vunpack.c.l.bf16 %v1188
      %v1193 = vunpack.c.h.bf16 %v1188
      %v1194 = vunpack.c.l.bf16 %v1189
      %v1195 = vunpack.c.h.bf16 %v1189
      %1196 = vmatpush.bf16.msra.mxu0 %v891
      %1197 = vmatpush.bf16.msra.mxu0 %v887
      %1198 = vmatpush.bf16.msra.mxu0 %v883
      %1199 = vmatpush.bf16.msra.mxu0 %v879
      %1200 = vmatpush.bf16.msra.mxu0 %v875
      %1201 = vmatpush.bf16.msra.mxu0 %v871
      %1202 = vmatpush.bf16.msra.mxu0 %v867
      %1203 = vmatpush.bf16.msra.mxu0 %v863
      %1204 = vmatmul.bf16.gmra.mxu0 %v1191
      %v1205 = vpop.f32.mrf.mxu0
      %v1206 = vadd.f32 %v1192, %v1205
      %v1207 = vpop.f32.mrf.mxu0
      %1208 = vdwg.mxu0
      %1209 = vmatpush.bf16.msra.mxu0 %v892
      %1210 = vmatpush.bf16.msra.mxu0 %v888
      %1211 = vmatpush.bf16.msra.mxu0 %v884
      %1212 = vmatpush.bf16.msra.mxu0 %v880
      %1213 = vmatpush.bf16.msra.mxu0 %v876
      %1214 = vmatpush.bf16.msra.mxu0 %v872
      %1215 = vmatpush.bf16.msra.mxu0 %v868
      %1216 = vmatpush.bf16.msra.mxu0 %v864
      %1217 = vmatmul.bf16.gmra.mxu0 %v1191
      %v1218 = vpop.f32.mrf.mxu0
      %v1219 = vadd.f32 %v1193, %v1218
      %v1220 = vpop.f32.mrf.mxu0
      %1221 = vdwg.mxu0
      %1222 = vmatpush.bf16.msra.mxu0 %v893
      %1223 = vmatpush.bf16.msra.mxu0 %v889
      %1224 = vmatpush.bf16.msra.mxu0 %v885
      %1225 = vmatpush.bf16.msra.mxu0 %v881
      %1226 = vmatpush.bf16.msra.mxu0 %v877
      %1227 = vmatpush.bf16.msra.mxu0 %v873
      %1228 = vmatpush.bf16.msra.mxu0 %v869
      %1229 = vmatpush.bf16.msra.mxu0 %v865
      %1230 = vmatmul.bf16.gmra.mxu0 %v1191
      %v1231 = vpop.f32.mrf.mxu0
      %v1232 = vadd.f32 %v1194, %v1231
      %v1233 = vpop.f32.mrf.mxu0
      %1234 = vdwg.mxu0
      %1235 = vmatpush.bf16.msra.mxu0 %v894
      %1236 = vmatpush.bf16.msra.mxu0 %v890
      %1237 = vmatpush.bf16.msra.mxu0 %v886
      %1238 = vmatpush.bf16.msra.mxu0 %v882
      %1239 = vmatpush.bf16.msra.mxu0 %v878
      %1240 = vmatpush.bf16.msra.mxu0 %v874
      %1241 = vmatpush.bf16.msra.mxu0 %v870
      %1242 = vmatpush.bf16.msra.mxu0 %v866
      %1243 = vmatmul.bf16.gmra.mxu0 %v1191
      %v1244 = vpop.f32.mrf.mxu0
      %v1245 = vadd.f32 %v1195, %v1244
      %v1246 = vpop.f32.mrf.mxu0
      %1247 = vdwg.mxu0
      %v1248 = vadd.f32 %v1206, %v446
      %v1249 = vadd.f32 %v1219, %v447
      %v1250 = vadd.f32 %v1232, %v448
      %v1251 = vadd.f32 %v1245, %v449
      %v1252 = vxor.u32 %v1248, 2147483648
      %v1253 = vmul.f32 %v1252, 1.442695
      %v1254 = vpow.pop %v1253
      %v1255 = vadd.f32 %v1254, 1.0
      %v1256 = vrcp.pop %v1255
      %v1257 = vmul.f32 %v1255, %v1256
      %v1258 = vsub.f32 1.0, %v1257
      %v1259 = vmul.f32 %v1256, %v1258
      %v1260 = vadd.f32 %v1256, %v1259
      %vm1261 = vweird.f32 %v1255
      %vm1262 = vweird.f32 %v1256
      %vm1263 = vmor %vm1261, %vm1262
      %v1264 = vsel %vm1263, %v1256, %v1260
      %v1265 = vand.u32 2147483647, %v1255
      %vm1266 = vcmp.eq.f32.partialorder %v1265, 8.507059e+37
      %v1267 = vand.u32 %v1255, 2147483648
      %v1268 = vor.u32 1.1754944e-38, %v1267
      %v1269 = vsel %vm1266, %v1268, %v1264
      %v1270 = vmul.f32 1.0, %v1269
      %v1271 = vxor.u32 %v1249, 2147483648
      %v1272 = vmul.f32 %v1271, 1.442695
      %v1273 = vpow.pop %v1272
      %v1274 = vadd.f32 %v1273, 1.0
      %v1275 = vrcp.pop %v1274
      %v1276 = vmul.f32 %v1274, %v1275
      %v1277 = vsub.f32 1.0, %v1276
      %v1278 = vmul.f32 %v1275, %v1277
      %v1279 = vadd.f32 %v1275, %v1278
      %vm1280 = vweird.f32 %v1274
      %vm1281 = vweird.f32 %v1275
      %vm1282 = vmor %vm1280, %vm1281
      %v1283 = vsel %vm1282, %v1275, %v1279
      %v1284 = vand.u32 2147483647, %v1274
      %vm1285 = vcmp.eq.f32.partialorder %v1284, 8.507059e+37
      %v1286 = vand.u32 %v1274, 2147483648
      %v1287 = vor.u32 1.1754944e-38, %v1286
      %v1288 = vsel %vm1285, %v1287, %v1283
      %v1289 = vmul.f32 1.0, %v1288
      %v1290 = vtanh.pop %v1250
      %v1291 = vxor.u32 %v1251, 2147483648
      %v1292 = vmul.f32 %v1291, 1.442695
      %v1293 = vpow.pop %v1292
      %v1294 = vadd.f32 %v1293, 1.0
      %v1295 = vrcp.pop %v1294
      %v1296 = vmul.f32 %v1294, %v1295
      %v1297 = vsub.f32 1.0, %v1296
      %v1298 = vmul.f32 %v1295, %v1297
      %v1299 = vadd.f32 %v1295, %v1298
      %vm1300 = vweird.f32 %v1294
      %vm1301 = vweird.f32 %v1295
      %vm1302 = vmor %vm1300, %vm1301
      %v1303 = vsel %vm1302, %v1295, %v1299
      %v1304 = vand.u32 2147483647, %v1294
      %vm1305 = vcmp.eq.f32.partialorder %v1304, 8.507059e+37
      %v1306 = vand.u32 %v1294, 2147483648
      %v1307 = vor.u32 1.1754944e-38, %v1306
      %v1308 = vsel %vm1305, %v1307, %v1303
      %v1309 = vmul.f32 1.0, %v1308
      %v1310 = vmul.f32 %v1289, %v1050
      %v1311 = vmul.f32 %v1270, %v1290
      %v1312 = vadd.f32 %v1310, %v1311
      %v1313 = vtanh.pop %v1312
      %v1314 = vmul.f32 %v1309, %v1313
      %v1315 = vstv %s1190
      %vm1316 = vcmp.lt.s32.totalorder %v1315, %v457
      %v1317 = vsel %vm1316, %v1314, 0.0
      %v1318 = vsel %vm1316, %v1314, %v1049
      %v1319 = vsel %vm1316, %v1312, %v1050
      %s1320 = scalar_lea.vmem %s350, 8
      %1321 = vst [vmem:[%s1320] sm:$0xff] %v1184
      %s1322 = scalar_lea.vmem %s357, 48
      %1323 = vst [vmem:[%s1322] sm:$0xff] %v1317
      %s1324 = scalar_lea.vmem %s334, 32
      %v1325 = vld [vmem:[%s1324] sm:$0xff]
      %v1326 = vld [vmem:[%s1324 + $0x8] sm:$0xff]
      %s1327 = sadd.s32 %s458, 2
      %v1328 = vpack.c.bf16 %v1185, %v1185
      %v1329 = vunpack.c.l.bf16 %v1325
      %v1330 = vunpack.c.h.bf16 %v1325
      %v1331 = vunpack.c.l.bf16 %v1326
      %v1332 = vunpack.c.h.bf16 %v1326
      %1333 = vmatpush.bf16.msra.mxu0 %v598
      %1334 = vmatpush.bf16.msra.mxu0 %v594
      %1335 = vmatpush.bf16.msra.mxu0 %v590
      %1336 = vmatpush.bf16.msra.mxu0 %v586
      %1337 = vmatpush.bf16.msra.mxu0 %v582
      %1338 = vmatpush.bf16.msra.mxu0 %v578
      %1339 = vmatpush.bf16.msra.mxu0 %v574
      %1340 = vmatpush.bf16.msra.mxu0 %v570
      %1341 = vmatmul.bf16.gmra.mxu0 %v1328
      %v1342 = vpop.f32.mrf.mxu0
      %v1343 = vadd.f32 %v1329, %v1342
      %v1344 = vpop.f32.mrf.mxu0
      %1345 = vdwg.mxu0
      %1346 = vmatpush.bf16.msra.mxu0 %v599
      %1347 = vmatpush.bf16.msra.mxu0 %v595
      %1348 = vmatpush.bf16.msra.mxu0 %v591
      %1349 = vmatpush.bf16.msra.mxu0 %v587
      %1350 = vmatpush.bf16.msra.mxu0 %v583
      %1351 = vmatpush.bf16.msra.mxu0 %v579
      %1352 = vmatpush.bf16.msra.mxu0 %v575
      %1353 = vmatpush.bf16.msra.mxu0 %v571
      %1354 = vmatmul.bf16.gmra.mxu0 %v1328
      %v1355 = vpop.f32.mrf.mxu0
      %v1356 = vadd.f32 %v1330, %v1355
      %v1357 = vpop.f32.mrf.mxu0
      %1358 = vdwg.mxu0
      %1359 = vmatpush.bf16.msra.mxu0 %v600
      %1360 = vmatpush.bf16.msra.mxu0 %v596
      %1361 = vmatpush.bf16.msra.mxu0 %v592
      %1362 = vmatpush.bf16.msra.mxu0 %v588
      %1363 = vmatpush.bf16.msra.mxu0 %v584
      %1364 = vmatpush.bf16.msra.mxu0 %v580
      %1365 = vmatpush.bf16.msra.mxu0 %v576
      %1366 = vmatpush.bf16.msra.mxu0 %v572
      %1367 = vmatmul.bf16.gmra.mxu0 %v1328
      %v1368 = vpop.f32.mrf.mxu0
      %v1369 = vadd.f32 %v1331, %v1368
      %v1370 = vpop.f32.mrf.mxu0
      %1371 = vdwg.mxu0
      %1372 = vmatpush.bf16.msra.mxu0 %v601
      %1373 = vmatpush.bf16.msra.mxu0 %v597
      %1374 = vmatpush.bf16.msra.mxu0 %v593
      %1375 = vmatpush.bf16.msra.mxu0 %v589
      %1376 = vmatpush.bf16.msra.mxu0 %v585
      %1377 = vmatpush.bf16.msra.mxu0 %v581
      %1378 = vmatpush.bf16.msra.mxu0 %v577
      %1379 = vmatpush.bf16.msra.mxu0 %v573
      %1380 = vmatmul.bf16.gmra.mxu0 %v1328
      %v1381 = vpop.f32.mrf.mxu0
      %v1382 = vadd.f32 %v1332, %v1381
      %v1383 = vpop.f32.mrf.mxu0
      %1384 = vdwg.mxu0
      %v1385 = vadd.f32 %v1343, %v435
      %v1386 = vadd.f32 %v1356, %v436
      %v1387 = vadd.f32 %v1369, %v437
      %v1388 = vadd.f32 %v1382, %v438
      %v1389 = vxor.u32 %v1385, 2147483648
      %v1390 = vmul.f32 %v1389, 1.442695
      %v1391 = vpow.pop %v1390
      %v1392 = vadd.f32 %v1391, 1.0
      %v1393 = vrcp.pop %v1392
      %v1394 = vmul.f32 %v1392, %v1393
      %v1395 = vsub.f32 1.0, %v1394
      %v1396 = vmul.f32 %v1393, %v1395
      %v1397 = vadd.f32 %v1393, %v1396
      %vm1398 = vweird.f32 %v1392
      %vm1399 = vweird.f32 %v1393
      %vm1400 = vmor %vm1398, %vm1399
      %v1401 = vsel %vm1400, %v1393, %v1397
      %v1402 = vand.u32 2147483647, %v1392
      %vm1403 = vcmp.eq.f32.partialorder %v1402, 8.507059e+37
      %v1404 = vand.u32 %v1392, 2147483648
      %v1405 = vor.u32 1.1754944e-38, %v1404
      %v1406 = vsel %vm1403, %v1405, %v1401
      %v1407 = vmul.f32 1.0, %v1406
      %v1408 = vxor.u32 %v1386, 2147483648
      %v1409 = vmul.f32 %v1408, 1.442695
      %v1410 = vpow.pop %v1409
      %v1411 = vadd.f32 %v1410, 1.0
      %v1412 = vrcp.pop %v1411
      %v1413 = vmul.f32 %v1411, %v1412
      %v1414 = vsub.f32 1.0, %v1413
      %v1415 = vmul.f32 %v1412, %v1414
      %v1416 = vadd.f32 %v1412, %v1415
      %vm1417 = vweird.f32 %v1411
      %vm1418 = vweird.f32 %v1412
      %vm1419 = vmor %vm1417, %vm1418
      %v1420 = vsel %vm1419, %v1412, %v1416
      %v1421 = vand.u32 2147483647, %v1411
      %vm1422 = vcmp.eq.f32.partialorder %v1421, 8.507059e+37
      %v1423 = vand.u32 %v1411, 2147483648
      %v1424 = vor.u32 1.1754944e-38, %v1423
      %v1425 = vsel %vm1422, %v1424, %v1420
      %v1426 = vmul.f32 1.0, %v1425
      %v1427 = vtanh.pop %v1387
      %v1428 = vxor.u32 %v1388, 2147483648
      %v1429 = vmul.f32 %v1428, 1.442695
      %v1430 = vpow.pop %v1429
      %v1431 = vadd.f32 %v1430, 1.0
      %v1432 = vrcp.pop %v1431
      %v1433 = vmul.f32 %v1431, %v1432
      %v1434 = vsub.f32 1.0, %v1433
      %v1435 = vmul.f32 %v1432, %v1434
      %v1436 = vadd.f32 %v1432, %v1435
      %vm1437 = vweird.f32 %v1431
      %vm1438 = vweird.f32 %v1432
      %vm1439 = vmor %vm1437, %vm1438
      %v1440 = vsel %vm1439, %v1432, %v1436
      %v1441 = vand.u32 2147483647, %v1431
      %vm1442 = vcmp.eq.f32.partialorder %v1441, 8.507059e+37
      %v1443 = vand.u32 %v1431, 2147483648
      %v1444 = vor.u32 1.1754944e-38, %v1443
      %v1445 = vsel %vm1442, %v1444, %v1440
      %v1446 = vmul.f32 1.0, %v1445
      %v1447 = vmul.f32 %v1426, %v1186
      %v1448 = vmul.f32 %v1407, %v1427
      %v1449 = vadd.f32 %v1447, %v1448
      %v1450 = vtanh.pop %v1449
      %v1451 = vmul.f32 %v1446, %v1450
      %v1452 = vstv %s1327
      %vm1453 = vcmp.lt.s32.totalorder %v1452, %v457
      %v1454 = vsel %vm1453, %v1451, 0.0
      %v1455 = vsel %vm1453, %v1451, %v1185
      %v1456 = vsel %vm1453, %v1449, %v1186
      %s1457 = scalar_lea.vmem %s343, 80
      %v1458 = vld [vmem:[%s1457] sm:$0xff]
      %v1459 = vld [vmem:[%s1457 + $0x8] sm:$0xff]
      %s1460 = sadd.s32 %s460, 5
      %v1461 = vpack.c.bf16 %v1318, %v1318
      %v1462 = vunpack.c.l.bf16 %v1458
      %v1463 = vunpack.c.h.bf16 %v1458
      %v1464 = vunpack.c.l.bf16 %v1459
      %v1465 = vunpack.c.h.bf16 %v1459
      %1466 = vmatpush.bf16.msra.mxu0 %v891
      %1467 = vmatpush.bf16.msra.mxu0 %v887
      %1468 = vmatpush.bf16.msra.mxu0 %v883
      %1469 = vmatpush.bf16.msra.mxu0 %v879
      %1470 = vmatpush.bf16.msra.mxu0 %v875
      %1471 = vmatpush.bf16.msra.mxu0 %v871
      %1472 = vmatpush.bf16.msra.mxu0 %v867
      %1473 = vmatpush.bf16.msra.mxu0 %v863
      %1474 = vmatmul.bf16.gmra.mxu0 %v1461
      %v1475 = vpop.f32.mrf.mxu0
      %v1476 = vadd.f32 %v1462, %v1475
      %v1477 = vpop.f32.mrf.mxu0
      %1478 = vdwg.mxu0
      %1479 = vmatpush.bf16.msra.mxu0 %v892
      %1480 = vmatpush.bf16.msra.mxu0 %v888
      %1481 = vmatpush.bf16.msra.mxu0 %v884
      %1482 = vmatpush.bf16.msra.mxu0 %v880
      %1483 = vmatpush.bf16.msra.mxu0 %v876
      %1484 = vmatpush.bf16.msra.mxu0 %v872
      %1485 = vmatpush.bf16.msra.mxu0 %v868
      %1486 = vmatpush.bf16.msra.mxu0 %v864
      %1487 = vmatmul.bf16.gmra.mxu0 %v1461
      %v1488 = vpop.f32.mrf.mxu0
      %v1489 = vadd.f32 %v1463, %v1488
      %v1490 = vpop.f32.mrf.mxu0
      %1491 = vdwg.mxu0
      %1492 = vmatpush.bf16.msra.mxu0 %v893
      %1493 = vmatpush.bf16.msra.mxu0 %v889
      %1494 = vmatpush.bf16.msra.mxu0 %v885
      %1495 = vmatpush.bf16.msra.mxu0 %v881
      %1496 = vmatpush.bf16.msra.mxu0 %v877
      %1497 = vmatpush.bf16.msra.mxu0 %v873
      %1498 = vmatpush.bf16.msra.mxu0 %v869
      %1499 = vmatpush.bf16.msra.mxu0 %v865
      %1500 = vmatmul.bf16.gmra.mxu0 %v1461
      %v1501 = vpop.f32.mrf.mxu0
      %v1502 = vadd.f32 %v1464, %v1501
      %v1503 = vpop.f32.mrf.mxu0
      %1504 = vdwg.mxu0
      %1505 = vmatpush.bf16.msra.mxu0 %v894
      %1506 = vmatpush.bf16.msra.mxu0 %v890
      %1507 = vmatpush.bf16.msra.mxu0 %v886
      %1508 = vmatpush.bf16.msra.mxu0 %v882
      %1509 = vmatpush.bf16.msra.mxu0 %v878
      %1510 = vmatpush.bf16.msra.mxu0 %v874
      %1511 = vmatpush.bf16.msra.mxu0 %v870
      %1512 = vmatpush.bf16.msra.mxu0 %v866
      %1513 = vmatmul.bf16.gmra.mxu0 %v1461
      %v1514 = vpop.f32.mrf.mxu0
      %v1515 = vadd.f32 %v1465, %v1514
      %v1516 = vpop.f32.mrf.mxu0
      %1517 = vdwg.mxu0
      %v1518 = vadd.f32 %v1476, %v446
      %v1519 = vadd.f32 %v1489, %v447
      %v1520 = vadd.f32 %v1502, %v448
      %v1521 = vadd.f32 %v1515, %v449
      %v1522 = vxor.u32 %v1518, 2147483648
      %v1523 = vmul.f32 %v1522, 1.442695
      %v1524 = vpow.pop %v1523
      %v1525 = vadd.f32 %v1524, 1.0
      %v1526 = vrcp.pop %v1525
      %v1527 = vmul.f32 %v1525, %v1526
      %v1528 = vsub.f32 1.0, %v1527
      %v1529 = vmul.f32 %v1526, %v1528
      %v1530 = vadd.f32 %v1526, %v1529
      %vm1531 = vweird.f32 %v1525
      %vm1532 = vweird.f32 %v1526
      %vm1533 = vmor %vm1531, %vm1532
      %v1534 = vsel %vm1533, %v1526, %v1530
      %v1535 = vand.u32 2147483647, %v1525
      %vm1536 = vcmp.eq.f32.partialorder %v1535, 8.507059e+37
      %v1537 = vand.u32 %v1525, 2147483648
      %v1538 = vor.u32 1.1754944e-38, %v1537
      %v1539 = vsel %vm1536, %v1538, %v1534
      %v1540 = vmul.f32 1.0, %v1539
      %v1541 = vxor.u32 %v1519, 2147483648
      %v1542 = vmul.f32 %v1541, 1.442695
      %v1543 = vpow.pop %v1542
      %v1544 = vadd.f32 %v1543, 1.0
      %v1545 = vrcp.pop %v1544
      %v1546 = vmul.f32 %v1544, %v1545
      %v1547 = vsub.f32 1.0, %v1546
      %v1548 = vmul.f32 %v1545, %v1547
      %v1549 = vadd.f32 %v1545, %v1548
      %vm1550 = vweird.f32 %v1544
      %vm1551 = vweird.f32 %v1545
      %vm1552 = vmor %vm1550, %vm1551
      %v1553 = vsel %vm1552, %v1545, %v1549
      %v1554 = vand.u32 2147483647, %v1544
      %vm1555 = vcmp.eq.f32.partialorder %v1554, 8.507059e+37
      %v1556 = vand.u32 %v1544, 2147483648
      %v1557 = vor.u32 1.1754944e-38, %v1556
      %v1558 = vsel %vm1555, %v1557, %v1553
      %v1559 = vmul.f32 1.0, %v1558
      %v1560 = vtanh.pop %v1520
      %v1561 = vxor.u32 %v1521, 2147483648
      %v1562 = vmul.f32 %v1561, 1.442695
      %v1563 = vpow.pop %v1562
      %v1564 = vadd.f32 %v1563, 1.0
      %v1565 = vrcp.pop %v1564
      %v1566 = vmul.f32 %v1564, %v1565
      %v1567 = vsub.f32 1.0, %v1566
      %v1568 = vmul.f32 %v1565, %v1567
      %v1569 = vadd.f32 %v1565, %v1568
      %vm1570 = vweird.f32 %v1564
      %vm1571 = vweird.f32 %v1565
      %vm1572 = vmor %vm1570, %vm1571
      %v1573 = vsel %vm1572, %v1565, %v1569
      %v1574 = vand.u32 2147483647, %v1564
      %vm1575 = vcmp.eq.f32.partialorder %v1574, 8.507059e+37
      %v1576 = vand.u32 %v1564, 2147483648
      %v1577 = vor.u32 1.1754944e-38, %v1576
      %v1578 = vsel %vm1575, %v1577, %v1573
      %v1579 = vmul.f32 1.0, %v1578
      %v1580 = vmul.f32 %v1559, %v1319
      %v1581 = vmul.f32 %v1540, %v1560
      %v1582 = vadd.f32 %v1580, %v1581
      %v1583 = vtanh.pop %v1582
      %v1584 = vmul.f32 %v1579, %v1583
      %v1585 = vstv %s1460
      %vm1586 = vcmp.lt.s32.totalorder %v1585, %v457
      %v1587 = vsel %vm1586, %v1584, 0.0
      %v1588 = vsel %vm1586, %v1584, %v1318
      %v1589 = vsel %vm1586, %v1582, %v1319
      %s1590 = scalar_lea.vmem %s350, 16
      %1591 = vst [vmem:[%s1590] sm:$0xff] %v1454
      %s1592 = scalar_lea.vmem %s357, 40
      %1593 = vst [vmem:[%s1592] sm:$0xff] %v1587
      %s1594 = scalar_lea.vmem %s334, 48
      %v1595 = vld [vmem:[%s1594] sm:$0xff]
      %v1596 = vld [vmem:[%s1594 + $0x8] sm:$0xff]
      %s1597 = sadd.s32 %s458, 3
      %v1598 = vpack.c.bf16 %v1455, %v1455
      %v1599 = vunpack.c.l.bf16 %v1595
      %v1600 = vunpack.c.h.bf16 %v1595
      %v1601 = vunpack.c.l.bf16 %v1596
      %v1602 = vunpack.c.h.bf16 %v1596
      %1603 = vmatpush.bf16.msra.mxu0 %v598
      %1604 = vmatpush.bf16.msra.mxu0 %v594
      %1605 = vmatpush.bf16.msra.mxu0 %v590
      %1606 = vmatpush.bf16.msra.mxu0 %v586
      %1607 = vmatpush.bf16.msra.mxu0 %v582
      %1608 = vmatpush.bf16.msra.mxu0 %v578
      %1609 = vmatpush.bf16.msra.mxu0 %v574
      %1610 = vmatpush.bf16.msra.mxu0 %v570
      %1611 = vmatmul.bf16.gmra.mxu0 %v1598
      %v1612 = vpop.f32.mrf.mxu0
      %v1613 = vadd.f32 %v1599, %v1612
      %v1614 = vpop.f32.mrf.mxu0
      %1615 = vdwg.mxu0
      %1616 = vmatpush.bf16.msra.mxu0 %v599
      %1617 = vmatpush.bf16.msra.mxu0 %v595
      %1618 = vmatpush.bf16.msra.mxu0 %v591
      %1619 = vmatpush.bf16.msra.mxu0 %v587
      %1620 = vmatpush.bf16.msra.mxu0 %v583
      %1621 = vmatpush.bf16.msra.mxu0 %v579
      %1622 = vmatpush.bf16.msra.mxu0 %v575
      %1623 = vmatpush.bf16.msra.mxu0 %v571
      %1624 = vmatmul.bf16.gmra.mxu0 %v1598
      %v1625 = vpop.f32.mrf.mxu0
      %v1626 = vadd.f32 %v1600, %v1625
      %v1627 = vpop.f32.mrf.mxu0
      %1628 = vdwg.mxu0
      %1629 = vmatpush.bf16.msra.mxu0 %v600
      %1630 = vmatpush.bf16.msra.mxu0 %v596
      %1631 = vmatpush.bf16.msra.mxu0 %v592
      %1632 = vmatpush.bf16.msra.mxu0 %v588
      %1633 = vmatpush.bf16.msra.mxu0 %v584
      %1634 = vmatpush.bf16.msra.mxu0 %v580
      %1635 = vmatpush.bf16.msra.mxu0 %v576
      %1636 = vmatpush.bf16.msra.mxu0 %v572
      %1637 = vmatmul.bf16.gmra.mxu0 %v1598
      %v1638 = vpop.f32.mrf.mxu0
      %v1639 = vadd.f32 %v1601, %v1638
      %v1640 = vpop.f32.mrf.mxu0
      %1641 = vdwg.mxu0
      %1642 = vmatpush.bf16.msra.mxu0 %v601
      %1643 = vmatpush.bf16.msra.mxu0 %v597
      %1644 = vmatpush.bf16.msra.mxu0 %v593
      %1645 = vmatpush.bf16.msra.mxu0 %v589
      %1646 = vmatpush.bf16.msra.mxu0 %v585
      %1647 = vmatpush.bf16.msra.mxu0 %v581
      %1648 = vmatpush.bf16.msra.mxu0 %v577
      %1649 = vmatpush.bf16.msra.mxu0 %v573
      %1650 = vmatmul.bf16.gmra.mxu0 %v1598
      %v1651 = vpop.f32.mrf.mxu0
      %v1652 = vadd.f32 %v1602, %v1651
      %v1653 = vpop.f32.mrf.mxu0
      %1654 = vdwg.mxu0
      %v1655 = vadd.f32 %v1613, %v435
      %v1656 = vadd.f32 %v1626, %v436
      %v1657 = vadd.f32 %v1639, %v437
      %v1658 = vadd.f32 %v1652, %v438
      %v1659 = vxor.u32 %v1655, 2147483648
      %v1660 = vmul.f32 %v1659, 1.442695
      %v1661 = vpow.pop %v1660
      %v1662 = vadd.f32 %v1661, 1.0
      %v1663 = vrcp.pop %v1662
      %v1664 = vmul.f32 %v1662, %v1663
      %v1665 = vsub.f32 1.0, %v1664
      %v1666 = vmul.f32 %v1663, %v1665
      %v1667 = vadd.f32 %v1663, %v1666
      %vm1668 = vweird.f32 %v1662
      %vm1669 = vweird.f32 %v1663
      %vm1670 = vmor %vm1668, %vm1669
      %v1671 = vsel %vm1670, %v1663, %v1667
      %v1672 = vand.u32 2147483647, %v1662
      %vm1673 = vcmp.eq.f32.partialorder %v1672, 8.507059e+37
      %v1674 = vand.u32 %v1662, 2147483648
      %v1675 = vor.u32 1.1754944e-38, %v1674
      %v1676 = vsel %vm1673, %v1675, %v1671
      %v1677 = vmul.f32 1.0, %v1676
      %v1678 = vxor.u32 %v1656, 2147483648
      %v1679 = vmul.f32 %v1678, 1.442695
      %v1680 = vpow.pop %v1679
      %v1681 = vadd.f32 %v1680, 1.0
      %v1682 = vrcp.pop %v1681
      %v1683 = vmul.f32 %v1681, %v1682
      %v1684 = vsub.f32 1.0, %v1683
      %v1685 = vmul.f32 %v1682, %v1684
      %v1686 = vadd.f32 %v1682, %v1685
      %vm1687 = vweird.f32 %v1681
      %vm1688 = vweird.f32 %v1682
      %vm1689 = vmor %vm1687, %vm1688
      %v1690 = vsel %vm1689, %v1682, %v1686
      %v1691 = vand.u32 2147483647, %v1681
      %vm1692 = vcmp.eq.f32.partialorder %v1691, 8.507059e+37
      %v1693 = vand.u32 %v1681, 2147483648
      %v1694 = vor.u32 1.1754944e-38, %v1693
      %v1695 = vsel %vm1692, %v1694, %v1690
      %v1696 = vmul.f32 1.0, %v1695
      %v1697 = vtanh.pop %v1657
      %v1698 = vxor.u32 %v1658, 2147483648
      %v1699 = vmul.f32 %v1698, 1.442695
      %v1700 = vpow.pop %v1699
      %v1701 = vadd.f32 %v1700, 1.0
      %v1702 = vrcp.pop %v1701
      %v1703 = vmul.f32 %v1701, %v1702
      %v1704 = vsub.f32 1.0, %v1703
      %v1705 = vmul.f32 %v1702, %v1704
      %v1706 = vadd.f32 %v1702, %v1705
      %vm1707 = vweird.f32 %v1701
      %vm1708 = vweird.f32 %v1702
      %vm1709 = vmor %vm1707, %vm1708
      %v1710 = vsel %vm1709, %v1702, %v1706
      %v1711 = vand.u32 2147483647, %v1701
      %vm1712 = vcmp.eq.f32.partialorder %v1711, 8.507059e+37
      %v1713 = vand.u32 %v1701, 2147483648
      %v1714 = vor.u32 1.1754944e-38, %v1713
      %v1715 = vsel %vm1712, %v1714, %v1710
      %v1716 = vmul.f32 1.0, %v1715
      %v1717 = vmul.f32 %v1696, %v1456
      %v1718 = vmul.f32 %v1677, %v1697
      %v1719 = vadd.f32 %v1717, %v1718
      %v1720 = vtanh.pop %v1719
      %v1721 = vmul.f32 %v1716, %v1720
      %v1722 = vstv %s1597
      %vm1723 = vcmp.lt.s32.totalorder %v1722, %v457
      %v1724 = vsel %vm1723, %v1721, 0.0
      %v1725 = vsel %vm1723, %v1721, %v1455
      %v1726 = vsel %vm1723, %v1719, %v1456
      %s1727 = scalar_lea.vmem %s343, 64
      %v1728 = vld [vmem:[%s1727] sm:$0xff]
      %v1729 = vld [vmem:[%s1727 + $0x8] sm:$0xff]
      %s1730 = sadd.s32 %s460, 4
      %v1731 = vpack.c.bf16 %v1588, %v1588
      %v1732 = vunpack.c.l.bf16 %v1728
      %v1733 = vunpack.c.h.bf16 %v1728
      %v1734 = vunpack.c.l.bf16 %v1729
      %v1735 = vunpack.c.h.bf16 %v1729
      %1736 = vmatpush.bf16.msra.mxu0 %v891
      %1737 = vmatpush.bf16.msra.mxu0 %v887
      %1738 = vmatpush.bf16.msra.mxu0 %v883
      %1739 = vmatpush.bf16.msra.mxu0 %v879
      %1740 = vmatpush.bf16.msra.mxu0 %v875
      %1741 = vmatpush.bf16.msra.mxu0 %v871
      %1742 = vmatpush.bf16.msra.mxu0 %v867
      %1743 = vmatpush.bf16.msra.mxu0 %v863
      %1744 = vmatmul.bf16.gmra.mxu0 %v1731
      %v1745 = vpop.f32.mrf.mxu0
      %v1746 = vadd.f32 %v1732, %v1745
      %v1747 = vpop.f32.mrf.mxu0
      %1748 = vdwg.mxu0
      %1749 = vmatpush.bf16.msra.mxu0 %v892
      %1750 = vmatpush.bf16.msra.mxu0 %v888
      %1751 = vmatpush.bf16.msra.mxu0 %v884
      %1752 = vmatpush.bf16.msra.mxu0 %v880
      %1753 = vmatpush.bf16.msra.mxu0 %v876
      %1754 = vmatpush.bf16.msra.mxu0 %v872
      %1755 = vmatpush.bf16.msra.mxu0 %v868
      %1756 = vmatpush.bf16.msra.mxu0 %v864
      %1757 = vmatmul.bf16.gmra.mxu0 %v1731
      %v1758 = vpop.f32.mrf.mxu0
      %v1759 = vadd.f32 %v1733, %v1758
      %v1760 = vpop.f32.mrf.mxu0
      %1761 = vdwg.mxu0
      %1762 = vmatpush.bf16.msra.mxu0 %v893
      %1763 = vmatpush.bf16.msra.mxu0 %v889
      %1764 = vmatpush.bf16.msra.mxu0 %v885
      %1765 = vmatpush.bf16.msra.mxu0 %v881
      %1766 = vmatpush.bf16.msra.mxu0 %v877
      %1767 = vmatpush.bf16.msra.mxu0 %v873
      %1768 = vmatpush.bf16.msra.mxu0 %v869
      %1769 = vmatpush.bf16.msra.mxu0 %v865
      %1770 = vmatmul.bf16.gmra.mxu0 %v1731
      %v1771 = vpop.f32.mrf.mxu0
      %v1772 = vadd.f32 %v1734, %v1771
      %v1773 = vpop.f32.mrf.mxu0
      %1774 = vdwg.mxu0
      %1775 = vmatpush.bf16.msra.mxu0 %v894
      %1776 = vmatpush.bf16.msra.mxu0 %v890
      %1777 = vmatpush.bf16.msra.mxu0 %v886
      %1778 = vmatpush.bf16.msra.mxu0 %v882
      %1779 = vmatpush.bf16.msra.mxu0 %v878
      %1780 = vmatpush.bf16.msra.mxu0 %v874
      %1781 = vmatpush.bf16.msra.mxu0 %v870
      %1782 = vmatpush.bf16.msra.mxu0 %v866
      %1783 = vmatmul.bf16.gmra.mxu0 %v1731
      %v1784 = vpop.f32.mrf.mxu0
      %v1785 = vadd.f32 %v1735, %v1784
      %v1786 = vpop.f32.mrf.mxu0
      %1787 = vdwg.mxu0
      %v1788 = vadd.f32 %v1746, %v446
      %v1789 = vadd.f32 %v1759, %v447
      %v1790 = vadd.f32 %v1772, %v448
      %v1791 = vadd.f32 %v1785, %v449
      %v1792 = vxor.u32 %v1788, 2147483648
      %v1793 = vmul.f32 %v1792, 1.442695
      %v1794 = vpow.pop %v1793
      %v1795 = vadd.f32 %v1794, 1.0
      %v1796 = vrcp.pop %v1795
      %v1797 = vmul.f32 %v1795, %v1796
      %v1798 = vsub.f32 1.0, %v1797
      %v1799 = vmul.f32 %v1796, %v1798
      %v1800 = vadd.f32 %v1796, %v1799
      %vm1801 = vweird.f32 %v1795
      %vm1802 = vweird.f32 %v1796
      %vm1803 = vmor %vm1801, %vm1802
      %v1804 = vsel %vm1803, %v1796, %v1800
      %v1805 = vand.u32 2147483647, %v1795
      %vm1806 = vcmp.eq.f32.partialorder %v1805, 8.507059e+37
      %v1807 = vand.u32 %v1795, 2147483648
      %v1808 = vor.u32 1.1754944e-38, %v1807
      %v1809 = vsel %vm1806, %v1808, %v1804
      %v1810 = vmul.f32 1.0, %v1809
      %v1811 = vxor.u32 %v1789, 2147483648
      %v1812 = vmul.f32 %v1811, 1.442695
      %v1813 = vpow.pop %v1812
      %v1814 = vadd.f32 %v1813, 1.0
      %v1815 = vrcp.pop %v1814
      %v1816 = vmul.f32 %v1814, %v1815
      %v1817 = vsub.f32 1.0, %v1816
      %v1818 = vmul.f32 %v1815, %v1817
      %v1819 = vadd.f32 %v1815, %v1818
      %vm1820 = vweird.f32 %v1814
      %vm1821 = vweird.f32 %v1815
      %vm1822 = vmor %vm1820, %vm1821
      %v1823 = vsel %vm1822, %v1815, %v1819
      %v1824 = vand.u32 2147483647, %v1814
      %vm1825 = vcmp.eq.f32.partialorder %v1824, 8.507059e+37
      %v1826 = vand.u32 %v1814, 2147483648
      %v1827 = vor.u32 1.1754944e-38, %v1826
      %v1828 = vsel %vm1825, %v1827, %v1823
      %v1829 = vmul.f32 1.0, %v1828
      %v1830 = vtanh.pop %v1790
      %v1831 = vxor.u32 %v1791, 2147483648
      %v1832 = vmul.f32 %v1831, 1.442695
      %v1833 = vpow.pop %v1832
      %v1834 = vadd.f32 %v1833, 1.0
      %v1835 = vrcp.pop %v1834
      %v1836 = vmul.f32 %v1834, %v1835
      %v1837 = vsub.f32 1.0, %v1836
      %v1838 = vmul.f32 %v1835, %v1837
      %v1839 = vadd.f32 %v1835, %v1838
      %vm1840 = vweird.f32 %v1834
      %vm1841 = vweird.f32 %v1835
      %vm1842 = vmor %vm1840, %vm1841
      %v1843 = vsel %vm1842, %v1835, %v1839
      %v1844 = vand.u32 2147483647, %v1834
      %vm1845 = vcmp.eq.f32.partialorder %v1844, 8.507059e+37
      %v1846 = vand.u32 %v1834, 2147483648
      %v1847 = vor.u32 1.1754944e-38, %v1846
      %v1848 = vsel %vm1845, %v1847, %v1843
      %v1849 = vmul.f32 1.0, %v1848
      %v1850 = vmul.f32 %v1829, %v1589
      %v1851 = vmul.f32 %v1810, %v1830
      %v1852 = vadd.f32 %v1850, %v1851
      %v1853 = vtanh.pop %v1852
      %v1854 = vmul.f32 %v1849, %v1853
      %v1855 = vstv %s1730
      %vm1856 = vcmp.lt.s32.totalorder %v1855, %v457
      %v1857 = vsel %vm1856, %v1854, 0.0
      %v1858 = vsel %vm1856, %v1854, %v1588
      %v1859 = vsel %vm1856, %v1852, %v1589
      %s1860 = scalar_lea.vmem %s350, 24
      %1861 = vst [vmem:[%s1860] sm:$0xff] %v1724
      %s1862 = scalar_lea.vmem %s357, 32
      %1863 = vst [vmem:[%s1862] sm:$0xff] %v1857
      %s1864 = scalar_lea.vmem %s334, 64
      %v1865 = vld [vmem:[%s1864] sm:$0xff]
      %v1866 = vld [vmem:[%s1864 + $0x8] sm:$0xff]
      %s1867 = sadd.s32 %s458, 4
      %v1868 = vpack.c.bf16 %v1725, %v1725
      %v1869 = vunpack.c.l.bf16 %v1865
      %v1870 = vunpack.c.h.bf16 %v1865
      %v1871 = vunpack.c.l.bf16 %v1866
      %v1872 = vunpack.c.h.bf16 %v1866
      %1873 = vmatpush.bf16.msra.mxu0 %v598
      %1874 = vmatpush.bf16.msra.mxu0 %v594
      %1875 = vmatpush.bf16.msra.mxu0 %v590
      %1876 = vmatpush.bf16.msra.mxu0 %v586
      %1877 = vmatpush.bf16.msra.mxu0 %v582
      %1878 = vmatpush.bf16.msra.mxu0 %v578
      %1879 = vmatpush.bf16.msra.mxu0 %v574
      %1880 = vmatpush.bf16.msra.mxu0 %v570
      %1881 = vmatmul.bf16.gmra.mxu0 %v1868
      %v1882 = vpop.f32.mrf.mxu0
      %v1883 = vadd.f32 %v1869, %v1882
      %v1884 = vpop.f32.mrf.mxu0
      %1885 = vdwg.mxu0
      %1886 = vmatpush.bf16.msra.mxu0 %v599
      %1887 = vmatpush.bf16.msra.mxu0 %v595
      %1888 = vmatpush.bf16.msra.mxu0 %v591
      %1889 = vmatpush.bf16.msra.mxu0 %v587
      %1890 = vmatpush.bf16.msra.mxu0 %v583
      %1891 = vmatpush.bf16.msra.mxu0 %v579
      %1892 = vmatpush.bf16.msra.mxu0 %v575
      %1893 = vmatpush.bf16.msra.mxu0 %v571
      %1894 = vmatmul.bf16.gmra.mxu0 %v1868
      %v1895 = vpop.f32.mrf.mxu0
      %v1896 = vadd.f32 %v1870, %v1895
      %v1897 = vpop.f32.mrf.mxu0
      %1898 = vdwg.mxu0
      %1899 = vmatpush.bf16.msra.mxu0 %v600
      %1900 = vmatpush.bf16.msra.mxu0 %v596
      %1901 = vmatpush.bf16.msra.mxu0 %v592
      %1902 = vmatpush.bf16.msra.mxu0 %v588
      %1903 = vmatpush.bf16.msra.mxu0 %v584
      %1904 = vmatpush.bf16.msra.mxu0 %v580
      %1905 = vmatpush.bf16.msra.mxu0 %v576
      %1906 = vmatpush.bf16.msra.mxu0 %v572
      %1907 = vmatmul.bf16.gmra.mxu0 %v1868
      %v1908 = vpop.f32.mrf.mxu0
      %v1909 = vadd.f32 %v1871, %v1908
      %v1910 = vpop.f32.mrf.mxu0
      %1911 = vdwg.mxu0
      %1912 = vmatpush.bf16.msra.mxu0 %v601
      %1913 = vmatpush.bf16.msra.mxu0 %v597
      %1914 = vmatpush.bf16.msra.mxu0 %v593
      %1915 = vmatpush.bf16.msra.mxu0 %v589
      %1916 = vmatpush.bf16.msra.mxu0 %v585
      %1917 = vmatpush.bf16.msra.mxu0 %v581
      %1918 = vmatpush.bf16.msra.mxu0 %v577
      %1919 = vmatpush.bf16.msra.mxu0 %v573
      %1920 = vmatmul.bf16.gmra.mxu0 %v1868
      %v1921 = vpop.f32.mrf.mxu0
      %v1922 = vadd.f32 %v1872, %v1921
      %v1923 = vpop.f32.mrf.mxu0
      %1924 = vdwg.mxu0
      %v1925 = vadd.f32 %v1883, %v435
      %v1926 = vadd.f32 %v1896, %v436
      %v1927 = vadd.f32 %v1909, %v437
      %v1928 = vadd.f32 %v1922, %v438
      %v1929 = vxor.u32 %v1925, 2147483648
      %v1930 = vmul.f32 %v1929, 1.442695
      %v1931 = vpow.pop %v1930
      %v1932 = vadd.f32 %v1931, 1.0
      %v1933 = vrcp.pop %v1932
      %v1934 = vmul.f32 %v1932, %v1933
      %v1935 = vsub.f32 1.0, %v1934
      %v1936 = vmul.f32 %v1933, %v1935
      %v1937 = vadd.f32 %v1933, %v1936
      %vm1938 = vweird.f32 %v1932
      %vm1939 = vweird.f32 %v1933
      %vm1940 = vmor %vm1938, %vm1939
      %v1941 = vsel %vm1940, %v1933, %v1937
      %v1942 = vand.u32 2147483647, %v1932
      %vm1943 = vcmp.eq.f32.partialorder %v1942, 8.507059e+37
      %v1944 = vand.u32 %v1932, 2147483648
      %v1945 = vor.u32 1.1754944e-38, %v1944
      %v1946 = vsel %vm1943, %v1945, %v1941
      %v1947 = vmul.f32 1.0, %v1946
      %v1948 = vxor.u32 %v1926, 2147483648
      %v1949 = vmul.f32 %v1948, 1.442695
      %v1950 = vpow.pop %v1949
      %v1951 = vadd.f32 %v1950, 1.0
      %v1952 = vrcp.pop %v1951
      %v1953 = vmul.f32 %v1951, %v1952
      %v1954 = vsub.f32 1.0, %v1953
      %v1955 = vmul.f32 %v1952, %v1954
      %v1956 = vadd.f32 %v1952, %v1955
      %vm1957 = vweird.f32 %v1951
      %vm1958 = vweird.f32 %v1952
      %vm1959 = vmor %vm1957, %vm1958
      %v1960 = vsel %vm1959, %v1952, %v1956
      %v1961 = vand.u32 2147483647, %v1951
      %vm1962 = vcmp.eq.f32.partialorder %v1961, 8.507059e+37
      %v1963 = vand.u32 %v1951, 2147483648
      %v1964 = vor.u32 1.1754944e-38, %v1963
      %v1965 = vsel %vm1962, %v1964, %v1960
      %v1966 = vmul.f32 1.0, %v1965
      %v1967 = vtanh.pop %v1927
      %v1968 = vxor.u32 %v1928, 2147483648
      %v1969 = vmul.f32 %v1968, 1.442695
      %v1970 = vpow.pop %v1969
      %v1971 = vadd.f32 %v1970, 1.0
      %v1972 = vrcp.pop %v1971
      %v1973 = vmul.f32 %v1971, %v1972
      %v1974 = vsub.f32 1.0, %v1973
      %v1975 = vmul.f32 %v1972, %v1974
      %v1976 = vadd.f32 %v1972, %v1975
      %vm1977 = vweird.f32 %v1971
      %vm1978 = vweird.f32 %v1972
      %vm1979 = vmor %vm1977, %vm1978
      %v1980 = vsel %vm1979, %v1972, %v1976
      %v1981 = vand.u32 2147483647, %v1971
      %vm1982 = vcmp.eq.f32.partialorder %v1981, 8.507059e+37
      %v1983 = vand.u32 %v1971, 2147483648
      %v1984 = vor.u32 1.1754944e-38, %v1983
      %v1985 = vsel %vm1982, %v1984, %v1980
      %v1986 = vmul.f32 1.0, %v1985
      %v1987 = vmul.f32 %v1966, %v1726
      %v1988 = vmul.f32 %v1947, %v1967
      %v1989 = vadd.f32 %v1987, %v1988
      %v1990 = vtanh.pop %v1989
      %v1991 = vmul.f32 %v1986, %v1990
      %v1992 = vstv %s1867
      %vm1993 = vcmp.lt.s32.totalorder %v1992, %v457
      %v1994 = vsel %vm1993, %v1991, 0.0
      %v1995 = vsel %vm1993, %v1991, %v1725
      %v1996 = vsel %vm1993, %v1989, %v1726
      %s1997 = scalar_lea.vmem %s343, 48
      %v1998 = vld [vmem:[%s1997] sm:$0xff]
      %v1999 = vld [vmem:[%s1997 + $0x8] sm:$0xff]
      %s2000 = sadd.s32 %s460, 3
      %v2001 = vpack.c.bf16 %v1858, %v1858
      %v2002 = vunpack.c.l.bf16 %v1998
      %v2003 = vunpack.c.h.bf16 %v1998
      %v2004 = vunpack.c.l.bf16 %v1999
      %v2005 = vunpack.c.h.bf16 %v1999
      %2006 = vmatpush.bf16.msra.mxu0 %v891
      %2007 = vmatpush.bf16.msra.mxu0 %v887
      %2008 = vmatpush.bf16.msra.mxu0 %v883
      %2009 = vmatpush.bf16.msra.mxu0 %v879
      %2010 = vmatpush.bf16.msra.mxu0 %v875
      %2011 = vmatpush.bf16.msra.mxu0 %v871
      %2012 = vmatpush.bf16.msra.mxu0 %v867
      %2013 = vmatpush.bf16.msra.mxu0 %v863
      %2014 = vmatmul.bf16.gmra.mxu0 %v2001
      %v2015 = vpop.f32.mrf.mxu0
      %v2016 = vadd.f32 %v2002, %v2015
      %v2017 = vpop.f32.mrf.mxu0
      %2018 = vdwg.mxu0
      %2019 = vmatpush.bf16.msra.mxu0 %v892
      %2020 = vmatpush.bf16.msra.mxu0 %v888
      %2021 = vmatpush.bf16.msra.mxu0 %v884
      %2022 = vmatpush.bf16.msra.mxu0 %v880
      %2023 = vmatpush.bf16.msra.mxu0 %v876
      %2024 = vmatpush.bf16.msra.mxu0 %v872
      %2025 = vmatpush.bf16.msra.mxu0 %v868
      %2026 = vmatpush.bf16.msra.mxu0 %v864
      %2027 = vmatmul.bf16.gmra.mxu0 %v2001
      %v2028 = vpop.f32.mrf.mxu0
      %v2029 = vadd.f32 %v2003, %v2028
      %v2030 = vpop.f32.mrf.mxu0
      %2031 = vdwg.mxu0
      %2032 = vmatpush.bf16.msra.mxu0 %v893
      %2033 = vmatpush.bf16.msra.mxu0 %v889
      %2034 = vmatpush.bf16.msra.mxu0 %v885
      %2035 = vmatpush.bf16.msra.mxu0 %v881
      %2036 = vmatpush.bf16.msra.mxu0 %v877
      %2037 = vmatpush.bf16.msra.mxu0 %v873
      %2038 = vmatpush.bf16.msra.mxu0 %v869
      %2039 = vmatpush.bf16.msra.mxu0 %v865
      %2040 = vmatmul.bf16.gmra.mxu0 %v2001
      %v2041 = vpop.f32.mrf.mxu0
      %v2042 = vadd.f32 %v2004, %v2041
      %v2043 = vpop.f32.mrf.mxu0
      %2044 = vdwg.mxu0
      %2045 = vmatpush.bf16.msra.mxu0 %v894
      %2046 = vmatpush.bf16.msra.mxu0 %v890
      %2047 = vmatpush.bf16.msra.mxu0 %v886
      %2048 = vmatpush.bf16.msra.mxu0 %v882
      %2049 = vmatpush.bf16.msra.mxu0 %v878
      %2050 = vmatpush.bf16.msra.mxu0 %v874
      %2051 = vmatpush.bf16.msra.mxu0 %v870
      %2052 = vmatpush.bf16.msra.mxu0 %v866
      %2053 = vmatmul.bf16.gmra.mxu0 %v2001
      %v2054 = vpop.f32.mrf.mxu0
      %v2055 = vadd.f32 %v2005, %v2054
      %v2056 = vpop.f32.mrf.mxu0
      %2057 = vdwg.mxu0
      %v2058 = vadd.f32 %v2016, %v446
      %v2059 = vadd.f32 %v2029, %v447
      %v2060 = vadd.f32 %v2042, %v448
      %v2061 = vadd.f32 %v2055, %v449
      %v2062 = vxor.u32 %v2058, 2147483648
      %v2063 = vmul.f32 %v2062, 1.442695
      %v2064 = vpow.pop %v2063
      %v2065 = vadd.f32 %v2064, 1.0
      %v2066 = vrcp.pop %v2065
      %v2067 = vmul.f32 %v2065, %v2066
      %v2068 = vsub.f32 1.0, %v2067
      %v2069 = vmul.f32 %v2066, %v2068
      %v2070 = vadd.f32 %v2066, %v2069
      %vm2071 = vweird.f32 %v2065
      %vm2072 = vweird.f32 %v2066
      %vm2073 = vmor %vm2071, %vm2072
      %v2074 = vsel %vm2073, %v2066, %v2070
      %v2075 = vand.u32 2147483647, %v2065
      %vm2076 = vcmp.eq.f32.partialorder %v2075, 8.507059e+37
      %v2077 = vand.u32 %v2065, 2147483648
      %v2078 = vor.u32 1.1754944e-38, %v2077
      %v2079 = vsel %vm2076, %v2078, %v2074
      %v2080 = vmul.f32 1.0, %v2079
      %v2081 = vxor.u32 %v2059, 2147483648
      %v2082 = vmul.f32 %v2081, 1.442695
      %v2083 = vpow.pop %v2082
      %v2084 = vadd.f32 %v2083, 1.0
      %v2085 = vrcp.pop %v2084
      %v2086 = vmul.f32 %v2084, %v2085
      %v2087 = vsub.f32 1.0, %v2086
      %v2088 = vmul.f32 %v2085, %v2087
      %v2089 = vadd.f32 %v2085, %v2088
      %vm2090 = vweird.f32 %v2084
      %vm2091 = vweird.f32 %v2085
      %vm2092 = vmor %vm2090, %vm2091
      %v2093 = vsel %vm2092, %v2085, %v2089
      %v2094 = vand.u32 2147483647, %v2084
      %vm2095 = vcmp.eq.f32.partialorder %v2094, 8.507059e+37
      %v2096 = vand.u32 %v2084, 2147483648
      %v2097 = vor.u32 1.1754944e-38, %v2096
      %v2098 = vsel %vm2095, %v2097, %v2093
      %v2099 = vmul.f32 1.0, %v2098
      %v2100 = vtanh.pop %v2060
      %v2101 = vxor.u32 %v2061, 2147483648
      %v2102 = vmul.f32 %v2101, 1.442695
      %v2103 = vpow.pop %v2102
      %v2104 = vadd.f32 %v2103, 1.0
      %v2105 = vrcp.pop %v2104
      %v2106 = vmul.f32 %v2104, %v2105
      %v2107 = vsub.f32 1.0, %v2106
      %v2108 = vmul.f32 %v2105, %v2107
      %v2109 = vadd.f32 %v2105, %v2108
      %vm2110 = vweird.f32 %v2104
      %vm2111 = vweird.f32 %v2105
      %vm2112 = vmor %vm2110, %vm2111
      %v2113 = vsel %vm2112, %v2105, %v2109
      %v2114 = vand.u32 2147483647, %v2104
      %vm2115 = vcmp.eq.f32.partialorder %v2114, 8.507059e+37
      %v2116 = vand.u32 %v2104, 2147483648
      %v2117 = vor.u32 1.1754944e-38, %v2116
      %v2118 = vsel %vm2115, %v2117, %v2113
      %v2119 = vmul.f32 1.0, %v2118
      %v2120 = vmul.f32 %v2099, %v1859
      %v2121 = vmul.f32 %v2080, %v2100
      %v2122 = vadd.f32 %v2120, %v2121
      %v2123 = vtanh.pop %v2122
      %v2124 = vmul.f32 %v2119, %v2123
      %v2125 = vstv %s2000
      %vm2126 = vcmp.lt.s32.totalorder %v2125, %v457
      %v2127 = vsel %vm2126, %v2124, 0.0
      %v2128 = vsel %vm2126, %v2124, %v1858
      %v2129 = vsel %vm2126, %v2122, %v1859
      %s2130 = scalar_lea.vmem %s350, 32
      %2131 = vst [vmem:[%s2130] sm:$0xff] %v1994
      %s2132 = scalar_lea.vmem %s357, 24
      %2133 = vst [vmem:[%s2132] sm:$0xff] %v2127
      %s2134 = scalar_lea.vmem %s334, 80
      %v2135 = vld [vmem:[%s2134] sm:$0xff]
      %v2136 = vld [vmem:[%s2134 + $0x8] sm:$0xff]
      %s2137 = sadd.s32 %s458, 5
      %v2138 = vpack.c.bf16 %v1995, %v1995
      %v2139 = vunpack.c.l.bf16 %v2135
      %v2140 = vunpack.c.h.bf16 %v2135
      %v2141 = vunpack.c.l.bf16 %v2136
      %v2142 = vunpack.c.h.bf16 %v2136
      %2143 = vmatpush.bf16.msra.mxu0 %v598
      %2144 = vmatpush.bf16.msra.mxu0 %v594
      %2145 = vmatpush.bf16.msra.mxu0 %v590
      %2146 = vmatpush.bf16.msra.mxu0 %v586
      %2147 = vmatpush.bf16.msra.mxu0 %v582
      %2148 = vmatpush.bf16.msra.mxu0 %v578
      %2149 = vmatpush.bf16.msra.mxu0 %v574
      %2150 = vmatpush.bf16.msra.mxu0 %v570
      %2151 = vmatmul.bf16.gmra.mxu0 %v2138
      %v2152 = vpop.f32.mrf.mxu0
      %v2153 = vadd.f32 %v2139, %v2152
      %v2154 = vpop.f32.mrf.mxu0
      %2155 = vdwg.mxu0
      %2156 = vmatpush.bf16.msra.mxu0 %v599
      %2157 = vmatpush.bf16.msra.mxu0 %v595
      %2158 = vmatpush.bf16.msra.mxu0 %v591
      %2159 = vmatpush.bf16.msra.mxu0 %v587
      %2160 = vmatpush.bf16.msra.mxu0 %v583
      %2161 = vmatpush.bf16.msra.mxu0 %v579
      %2162 = vmatpush.bf16.msra.mxu0 %v575
      %2163 = vmatpush.bf16.msra.mxu0 %v571
      %2164 = vmatmul.bf16.gmra.mxu0 %v2138
      %v2165 = vpop.f32.mrf.mxu0
      %v2166 = vadd.f32 %v2140, %v2165
      %v2167 = vpop.f32.mrf.mxu0
      %2168 = vdwg.mxu0
      %2169 = vmatpush.bf16.msra.mxu0 %v600
      %2170 = vmatpush.bf16.msra.mxu0 %v596
      %2171 = vmatpush.bf16.msra.mxu0 %v592
      %2172 = vmatpush.bf16.msra.mxu0 %v588
      %2173 = vmatpush.bf16.msra.mxu0 %v584
      %2174 = vmatpush.bf16.msra.mxu0 %v580
      %2175 = vmatpush.bf16.msra.mxu0 %v576
      %2176 = vmatpush.bf16.msra.mxu0 %v572
      %2177 = vmatmul.bf16.gmra.mxu0 %v2138
      %v2178 = vpop.f32.mrf.mxu0
      %v2179 = vadd.f32 %v2141, %v2178
      %v2180 = vpop.f32.mrf.mxu0
      %2181 = vdwg.mxu0
      %2182 = vmatpush.bf16.msra.mxu0 %v601
      %2183 = vmatpush.bf16.msra.mxu0 %v597
      %2184 = vmatpush.bf16.msra.mxu0 %v593
      %2185 = vmatpush.bf16.msra.mxu0 %v589
      %2186 = vmatpush.bf16.msra.mxu0 %v585
      %2187 = vmatpush.bf16.msra.mxu0 %v581
      %2188 = vmatpush.bf16.msra.mxu0 %v577
      %2189 = vmatpush.bf16.msra.mxu0 %v573
      %2190 = vmatmul.bf16.gmra.mxu0 %v2138
      %v2191 = vpop.f32.mrf.mxu0
      %v2192 = vadd.f32 %v2142, %v2191
      %v2193 = vpop.f32.mrf.mxu0
      %2194 = vdwg.mxu0
      %v2195 = vadd.f32 %v2153, %v435
      %v2196 = vadd.f32 %v2166, %v436
      %v2197 = vadd.f32 %v2179, %v437
      %v2198 = vadd.f32 %v2192, %v438
      %v2199 = vxor.u32 %v2195, 2147483648
      %v2200 = vmul.f32 %v2199, 1.442695
      %v2201 = vpow.pop %v2200
      %v2202 = vadd.f32 %v2201, 1.0
      %v2203 = vrcp.pop %v2202
      %v2204 = vmul.f32 %v2202, %v2203
      %v2205 = vsub.f32 1.0, %v2204
      %v2206 = vmul.f32 %v2203, %v2205
      %v2207 = vadd.f32 %v2203, %v2206
      %vm2208 = vweird.f32 %v2202
      %vm2209 = vweird.f32 %v2203
      %vm2210 = vmor %vm2208, %vm2209
      %v2211 = vsel %vm2210, %v2203, %v2207
      %v2212 = vand.u32 2147483647, %v2202
      %vm2213 = vcmp.eq.f32.partialorder %v2212, 8.507059e+37
      %v2214 = vand.u32 %v2202, 2147483648
      %v2215 = vor.u32 1.1754944e-38, %v2214
      %v2216 = vsel %vm2213, %v2215, %v2211
      %v2217 = vmul.f32 1.0, %v2216
      %v2218 = vxor.u32 %v2196, 2147483648
      %v2219 = vmul.f32 %v2218, 1.442695
      %v2220 = vpow.pop %v2219
      %v2221 = vadd.f32 %v2220, 1.0
      %v2222 = vrcp.pop %v2221
      %v2223 = vmul.f32 %v2221, %v2222
      %v2224 = vsub.f32 1.0, %v2223
      %v2225 = vmul.f32 %v2222, %v2224
      %v2226 = vadd.f32 %v2222, %v2225
      %vm2227 = vweird.f32 %v2221
      %vm2228 = vweird.f32 %v2222
      %vm2229 = vmor %vm2227, %vm2228
      %v2230 = vsel %vm2229, %v2222, %v2226
      %v2231 = vand.u32 2147483647, %v2221
      %vm2232 = vcmp.eq.f32.partialorder %v2231, 8.507059e+37
      %v2233 = vand.u32 %v2221, 2147483648
      %v2234 = vor.u32 1.1754944e-38, %v2233
      %v2235 = vsel %vm2232, %v2234, %v2230
      %v2236 = vmul.f32 1.0, %v2235
      %v2237 = vtanh.pop %v2197
      %v2238 = vxor.u32 %v2198, 2147483648
      %v2239 = vmul.f32 %v2238, 1.442695
      %v2240 = vpow.pop %v2239
      %v2241 = vadd.f32 %v2240, 1.0
      %v2242 = vrcp.pop %v2241
      %v2243 = vmul.f32 %v2241, %v2242
      %v2244 = vsub.f32 1.0, %v2243
      %v2245 = vmul.f32 %v2242, %v2244
      %v2246 = vadd.f32 %v2242, %v2245
      %vm2247 = vweird.f32 %v2241
      %vm2248 = vweird.f32 %v2242
      %vm2249 = vmor %vm2247, %vm2248
      %v2250 = vsel %vm2249, %v2242, %v2246
      %v2251 = vand.u32 2147483647, %v2241
      %vm2252 = vcmp.eq.f32.partialorder %v2251, 8.507059e+37
      %v2253 = vand.u32 %v2241, 2147483648
      %v2254 = vor.u32 1.1754944e-38, %v2253
      %v2255 = vsel %vm2252, %v2254, %v2250
      %v2256 = vmul.f32 1.0, %v2255
      %v2257 = vmul.f32 %v2236, %v1996
      %v2258 = vmul.f32 %v2217, %v2237
      %v2259 = vadd.f32 %v2257, %v2258
      %v2260 = vtanh.pop %v2259
      %v2261 = vmul.f32 %v2256, %v2260
      %v2262 = vstv %s2137
      %vm2263 = vcmp.lt.s32.totalorder %v2262, %v457
      %v2264 = vsel %vm2263, %v2261, 0.0
      %v2265 = vsel %vm2263, %v2261, %v1995
      %v2266 = vsel %vm2263, %v2259, %v1996
      %s2267 = scalar_lea.vmem %s343, 32
      %v2268 = vld [vmem:[%s2267] sm:$0xff]
      %v2269 = vld [vmem:[%s2267 + $0x8] sm:$0xff]
      %s2270 = sadd.s32 %s460, 2
      %v2271 = vpack.c.bf16 %v2128, %v2128
      %v2272 = vunpack.c.l.bf16 %v2268
      %v2273 = vunpack.c.h.bf16 %v2268
      %v2274 = vunpack.c.l.bf16 %v2269
      %v2275 = vunpack.c.h.bf16 %v2269
      %2276 = vmatpush.bf16.msra.mxu0 %v891
      %2277 = vmatpush.bf16.msra.mxu0 %v887
      %2278 = vmatpush.bf16.msra.mxu0 %v883
      %2279 = vmatpush.bf16.msra.mxu0 %v879
      %2280 = vmatpush.bf16.msra.mxu0 %v875
      %2281 = vmatpush.bf16.msra.mxu0 %v871
      %2282 = vmatpush.bf16.msra.mxu0 %v867
      %2283 = vmatpush.bf16.msra.mxu0 %v863
      %2284 = vmatmul.bf16.gmra.mxu0 %v2271
      %v2285 = vpop.f32.mrf.mxu0
      %v2286 = vadd.f32 %v2272, %v2285
      %v2287 = vpop.f32.mrf.mxu0
      %2288 = vdwg.mxu0
      %2289 = vmatpush.bf16.msra.mxu0 %v892
      %2290 = vmatpush.bf16.msra.mxu0 %v888
      %2291 = vmatpush.bf16.msra.mxu0 %v884
      %2292 = vmatpush.bf16.msra.mxu0 %v880
      %2293 = vmatpush.bf16.msra.mxu0 %v876
      %2294 = vmatpush.bf16.msra.mxu0 %v872
      %2295 = vmatpush.bf16.msra.mxu0 %v868
      %2296 = vmatpush.bf16.msra.mxu0 %v864
      %2297 = vmatmul.bf16.gmra.mxu0 %v2271
      %v2298 = vpop.f32.mrf.mxu0
      %v2299 = vadd.f32 %v2273, %v2298
      %v2300 = vpop.f32.mrf.mxu0
      %2301 = vdwg.mxu0
      %2302 = vmatpush.bf16.msra.mxu0 %v893
      %2303 = vmatpush.bf16.msra.mxu0 %v889
      %2304 = vmatpush.bf16.msra.mxu0 %v885
      %2305 = vmatpush.bf16.msra.mxu0 %v881
      %2306 = vmatpush.bf16.msra.mxu0 %v877
      %2307 = vmatpush.bf16.msra.mxu0 %v873
      %2308 = vmatpush.bf16.msra.mxu0 %v869
      %2309 = vmatpush.bf16.msra.mxu0 %v865
      %2310 = vmatmul.bf16.gmra.mxu0 %v2271
      %v2311 = vpop.f32.mrf.mxu0
      %v2312 = vadd.f32 %v2274, %v2311
      %v2313 = vpop.f32.mrf.mxu0
      %2314 = vdwg.mxu0
      %2315 = vmatpush.bf16.msra.mxu0 %v894
      %2316 = vmatpush.bf16.msra.mxu0 %v890
      %2317 = vmatpush.bf16.msra.mxu0 %v886
      %2318 = vmatpush.bf16.msra.mxu0 %v882
      %2319 = vmatpush.bf16.msra.mxu0 %v878
      %2320 = vmatpush.bf16.msra.mxu0 %v874
      %2321 = vmatpush.bf16.msra.mxu0 %v870
      %2322 = vmatpush.bf16.msra.mxu0 %v866
      %2323 = vmatmul.bf16.gmra.mxu0 %v2271
      %v2324 = vpop.f32.mrf.mxu0
      %v2325 = vadd.f32 %v2275, %v2324
      %v2326 = vpop.f32.mrf.mxu0
      %2327 = vdwg.mxu0
      %v2328 = vadd.f32 %v2286, %v446
      %v2329 = vadd.f32 %v2299, %v447
      %v2330 = vadd.f32 %v2312, %v448
      %v2331 = vadd.f32 %v2325, %v449
      %v2332 = vxor.u32 %v2328, 2147483648
      %v2333 = vmul.f32 %v2332, 1.442695
      %v2334 = vpow.pop %v2333
      %v2335 = vadd.f32 %v2334, 1.0
      %v2336 = vrcp.pop %v2335
      %v2337 = vmul.f32 %v2335, %v2336
      %v2338 = vsub.f32 1.0, %v2337
      %v2339 = vmul.f32 %v2336, %v2338
      %v2340 = vadd.f32 %v2336, %v2339
      %vm2341 = vweird.f32 %v2335
      %vm2342 = vweird.f32 %v2336
      %vm2343 = vmor %vm2341, %vm2342
      %v2344 = vsel %vm2343, %v2336, %v2340
      %v2345 = vand.u32 2147483647, %v2335
      %vm2346 = vcmp.eq.f32.partialorder %v2345, 8.507059e+37
      %v2347 = vand.u32 %v2335, 2147483648
      %v2348 = vor.u32 1.1754944e-38, %v2347
      %v2349 = vsel %vm2346, %v2348, %v2344
      %v2350 = vmul.f32 1.0, %v2349
      %v2351 = vxor.u32 %v2329, 2147483648
      %v2352 = vmul.f32 %v2351, 1.442695
      %v2353 = vpow.pop %v2352
      %v2354 = vadd.f32 %v2353, 1.0
      %v2355 = vrcp.pop %v2354
      %v2356 = vmul.f32 %v2354, %v2355
      %v2357 = vsub.f32 1.0, %v2356
      %v2358 = vmul.f32 %v2355, %v2357
      %v2359 = vadd.f32 %v2355, %v2358
      %vm2360 = vweird.f32 %v2354
      %vm2361 = vweird.f32 %v2355
      %vm2362 = vmor %vm2360, %vm2361
      %v2363 = vsel %vm2362, %v2355, %v2359
      %v2364 = vand.u32 2147483647, %v2354
      %vm2365 = vcmp.eq.f32.partialorder %v2364, 8.507059e+37
      %v2366 = vand.u32 %v2354, 2147483648
      %v2367 = vor.u32 1.1754944e-38, %v2366
      %v2368 = vsel %vm2365, %v2367, %v2363
      %v2369 = vmul.f32 1.0, %v2368
      %v2370 = vtanh.pop %v2330
      %v2371 = vxor.u32 %v2331, 2147483648
      %v2372 = vmul.f32 %v2371, 1.442695
      %v2373 = vpow.pop %v2372
      %v2374 = vadd.f32 %v2373, 1.0
      %v2375 = vrcp.pop %v2374
      %v2376 = vmul.f32 %v2374, %v2375
      %v2377 = vsub.f32 1.0, %v2376
      %v2378 = vmul.f32 %v2375, %v2377
      %v2379 = vadd.f32 %v2375, %v2378
      %vm2380 = vweird.f32 %v2374
      %vm2381 = vweird.f32 %v2375
      %vm2382 = vmor %vm2380, %vm2381
      %v2383 = vsel %vm2382, %v2375, %v2379
      %v2384 = vand.u32 2147483647, %v2374
      %vm2385 = vcmp.eq.f32.partialorder %v2384, 8.507059e+37
      %v2386 = vand.u32 %v2374, 2147483648
      %v2387 = vor.u32 1.1754944e-38, %v2386
      %v2388 = vsel %vm2385, %v2387, %v2383
      %v2389 = vmul.f32 1.0, %v2388
      %v2390 = vmul.f32 %v2369, %v2129
      %v2391 = vmul.f32 %v2350, %v2370
      %v2392 = vadd.f32 %v2390, %v2391
      %v2393 = vtanh.pop %v2392
      %v2394 = vmul.f32 %v2389, %v2393
      %v2395 = vstv %s2270
      %vm2396 = vcmp.lt.s32.totalorder %v2395, %v457
      %v2397 = vsel %vm2396, %v2394, 0.0
      %v2398 = vsel %vm2396, %v2394, %v2128
      %v2399 = vsel %vm2396, %v2392, %v2129
      %s2400 = scalar_lea.vmem %s350, 40
      %2401 = vst [vmem:[%s2400] sm:$0xff] %v2264
      %s2402 = scalar_lea.vmem %s357, 16
      %2403 = vst [vmem:[%s2402] sm:$0xff] %v2397
      %s2404 = scalar_lea.vmem %s334, 96
      %v2405 = vld [vmem:[%s2404] sm:$0xff]
      %v2406 = vld [vmem:[%s2404 + $0x8] sm:$0xff]
      %s2407 = sadd.s32 %s458, 6
      %v2408 = vpack.c.bf16 %v2265, %v2265
      %v2409 = vunpack.c.l.bf16 %v2405
      %v2410 = vunpack.c.h.bf16 %v2405
      %v2411 = vunpack.c.l.bf16 %v2406
      %v2412 = vunpack.c.h.bf16 %v2406
      %2413 = vmatpush.bf16.msra.mxu0 %v598
      %2414 = vmatpush.bf16.msra.mxu0 %v594
      %2415 = vmatpush.bf16.msra.mxu0 %v590
      %2416 = vmatpush.bf16.msra.mxu0 %v586
      %2417 = vmatpush.bf16.msra.mxu0 %v582
      %2418 = vmatpush.bf16.msra.mxu0 %v578
      %2419 = vmatpush.bf16.msra.mxu0 %v574
      %2420 = vmatpush.bf16.msra.mxu0 %v570
      %2421 = vmatmul.bf16.gmra.mxu0 %v2408
      %v2422 = vpop.f32.mrf.mxu0
      %v2423 = vadd.f32 %v2409, %v2422
      %v2424 = vpop.f32.mrf.mxu0
      %2425 = vdwg.mxu0
      %2426 = vmatpush.bf16.msra.mxu0 %v599
      %2427 = vmatpush.bf16.msra.mxu0 %v595
      %2428 = vmatpush.bf16.msra.mxu0 %v591
      %2429 = vmatpush.bf16.msra.mxu0 %v587
      %2430 = vmatpush.bf16.msra.mxu0 %v583
      %2431 = vmatpush.bf16.msra.mxu0 %v579
      %2432 = vmatpush.bf16.msra.mxu0 %v575
      %2433 = vmatpush.bf16.msra.mxu0 %v571
      %2434 = vmatmul.bf16.gmra.mxu0 %v2408
      %v2435 = vpop.f32.mrf.mxu0
      %v2436 = vadd.f32 %v2410, %v2435
      %v2437 = vpop.f32.mrf.mxu0
      %2438 = vdwg.mxu0
      %2439 = vmatpush.bf16.msra.mxu0 %v600
      %2440 = vmatpush.bf16.msra.mxu0 %v596
      %2441 = vmatpush.bf16.msra.mxu0 %v592
      %2442 = vmatpush.bf16.msra.mxu0 %v588
      %2443 = vmatpush.bf16.msra.mxu0 %v584
      %2444 = vmatpush.bf16.msra.mxu0 %v580
      %2445 = vmatpush.bf16.msra.mxu0 %v576
      %2446 = vmatpush.bf16.msra.mxu0 %v572
      %2447 = vmatmul.bf16.gmra.mxu0 %v2408
      %v2448 = vpop.f32.mrf.mxu0
      %v2449 = vadd.f32 %v2411, %v2448
      %v2450 = vpop.f32.mrf.mxu0
      %2451 = vdwg.mxu0
      %2452 = vmatpush.bf16.msra.mxu0 %v601
      %2453 = vmatpush.bf16.msra.mxu0 %v597
      %2454 = vmatpush.bf16.msra.mxu0 %v593
      %2455 = vmatpush.bf16.msra.mxu0 %v589
      %2456 = vmatpush.bf16.msra.mxu0 %v585
      %2457 = vmatpush.bf16.msra.mxu0 %v581
      %2458 = vmatpush.bf16.msra.mxu0 %v577
      %2459 = vmatpush.bf16.msra.mxu0 %v573
      %2460 = vmatmul.bf16.gmra.mxu0 %v2408
      %v2461 = vpop.f32.mrf.mxu0
      %v2462 = vadd.f32 %v2412, %v2461
      %v2463 = vpop.f32.mrf.mxu0
      %2464 = vdwg.mxu0
      %v2465 = vadd.f32 %v2423, %v435
      %v2466 = vadd.f32 %v2436, %v436
      %v2467 = vadd.f32 %v2449, %v437
      %v2468 = vadd.f32 %v2462, %v438
      %v2469 = vxor.u32 %v2465, 2147483648
      %v2470 = vmul.f32 %v2469, 1.442695
      %v2471 = vpow.pop %v2470
      %v2472 = vadd.f32 %v2471, 1.0
      %v2473 = vrcp.pop %v2472
      %v2474 = vmul.f32 %v2472, %v2473
      %v2475 = vsub.f32 1.0, %v2474
      %v2476 = vmul.f32 %v2473, %v2475
      %v2477 = vadd.f32 %v2473, %v2476
      %vm2478 = vweird.f32 %v2472
      %vm2479 = vweird.f32 %v2473
      %vm2480 = vmor %vm2478, %vm2479
      %v2481 = vsel %vm2480, %v2473, %v2477
      %v2482 = vand.u32 2147483647, %v2472
      %vm2483 = vcmp.eq.f32.partialorder %v2482, 8.507059e+37
      %v2484 = vand.u32 %v2472, 2147483648
      %v2485 = vor.u32 1.1754944e-38, %v2484
      %v2486 = vsel %vm2483, %v2485, %v2481
      %v2487 = vmul.f32 1.0, %v2486
      %v2488 = vxor.u32 %v2466, 2147483648
      %v2489 = vmul.f32 %v2488, 1.442695
      %v2490 = vpow.pop %v2489
      %v2491 = vadd.f32 %v2490, 1.0
      %v2492 = vrcp.pop %v2491
      %v2493 = vmul.f32 %v2491, %v2492
      %v2494 = vsub.f32 1.0, %v2493
      %v2495 = vmul.f32 %v2492, %v2494
      %v2496 = vadd.f32 %v2492, %v2495
      %vm2497 = vweird.f32 %v2491
      %vm2498 = vweird.f32 %v2492
      %vm2499 = vmor %vm2497, %vm2498
      %v2500 = vsel %vm2499, %v2492, %v2496
      %v2501 = vand.u32 2147483647, %v2491
      %vm2502 = vcmp.eq.f32.partialorder %v2501, 8.507059e+37
      %v2503 = vand.u32 %v2491, 2147483648
      %v2504 = vor.u32 1.1754944e-38, %v2503
      %v2505 = vsel %vm2502, %v2504, %v2500
      %v2506 = vmul.f32 1.0, %v2505
      %v2507 = vtanh.pop %v2467
      %v2508 = vxor.u32 %v2468, 2147483648
      %v2509 = vmul.f32 %v2508, 1.442695
      %v2510 = vpow.pop %v2509
      %v2511 = vadd.f32 %v2510, 1.0
      %v2512 = vrcp.pop %v2511
      %v2513 = vmul.f32 %v2511, %v2512
      %v2514 = vsub.f32 1.0, %v2513
      %v2515 = vmul.f32 %v2512, %v2514
      %v2516 = vadd.f32 %v2512, %v2515
      %vm2517 = vweird.f32 %v2511
      %vm2518 = vweird.f32 %v2512
      %vm2519 = vmor %vm2517, %vm2518
      %v2520 = vsel %vm2519, %v2512, %v2516
      %v2521 = vand.u32 2147483647, %v2511
      %vm2522 = vcmp.eq.f32.partialorder %v2521, 8.507059e+37
      %v2523 = vand.u32 %v2511, 2147483648
      %v2524 = vor.u32 1.1754944e-38, %v2523
      %v2525 = vsel %vm2522, %v2524, %v2520
      %v2526 = vmul.f32 1.0, %v2525
      %v2527 = vmul.f32 %v2506, %v2266
      %v2528 = vmul.f32 %v2487, %v2507
      %v2529 = vadd.f32 %v2527, %v2528
      %v2530 = vtanh.pop %v2529
      %v2531 = vmul.f32 %v2526, %v2530
      %v2532 = vstv %s2407
      %vm2533 = vcmp.lt.s32.totalorder %v2532, %v457
      %v2534 = vsel %vm2533, %v2531, 0.0
      %v2535 = vsel %vm2533, %v2531, %v2265
      %v2536 = vsel %vm2533, %v2529, %v2266
      %s2537 = scalar_lea.vmem %s343, 16
      %v2538 = vld [vmem:[%s2537] sm:$0xff]
      %v2539 = vld [vmem:[%s2537 + $0x8] sm:$0xff]
      %s2540 = sadd.s32 %s460, 1
      %v2541 = vpack.c.bf16 %v2398, %v2398
      %v2542 = vunpack.c.l.bf16 %v2538
      %v2543 = vunpack.c.h.bf16 %v2538
      %v2544 = vunpack.c.l.bf16 %v2539
      %v2545 = vunpack.c.h.bf16 %v2539
      %2546 = vmatpush.bf16.msra.mxu0 %v891
      %2547 = vmatpush.bf16.msra.mxu0 %v887
      %2548 = vmatpush.bf16.msra.mxu0 %v883
      %2549 = vmatpush.bf16.msra.mxu0 %v879
      %2550 = vmatpush.bf16.msra.mxu0 %v875
      %2551 = vmatpush.bf16.msra.mxu0 %v871
      %2552 = vmatpush.bf16.msra.mxu0 %v867
      %2553 = vmatpush.bf16.msra.mxu0 %v863
      %2554 = vmatmul.bf16.gmra.mxu0 %v2541
      %v2555 = vpop.f32.mrf.mxu0
      %v2556 = vadd.f32 %v2542, %v2555
      %v2557 = vpop.f32.mrf.mxu0
      %2558 = vdwg.mxu0
      %2559 = vmatpush.bf16.msra.mxu0 %v892
      %2560 = vmatpush.bf16.msra.mxu0 %v888
      %2561 = vmatpush.bf16.msra.mxu0 %v884
      %2562 = vmatpush.bf16.msra.mxu0 %v880
      %2563 = vmatpush.bf16.msra.mxu0 %v876
      %2564 = vmatpush.bf16.msra.mxu0 %v872
      %2565 = vmatpush.bf16.msra.mxu0 %v868
      %2566 = vmatpush.bf16.msra.mxu0 %v864
      %2567 = vmatmul.bf16.gmra.mxu0 %v2541
      %v2568 = vpop.f32.mrf.mxu0
      %v2569 = vadd.f32 %v2543, %v2568
      %v2570 = vpop.f32.mrf.mxu0
      %2571 = vdwg.mxu0
      %2572 = vmatpush.bf16.msra.mxu0 %v893
      %2573 = vmatpush.bf16.msra.mxu0 %v889
      %2574 = vmatpush.bf16.msra.mxu0 %v885
      %2575 = vmatpush.bf16.msra.mxu0 %v881
      %2576 = vmatpush.bf16.msra.mxu0 %v877
      %2577 = vmatpush.bf16.msra.mxu0 %v873
      %2578 = vmatpush.bf16.msra.mxu0 %v869
      %2579 = vmatpush.bf16.msra.mxu0 %v865
      %2580 = vmatmul.bf16.gmra.mxu0 %v2541
      %v2581 = vpop.f32.mrf.mxu0
      %v2582 = vadd.f32 %v2544, %v2581
      %v2583 = vpop.f32.mrf.mxu0
      %2584 = vdwg.mxu0
      %2585 = vmatpush.bf16.msra.mxu0 %v894
      %2586 = vmatpush.bf16.msra.mxu0 %v890
      %2587 = vmatpush.bf16.msra.mxu0 %v886
      %2588 = vmatpush.bf16.msra.mxu0 %v882
      %2589 = vmatpush.bf16.msra.mxu0 %v878
      %2590 = vmatpush.bf16.msra.mxu0 %v874
      %2591 = vmatpush.bf16.msra.mxu0 %v870
      %2592 = vmatpush.bf16.msra.mxu0 %v866
      %2593 = vmatmul.bf16.gmra.mxu0 %v2541
      %v2594 = vpop.f32.mrf.mxu0
      %v2595 = vadd.f32 %v2545, %v2594
      %v2596 = vpop.f32.mrf.mxu0
      %2597 = vdwg.mxu0
      %v2598 = vadd.f32 %v2556, %v446
      %v2599 = vadd.f32 %v2569, %v447
      %v2600 = vadd.f32 %v2582, %v448
      %v2601 = vadd.f32 %v2595, %v449
      %v2602 = vxor.u32 %v2598, 2147483648
      %v2603 = vmul.f32 %v2602, 1.442695
      %v2604 = vpow.pop %v2603
      %v2605 = vadd.f32 %v2604, 1.0
      %v2606 = vrcp.pop %v2605
      %v2607 = vmul.f32 %v2605, %v2606
      %v2608 = vsub.f32 1.0, %v2607
      %v2609 = vmul.f32 %v2606, %v2608
      %v2610 = vadd.f32 %v2606, %v2609
      %vm2611 = vweird.f32 %v2605
      %vm2612 = vweird.f32 %v2606
      %vm2613 = vmor %vm2611, %vm2612
      %v2614 = vsel %vm2613, %v2606, %v2610
      %v2615 = vand.u32 2147483647, %v2605
      %vm2616 = vcmp.eq.f32.partialorder %v2615, 8.507059e+37
      %v2617 = vand.u32 %v2605, 2147483648
      %v2618 = vor.u32 1.1754944e-38, %v2617
      %v2619 = vsel %vm2616, %v2618, %v2614
      %v2620 = vmul.f32 1.0, %v2619
      %v2621 = vxor.u32 %v2599, 2147483648
      %v2622 = vmul.f32 %v2621, 1.442695
      %v2623 = vpow.pop %v2622
      %v2624 = vadd.f32 %v2623, 1.0
      %v2625 = vrcp.pop %v2624
      %v2626 = vmul.f32 %v2624, %v2625
      %v2627 = vsub.f32 1.0, %v2626
      %v2628 = vmul.f32 %v2625, %v2627
      %v2629 = vadd.f32 %v2625, %v2628
      %vm2630 = vweird.f32 %v2624
      %vm2631 = vweird.f32 %v2625
      %vm2632 = vmor %vm2630, %vm2631
      %v2633 = vsel %vm2632, %v2625, %v2629
      %v2634 = vand.u32 2147483647, %v2624
      %vm2635 = vcmp.eq.f32.partialorder %v2634, 8.507059e+37
      %v2636 = vand.u32 %v2624, 2147483648
      %v2637 = vor.u32 1.1754944e-38, %v2636
      %v2638 = vsel %vm2635, %v2637, %v2633
      %v2639 = vmul.f32 1.0, %v2638
      %v2640 = vtanh.pop %v2600
      %v2641 = vxor.u32 %v2601, 2147483648
      %v2642 = vmul.f32 %v2641, 1.442695
      %v2643 = vpow.pop %v2642
      %v2644 = vadd.f32 %v2643, 1.0
      %v2645 = vrcp.pop %v2644
      %v2646 = vmul.f32 %v2644, %v2645
      %v2647 = vsub.f32 1.0, %v2646
      %v2648 = vmul.f32 %v2645, %v2647
      %v2649 = vadd.f32 %v2645, %v2648
      %vm2650 = vweird.f32 %v2644
      %vm2651 = vweird.f32 %v2645
      %vm2652 = vmor %vm2650, %vm2651
      %v2653 = vsel %vm2652, %v2645, %v2649
      %v2654 = vand.u32 2147483647, %v2644
      %vm2655 = vcmp.eq.f32.partialorder %v2654, 8.507059e+37
      %v2656 = vand.u32 %v2644, 2147483648
      %v2657 = vor.u32 1.1754944e-38, %v2656
      %v2658 = vsel %vm2655, %v2657, %v2653
      %v2659 = vmul.f32 1.0, %v2658
      %v2660 = vmul.f32 %v2639, %v2399
      %v2661 = vmul.f32 %v2620, %v2640
      %v2662 = vadd.f32 %v2660, %v2661
      %v2663 = vtanh.pop %v2662
      %v2664 = vmul.f32 %v2659, %v2663
      %v2665 = vstv %s2540
      %vm2666 = vcmp.lt.s32.totalorder %v2665, %v457
      %v2667 = vsel %vm2666, %v2664, 0.0
      %v2668 = vsel %vm2666, %v2664, %v2398
      %v2669 = vsel %vm2666, %v2662, %v2399
      %s2670 = scalar_lea.vmem %s350, 48
      %2671 = vst [vmem:[%s2670] sm:$0xff] %v2534
      %s2672 = scalar_lea.vmem %s357, 8
      %2673 = vst [vmem:[%s2672] sm:$0xff] %v2667
      %s2674 = scalar_lea.vmem %s334, 112
      %v2675 = vld [vmem:[%s2674] sm:$0xff]
      %v2676 = vld [vmem:[%s2674 + $0x8] sm:$0xff]
      %s2677 = sadd.s32 %s458, 7
      %v2678 = vpack.c.bf16 %v2535, %v2535
      %v2679 = vunpack.c.l.bf16 %v2675
      %v2680 = vunpack.c.h.bf16 %v2675
      %v2681 = vunpack.c.l.bf16 %v2676
      %v2682 = vunpack.c.h.bf16 %v2676
      %2683 = vmatpush.bf16.msra.mxu0 %v598
      %2684 = vmatpush.bf16.msra.mxu0 %v594
      %2685 = vmatpush.bf16.msra.mxu0 %v590
      %2686 = vmatpush.bf16.msra.mxu0 %v586
      %2687 = vmatpush.bf16.msra.mxu0 %v582
      %2688 = vmatpush.bf16.msra.mxu0 %v578
      %2689 = vmatpush.bf16.msra.mxu0 %v574
      %2690 = vmatpush.bf16.msra.mxu0 %v570
      %2691 = vmatmul.bf16.gmra.mxu0 %v2678
      %v2692 = vpop.f32.mrf.mxu0
      %v2693 = vadd.f32 %v2679, %v2692
      %v2694 = vpop.f32.mrf.mxu0
      %2695 = vdwg.mxu0
      %2696 = vmatpush.bf16.msra.mxu0 %v599
      %2697 = vmatpush.bf16.msra.mxu0 %v595
      %2698 = vmatpush.bf16.msra.mxu0 %v591
      %2699 = vmatpush.bf16.msra.mxu0 %v587
      %2700 = vmatpush.bf16.msra.mxu0 %v583
      %2701 = vmatpush.bf16.msra.mxu0 %v579
      %2702 = vmatpush.bf16.msra.mxu0 %v575
      %2703 = vmatpush.bf16.msra.mxu0 %v571
      %2704 = vmatmul.bf16.gmra.mxu0 %v2678
      %v2705 = vpop.f32.mrf.mxu0
      %v2706 = vadd.f32 %v2680, %v2705
      %v2707 = vpop.f32.mrf.mxu0
      %2708 = vdwg.mxu0
      %2709 = vmatpush.bf16.msra.mxu0 %v600
      %2710 = vmatpush.bf16.msra.mxu0 %v596
      %2711 = vmatpush.bf16.msra.mxu0 %v592
      %2712 = vmatpush.bf16.msra.mxu0 %v588
      %2713 = vmatpush.bf16.msra.mxu0 %v584
      %2714 = vmatpush.bf16.msra.mxu0 %v580
      %2715 = vmatpush.bf16.msra.mxu0 %v576
      %2716 = vmatpush.bf16.msra.mxu0 %v572
      %2717 = vmatmul.bf16.gmra.mxu0 %v2678
      %v2718 = vpop.f32.mrf.mxu0
      %v2719 = vadd.f32 %v2681, %v2718
      %v2720 = vpop.f32.mrf.mxu0
      %2721 = vdwg.mxu0
      %2722 = vmatpush.bf16.msra.mxu0 %v601
      %2723 = vmatpush.bf16.msra.mxu0 %v597
      %2724 = vmatpush.bf16.msra.mxu0 %v593
      %2725 = vmatpush.bf16.msra.mxu0 %v589
      %2726 = vmatpush.bf16.msra.mxu0 %v585
      %2727 = vmatpush.bf16.msra.mxu0 %v581
      %2728 = vmatpush.bf16.msra.mxu0 %v577
      %2729 = vmatpush.bf16.msra.mxu0 %v573
      %2730 = vmatmul.bf16.gmra.mxu0 %v2678
      %v2731 = vpop.f32.mrf.mxu0
      %v2732 = vadd.f32 %v2682, %v2731
      %v2733 = vpop.f32.mrf.mxu0
      %2734 = vdwg.mxu0
      %v2735 = vadd.f32 %v2693, %v435
      %v2736 = vadd.f32 %v2706, %v436
      %v2737 = vadd.f32 %v2719, %v437
      %v2738 = vadd.f32 %v2732, %v438
      %v2739 = vxor.u32 %v2735, 2147483648
      %v2740 = vmul.f32 %v2739, 1.442695
      %v2741 = vpow.pop %v2740
      %v2742 = vadd.f32 %v2741, 1.0
      %v2743 = vrcp.pop %v2742
      %v2744 = vmul.f32 %v2742, %v2743
      %v2745 = vsub.f32 1.0, %v2744
      %v2746 = vmul.f32 %v2743, %v2745
      %v2747 = vadd.f32 %v2743, %v2746
      %vm2748 = vweird.f32 %v2742
      %vm2749 = vweird.f32 %v2743
      %vm2750 = vmor %vm2748, %vm2749
      %v2751 = vsel %vm2750, %v2743, %v2747
      %v2752 = vand.u32 2147483647, %v2742
      %vm2753 = vcmp.eq.f32.partialorder %v2752, 8.507059e+37
      %v2754 = vand.u32 %v2742, 2147483648
      %v2755 = vor.u32 1.1754944e-38, %v2754
      %v2756 = vsel %vm2753, %v2755, %v2751
      %v2757 = vmul.f32 1.0, %v2756
      %v2758 = vxor.u32 %v2736, 2147483648
      %v2759 = vmul.f32 %v2758, 1.442695
      %v2760 = vpow.pop %v2759
      %v2761 = vadd.f32 %v2760, 1.0
      %v2762 = vrcp.pop %v2761
      %v2763 = vmul.f32 %v2761, %v2762
      %v2764 = vsub.f32 1.0, %v2763
      %v2765 = vmul.f32 %v2762, %v2764
      %v2766 = vadd.f32 %v2762, %v2765
      %vm2767 = vweird.f32 %v2761
      %vm2768 = vweird.f32 %v2762
      %vm2769 = vmor %vm2767, %vm2768
      %v2770 = vsel %vm2769, %v2762, %v2766
      %v2771 = vand.u32 2147483647, %v2761
      %vm2772 = vcmp.eq.f32.partialorder %v2771, 8.507059e+37
      %v2773 = vand.u32 %v2761, 2147483648
      %v2774 = vor.u32 1.1754944e-38, %v2773
      %v2775 = vsel %vm2772, %v2774, %v2770
      %v2776 = vmul.f32 1.0, %v2775
      %v2777 = vtanh.pop %v2737
      %v2778 = vxor.u32 %v2738, 2147483648
      %v2779 = vmul.f32 %v2778, 1.442695
      %v2780 = vpow.pop %v2779
      %v2781 = vadd.f32 %v2780, 1.0
      %v2782 = vrcp.pop %v2781
      %v2783 = vmul.f32 %v2781, %v2782
      %v2784 = vsub.f32 1.0, %v2783
      %v2785 = vmul.f32 %v2782, %v2784
      %v2786 = vadd.f32 %v2782, %v2785
      %vm2787 = vweird.f32 %v2781
      %vm2788 = vweird.f32 %v2782
      %vm2789 = vmor %vm2787, %vm2788
      %v2790 = vsel %vm2789, %v2782, %v2786
      %v2791 = vand.u32 2147483647, %v2781
      %vm2792 = vcmp.eq.f32.partialorder %v2791, 8.507059e+37
      %v2793 = vand.u32 %v2781, 2147483648
      %v2794 = vor.u32 1.1754944e-38, %v2793
      %v2795 = vsel %vm2792, %v2794, %v2790
      %v2796 = vmul.f32 1.0, %v2795
      %v2797 = vmul.f32 %v2776, %v2536
      %v2798 = vmul.f32 %v2757, %v2777
      %v2799 = vadd.f32 %v2797, %v2798
      %v2800 = vtanh.pop %v2799
      %v2801 = vmul.f32 %v2796, %v2800
      %v2802 = vstv %s2677
      %vm2803 = vcmp.lt.s32.totalorder %v2802, %v457
      %v2804 = vsel %vm2803, %v2801, 0.0
      %v2805 = vsel %vm2803, %v2801, %v2535
      %v2806 = vsel %vm2803, %v2799, %v2536
      %v2807 = vld [vmem:[%s343] sm:$0xff]
      %v2808 = vld [vmem:[%s343 + $0x8] sm:$0xff]
      %v2809 = vpack.c.bf16 %v2668, %v2668
      %v2810 = vunpack.c.l.bf16 %v2807
      %v2811 = vunpack.c.h.bf16 %v2807
      %v2812 = vunpack.c.l.bf16 %v2808
      %v2813 = vunpack.c.h.bf16 %v2808
      %2814 = vmatpush.bf16.msra.mxu0 %v891
      %2815 = vmatpush.bf16.msra.mxu0 %v887
      %2816 = vmatpush.bf16.msra.mxu0 %v883
      %2817 = vmatpush.bf16.msra.mxu0 %v879
      %2818 = vmatpush.bf16.msra.mxu0 %v875
      %2819 = vmatpush.bf16.msra.mxu0 %v871
      %2820 = vmatpush.bf16.msra.mxu0 %v867
      %2821 = vmatpush.bf16.msra.mxu0 %v863
      %2822 = vmatmul.bf16.gmra.mxu0 %v2809
      %v2823 = vpop.f32.mrf.mxu0
      %v2824 = vadd.f32 %v2810, %v2823
      %v2825 = vpop.f32.mrf.mxu0
      %2826 = vdwg.mxu0
      %2827 = vmatpush.bf16.msra.mxu0 %v892
      %2828 = vmatpush.bf16.msra.mxu0 %v888
      %2829 = vmatpush.bf16.msra.mxu0 %v884
      %2830 = vmatpush.bf16.msra.mxu0 %v880
      %2831 = vmatpush.bf16.msra.mxu0 %v876
      %2832 = vmatpush.bf16.msra.mxu0 %v872
      %2833 = vmatpush.bf16.msra.mxu0 %v868
      %2834 = vmatpush.bf16.msra.mxu0 %v864
      %2835 = vmatmul.bf16.gmra.mxu0 %v2809
      %v2836 = vpop.f32.mrf.mxu0
      %v2837 = vadd.f32 %v2811, %v2836
      %v2838 = vpop.f32.mrf.mxu0
      %2839 = vdwg.mxu0
      %2840 = vmatpush.bf16.msra.mxu0 %v893
      %2841 = vmatpush.bf16.msra.mxu0 %v889
      %2842 = vmatpush.bf16.msra.mxu0 %v885
      %2843 = vmatpush.bf16.msra.mxu0 %v881
      %2844 = vmatpush.bf16.msra.mxu0 %v877
      %2845 = vmatpush.bf16.msra.mxu0 %v873
      %2846 = vmatpush.bf16.msra.mxu0 %v869
      %2847 = vmatpush.bf16.msra.mxu0 %v865
      %2848 = vmatmul.bf16.gmra.mxu0 %v2809
      %v2849 = vpop.f32.mrf.mxu0
      %v2850 = vadd.f32 %v2812, %v2849
      %v2851 = vpop.f32.mrf.mxu0
      %2852 = vdwg.mxu0
      %2853 = vmatpush.bf16.msra.mxu0 %v894
      %2854 = vmatpush.bf16.msra.mxu0 %v890
      %2855 = vmatpush.bf16.msra.mxu0 %v886
      %2856 = vmatpush.bf16.msra.mxu0 %v882
      %2857 = vmatpush.bf16.msra.mxu0 %v878
      %2858 = vmatpush.bf16.msra.mxu0 %v874
      %2859 = vmatpush.bf16.msra.mxu0 %v870
      %2860 = vmatpush.bf16.msra.mxu0 %v866
      %2861 = vmatmul.bf16.gmra.mxu0 %v2809
      %v2862 = vpop.f32.mrf.mxu0
      %v2863 = vadd.f32 %v2813, %v2862
      %v2864 = vpop.f32.mrf.mxu0
      %2865 = vdwg.mxu0
      %v2866 = vadd.f32 %v2824, %v446
      %v2867 = vadd.f32 %v2837, %v447
      %v2868 = vadd.f32 %v2850, %v448
      %v2869 = vadd.f32 %v2863, %v449
      %v2870 = vxor.u32 %v2866, 2147483648
      %v2871 = vmul.f32 %v2870, 1.442695
      %v2872 = vpow.pop %v2871
      %v2873 = vadd.f32 %v2872, 1.0
      %v2874 = vrcp.pop %v2873
      %v2875 = vmul.f32 %v2873, %v2874
      %v2876 = vsub.f32 1.0, %v2875
      %v2877 = vmul.f32 %v2874, %v2876
      %v2878 = vadd.f32 %v2874, %v2877
      %vm2879 = vweird.f32 %v2873
      %vm2880 = vweird.f32 %v2874
      %vm2881 = vmor %vm2879, %vm2880
      %v2882 = vsel %vm2881, %v2874, %v2878
      %v2883 = vand.u32 2147483647, %v2873
      %vm2884 = vcmp.eq.f32.partialorder %v2883, 8.507059e+37
      %v2885 = vand.u32 %v2873, 2147483648
      %v2886 = vor.u32 1.1754944e-38, %v2885
      %v2887 = vsel %vm2884, %v2886, %v2882
      %v2888 = vmul.f32 1.0, %v2887
      %v2889 = vxor.u32 %v2867, 2147483648
      %v2890 = vmul.f32 %v2889, 1.442695
      %v2891 = vpow.pop %v2890
      %v2892 = vadd.f32 %v2891, 1.0
      %v2893 = vrcp.pop %v2892
      %v2894 = vmul.f32 %v2892, %v2893
      %v2895 = vsub.f32 1.0, %v2894
      %v2896 = vmul.f32 %v2893, %v2895
      %v2897 = vadd.f32 %v2893, %v2896
      %vm2898 = vweird.f32 %v2892
      %vm2899 = vweird.f32 %v2893
      %vm2900 = vmor %vm2898, %vm2899
      %v2901 = vsel %vm2900, %v2893, %v2897
      %v2902 = vand.u32 2147483647, %v2892
      %vm2903 = vcmp.eq.f32.partialorder %v2902, 8.507059e+37
      %v2904 = vand.u32 %v2892, 2147483648
      %v2905 = vor.u32 1.1754944e-38, %v2904
      %v2906 = vsel %vm2903, %v2905, %v2901
      %v2907 = vmul.f32 1.0, %v2906
      %v2908 = vtanh.pop %v2868
      %v2909 = vxor.u32 %v2869, 2147483648
      %v2910 = vmul.f32 %v2909, 1.442695
      %v2911 = vpow.pop %v2910
      %v2912 = vadd.f32 %v2911, 1.0
      %v2913 = vrcp.pop %v2912
      %v2914 = vmul.f32 %v2912, %v2913
      %v2915 = vsub.f32 1.0, %v2914
      %v2916 = vmul.f32 %v2913, %v2915
      %v2917 = vadd.f32 %v2913, %v2916
      %vm2918 = vweird.f32 %v2912
      %vm2919 = vweird.f32 %v2913
      %vm2920 = vmor %vm2918, %vm2919
      %v2921 = vsel %vm2920, %v2913, %v2917
      %v2922 = vand.u32 2147483647, %v2912
      %vm2923 = vcmp.eq.f32.partialorder %v2922, 8.507059e+37
      %v2924 = vand.u32 %v2912, 2147483648
      %v2925 = vor.u32 1.1754944e-38, %v2924
      %v2926 = vsel %vm2923, %v2925, %v2921
      %v2927 = vmul.f32 1.0, %v2926
      %v2928 = vmul.f32 %v2907, %v2669
      %v2929 = vmul.f32 %v2888, %v2908
      %v2930 = vadd.f32 %v2928, %v2929
      %v2931 = vtanh.pop %v2930
      %v2932 = vmul.f32 %v2927, %v2931
      %v2933 = vstv %s460
      %vm2934 = vcmp.lt.s32.totalorder %v2933, %v457
      %v2935 = vsel %vm2934, %v2932, 0.0
      %v2936 = vsel %vm2934, %v2932, %v2668
      %v2937 = vsel %vm2934, %v2930, %v2669
      %s2938 = scalar_lea.vmem %s350, 56
      %2939 = vst [vmem:[%s2938] sm:$0xff] %v2804
      %2940 = vst [vmem:[%s357] sm:$0xff] %v2935
      %2941 = vst [vmem:[#allocation2] sm:$0xff] %v2805
      %2942 = vst [vmem:[#allocation3] sm:$0xff] %v2806
      %2943 = vst [vmem:[%s463] sm:$0xff] %v2936
      %2944 = vst [vmem:[%s465] sm:$0xff] %v2937
      %p2945 = scmp.eq.s32.totalorder %s20, 3
      // Predicated region
      $region45: #{_bilstm_device.1} parent=39 // pred_check
        %p2946 = pneg %p2945
      $region46: #{_bilstm_device.1} parent=39 // pred_check_branch
        %2948 = sbr.rel (%p2946) target = $region48
      $region47: #{_bilstm_device.1} parent=39 // pred_region
        %2949 = vst [vmem:[%s7] sm:$0xff] %v2805
        %s2950 = scalar_lea.vmem %s7, 8
        %2951 = vst [vmem:[%s2950] sm:$0xff] %v2936
        %2952 = vst [vmem:[%s8] sm:$0xff] %v2806
        %s2953 = scalar_lea.vmem %s8, 8
        %2954 = vst [vmem:[%s2953] sm:$0xff] %v2937
      $region48: #{_bilstm_device.1} parent=39 // pred_fallthru
        _
      %s2955 = smul.u32 8, %s20
      %p2956 = scmp.lt.s32.totalorder %s2955, 31
      %s2957 = scalar_select %p2956, %s2955, 31
      %s2958 = smul.addr %s2957, 8
      %s2959 = scalar_lea.vmem %s5, %s2958
      %s2960 = ssub.s32 3, %s20
      %s2961 = smul.u32 8, %s2960
      %p2962 = scmp.lt.s32.totalorder %s2961, 31
      %s2963 = scalar_select %p2962, %s2961, 31
      %s2964 = smul.addr %s2963, 8
      %s2965 = scalar_lea.vmem %s6, %s2964
      // Predicated region
      $region49: #{_bilstm_device.1} parent=39 // pred_check
        %p2966 = pneg %p155
      $region50: #{_bilstm_device.1} parent=39 // pred_check_branch
        %2968 = sbr.rel (%p2966) target = $region52
      $region51: #{_bilstm_device.1} parent=39 // pred_region
        %s2969 = smul.u32 8, %s20
      $region52: #{_bilstm_device.1} parent=39 // pred_fallthru
        _
      // Predicated region
      $region53: #{_bilstm_device.1} parent=39 // pred_check
        %p2970 = pneg %p183
      $region54: #{_bilstm_device.1} parent=39 // pred_check_branch
        %2972 = sbr.rel (%p2970) target = $region56
      $region55: #{_bilstm_device.1} parent=39 // pred_region
        %s2973 = ssub.s32 3, %s20
        %s2974 = smul.u32 8, %s2973
      $region56: #{_bilstm_device.1} parent=39 // pred_fallthru
        _
      // Predicated region
      $region57: #{_bilstm_device.1} parent=39 // pred_check
        %p2975 = pneg %p204
      $region58: #{_bilstm_device.1} parent=39 // pred_check_branch
        %2977 = sbr.rel (%p2975) target = $region60
      $region59: #{_bilstm_device.1} parent=39 // pred_region
        _
      $region60: #{_bilstm_device.1} parent=39 // pred_fallthru
        _
      // Predicated region
      $region61: #{_bilstm_device.1} parent=39 // pred_check
        %p2978 = pneg %p225
      $region62: #{_bilstm_device.1} parent=39 // pred_check_branch
        %2980 = sbr.rel (%p2978) target = $region64
      $region63: #{_bilstm_device.1} parent=39 // pred_region
        _
      $region64: #{_bilstm_device.1} parent=39 // pred_fallthru
        _
      // Predicated region
      $region65: #{_bilstm_device.1} parent=39 // pred_check
        %p2981 = pneg %p204
      $region66: #{_bilstm_device.1} parent=39 // pred_check_branch
        %2983 = sbr.rel (%p2981) target = $region68
      $region67: #{_bilstm_device.1} parent=39 // pred_region
        _
      $region68: #{_bilstm_device.1} parent=39 // pred_fallthru
        _
      // Predicated region
      $region69: #{_bilstm_device.1} parent=39 // pred_check
        %p2984 = pneg %p225
      $region70: #{_bilstm_device.1} parent=39 // pred_check_branch
        %2986 = sbr.rel (%p2984) target = $region72
      $region71: #{_bilstm_device.1} parent=39 // pred_region
        _
      $region72: #{_bilstm_device.1} parent=39 // pred_fallthru
        _
    $region40: #{_bilstm_device.1} parent=5 // pred_fallthru
      _
    %p2987 = scmp.le.s32.totalorder 2, %s15
    // Predicated region
    $region73: #{_bilstm_device.1} parent=5 // pred_check
      %p2988 = pneg %p2987
    $region74: #{_bilstm_device.1} parent=5 // pred_check_branch
      %2990 = sbr.rel (%p2988) target = $region76
    $region75: #{_bilstm_device.1} parent=5 // pred_region
      %s2991 = ssub.s32 %s15, 2
      // Predicated region
      $region77: #{_bilstm_device.1} parent=75 // pred_check
        %p2992 = pneg %p161
      $region78: #{_bilstm_device.1} parent=75 // pred_check_branch
        %2994 = sbr.rel (%p2992) target = $region80
      $region79: #{_bilstm_device.1} parent=75 // pred_region
        %s2995 = smul.u32 8, %s21
        %p2996 = scmp.lt.s32.totalorder %s2995, 31
        %s2997 = scalar_select %p2996, %s2995, 31
        %s2998 = smul.addr %s2997, 8
        %s2999 = scalar_lea.vmem %s5, %s2998
      $region80: #{_bilstm_device.1} parent=75 // pred_fallthru
        _
      // Predicated region
      $region81: #{_bilstm_device.1} parent=75 // pred_check
        %p3000 = pneg %p189
      $region82: #{_bilstm_device.1} parent=75 // pred_check_branch
        %3002 = sbr.rel (%p3000) target = $region84
      $region83: #{_bilstm_device.1} parent=75 // pred_region
        %s3003 = ssub.s32 3, %s21
        %s3004 = smul.u32 8, %s3003
        %p3005 = scmp.lt.s32.totalorder %s3004, 31
        %s3006 = scalar_select %p3005, %s3004, 31
        %s3007 = smul.addr %s3006, 8
        %s3008 = scalar_lea.vmem %s6, %s3007
      $region84: #{_bilstm_device.1} parent=75 // pred_fallthru
        _
    $region76: #{_bilstm_device.1} parent=5 // pred_fallthru
      _
  $region6: #{_bilstm_device.1} parent=0 // loop_footer
    %s19 = sadd.s32 1, %s15
  $region7: #{_bilstm_device.1} parent=0 // loop_footer_branch
    %14 = sbr.rel target = $region3
  $region8: #{_bilstm_device.1} parent=0 // loop_exit
    _

</llo_original>
